<compile_context>
chip_gen: v7x
topology: tpu7x:2x2x1
jax: 0.10.0
libtpu: 0.0.40
codegen_flags: <defaults>
</compile_context>

<pallas_src>
import functools

import jax
import jax.numpy as jnp
from jax.experimental import pallas as pl
from jax.experimental.pallas import tpu as pltpu

_FP = 128  # lane-padded feature width (hidden dims 4/64/32/16 -> 128)
_CP = 128  # lane-padded class width (num_classes -> 128)


# ---------------------------------------------------------------------------
# Fused Pallas kernel (one grid step == one graph)
# ---------------------------------------------------------------------------
def gcn_fused_kernel(l_ref, p_ref, x_ref,
                     w1_ref, b1_ref, w2_ref, b2_ref, w3_ref, b3_ref,
                     lw_ref, lb_ref, out_ref, *, K):
    """Per-graph fused 3x(ChebConv+ReLU) + mean-pool + Linear.

    l_ref  : [1, NT, NT]   bf16 per-graph scaled Laplacian block
    p_ref  : [1, 1, NT]    f32 pooling row (1/n_g at valid node slots, 0 at padding)
    x_ref  : [1, NT, FP]   f32 lane-padded node features of this graph
    w*_ref : [K, FP, FP]   bf16 padded Chebyshev weights, b*_ref: [1, FP] f32
    lw_ref : [FP, CP]      bf16 padded Linear weight,     lb_ref: [1, CP] f32
    out_ref: [1, 1, CP]    f32 lane-dense logits row for this graph
    """
    L = l_ref[0]          # [NT, NT] bf16, VMEM-resident for the whole graph
    x = x_ref[0]          # [NT, FP] f32

    def cheb_relu(h, w_ref, b_ref):
        # T_0 = h, T_1 = L h, T_k = 2 L T_{k-1} - T_{k-2}; project with K
        # accumulating depth-128 bf16 matmuls (no concatenate, f32 accumulator).
        h_b = h.astype(jnp.bfloat16)
        acc = jnp.dot(h_b, w_ref[0], preferred_element_type=jnp.float32)
        if K > 1:
            t_prev = h                                                   # f32 carrier
            t_cur = jnp.dot(L, h_b, preferred_element_type=jnp.float32)  # f32 carrier
            t_cur_b = t_cur.astype(jnp.bfloat16)
            acc = acc + jnp.dot(t_cur_b, w_ref[1],
                                preferred_element_type=jnp.float32)
            for k in range(2, K):
                t_next = (2.0 * jnp.dot(L, t_cur_b,
                                        preferred_element_type=jnp.float32)
                          - t_prev)
                t_next_b = t_next.astype(jnp.bfloat16)
                acc = acc + jnp.dot(t_next_b, w_ref[k],
                                    preferred_element_type=jnp.float32)
                t_prev, t_cur, t_cur_b = t_cur, t_next, t_next_b
        return jnp.maximum(acc + b_ref[...], 0.0)

    h = cheb_relu(x, w1_ref, b1_ref)
    # TODO(synk): dropout is eval-mode identity (training=False); not implemented in-kernel.
    h = cheb_relu(h, w2_ref, b2_ref)
    h = cheb_relu(h, w3_ref, b3_ref)

    # global_mean_pool for this graph: pooling row already carries 1/n_g and masks
    # out padded node slots (whose rows only ever hold relu(bias) garbage).
    pooled = jnp.dot(p_ref[0].astype(jnp.bfloat16), h.astype(jnp.bfloat16),
                     preferred_element_type=jnp.float32)        # [1, FP]
    logits = (jnp.dot(pooled.astype(jnp.bfloat16), lw_ref[...],
                      preferred_element_type=jnp.float32) + lb_ref[...])
    out_ref[0] = logits


def _vmem_limit_bytes():
    try:
        cap = int(pltpu.get_tpu_info().vmem_capacity_bytes)
    except Exception:
        cap = 64 * 1024 * 1024
    return cap - cap // 8   # leave ~12.5% headroom for compiler-internal scratch


def _cost_estimate(num_graphs, nt, K):
    per_graph = 3 * ((K - 1) * 2 * nt * nt * _FP + K * 2 * nt * _FP * _FP)
    per_graph += 2 * nt * _FP + 2 * _FP * _CP
    flops = num_graphs * per_graph
    bytes_accessed = (2 * num_graphs * nt * nt              # L blocks (bf16)
                      + 4 * num_graphs * nt * _FP           # x blocks (f32)
                      + 4 * num_graphs * nt                 # pool rows (f32)
                      + 3 * (2 * K * _FP * _FP + 4 * _FP)   # conv weights + biases
                      + 2 * _FP * _CP + 4 * _CP             # linear weight + bias
                      + 4 * num_graphs * _CP)               # output
    return pl.CostEstimate(flops=flops, transcendentals=0,
                           bytes_accessed=bytes_accessed)


def gcn_fused(l_blocks, pool_rows, x_blocks, w1, b1, w2, b2, w3, b3, lw, lb, *, K):
    num_graphs, nt, _ = l_blocks.shape
    in_specs = [
        pl.BlockSpec((1, nt, nt), lambda g: (g, 0, 0)),     # L block (per graph)
        pl.BlockSpec((1, 1, nt), lambda g: (g, 0, 0)),      # pool row (per graph)
        pl.BlockSpec((1, nt, _FP), lambda g: (g, 0, 0)),    # x block (per graph)
        pl.BlockSpec((K, _FP, _FP), lambda g: (0, 0, 0)),   # w1 (resident)
        pl.BlockSpec((1, _FP), lambda g: (0, 0)),           # b1
        pl.BlockSpec((K, _FP, _FP), lambda g: (0, 0, 0)),   # w2
        pl.BlockSpec((1, _FP), lambda g: (0, 0)),           # b2
        pl.BlockSpec((K, _FP, _FP), lambda g: (0, 0, 0)),   # w3
        pl.BlockSpec((1, _FP), lambda g: (0, 0)),           # b3
        pl.BlockSpec((_FP, _CP), lambda g: (0, 0)),         # lin weight
        pl.BlockSpec((1, _CP), lambda g: (0, 0)),           # lin bias
    ]
    out_specs = pl.BlockSpec((1, 1, _CP), lambda g: (g, 0, 0))
    return pl.pallas_call(
        functools.partial(gcn_fused_kernel, K=K),
        out_shape=jax.ShapeDtypeStruct((num_graphs, 1, _CP), jnp.float32),
        grid=(num_graphs,),
        in_specs=in_specs,
        out_specs=out_specs,
        compiler_params=pltpu.CompilerParams(
            dimension_semantics=("parallel",),
            vmem_limit_bytes=_vmem_limit_bytes()),
        cost_estimate=_cost_estimate(num_graphs, nt, K),
    )(l_blocks, pool_rows, x_blocks, w1, b1, w2, b2, w3, b3, lw, lb)


# ---------------------------------------------------------------------------
# Plain-JAX glue (graph -> per-graph dense blocks, parameter packing/padding)
# ---------------------------------------------------------------------------
def _local_node_index(batch, num_graphs):
    """Position of each node within its own graph (works for any node ordering)."""
    n = batch.shape[0]
    one_hot = (batch[:, None] == jnp.arange(num_graphs, dtype=batch.dtype)[None, :])
    pos = jnp.cumsum(one_hot.astype(jnp.int32), axis=0) - 1
    return pos[jnp.arange(n), batch]


def build_graph_blocks(x, edge_index, edge_attr, batch, num_graphs, nt):
    """Per-graph L_hat blocks (bf16), lane-padded x blocks (f32) and pool rows.

    L_hat = -D^{-1/2} A D^{-1/2}, i.e. PyG ChebConv(normalization='sym',
    lambda_max=2.0).  Assumes edges are intra-graph (standard PyG batching).
    """
    n, f_in = x.shape
    local = _local_node_index(batch, num_graphs)
    counts = jnp.zeros((num_graphs,), jnp.float32).at[batch].add(1.0)

    src, dst = edge_index[0], edge_index[1]
    a = jnp.zeros((num_graphs, nt, nt), jnp.float32)
    a = a.at[batch[src], local[src], local[dst]].add(edge_attr)
    deg = a.sum(axis=2)
    d_inv_sqrt = jnp.where(deg > 0.0, 1.0 / jnp.sqrt(deg), 0.0)
    # TODO(synk): assumes lambda_max=2.0 (PyG default when not supplied); a
    # dynamically-computed lambda_max would need a rescale here.
    l_blocks = -(d_inv_sqrt[:, :, None] * a * d_inv_sqrt[:, None, :])

    x_pad = jnp.zeros((n, _FP), jnp.float32).at[:, :f_in].set(x)
    x_blocks = jnp.zeros((num_graphs, nt, _FP), jnp.float32).at[batch, local].set(x_pad)

    pool = jnp.zeros((num_graphs, nt), jnp.float32).at[batch, local].set(1.0)
    pool = pool / jnp.maximum(counts, 1.0)[:, None]
    return l_blocks.astype(jnp.bfloat16), x_blocks, pool.reshape(num_graphs, 1, nt)


def _pack_cheb_weight(w):
    """[K, F_in, F_out] -> [K, _FP, _FP] bf16, zero-padded."""
    k, f_in, f_out = w.shape
    wp = jnp.zeros((k, _FP, _FP), jnp.float32).at[:, :f_in, :f_out].set(w)
    return wp.astype(jnp.bfloat16)


def _pad_bias(b, width):
    return jnp.zeros((1, width), jnp.float32).at[0, : b.shape[0]].set(b)


def init_params(key, num_features, num_classes, k_order):
    dims = [(num_features, 64), (64, 32), (32, 16)]
    params = {}
    for i, (f_in, f_out) in enumerate(dims, start=1):
        key, kw = jax.random.split(key)
        scale = jnp.sqrt(2.0 / (f_in * k_order + f_out))
        params[f"conv{i}_w"] = scale * jax.random.normal(
            kw, (k_order, f_in, f_out), jnp.float32)
        params[f"conv{i}_b"] = jnp.zeros((f_out,), jnp.float32)
    key, kw, kb = jax.random.split(key, 3)
    params["lin_w"] = 0.1 * jax.random.normal(kw, (16, num_classes), jnp.float32)
    params["lin_b"] = 0.01 * jax.random.normal(kb, (num_classes,), jnp.float32)
    return params


def gcn_forward(params, x, edge_index, edge_attr, batch, num_graphs,
                max_nodes_per_graph=None):
    f_hidden, num_classes = params["lin_w"].shape
    K = params["conv1_w"].shape[0]

    if max_nodes_per_graph is None:
        # NOTE: needs a concrete `batch`; pass max_nodes_per_graph explicitly under jit.
        counts_i = jnp.zeros((num_graphs,), jnp.int32).at[batch].add(1)
        max_nodes_per_graph = int(jnp.max(counts_i))
    nt = max(_FP, ((max_nodes_per_graph + _FP - 1) // _FP) * _FP)

    l_blocks, x_blocks, pool_rows = build_graph_blocks(
        x, edge_index, edge_attr, batch, num_graphs, nt)

    w1 = _pack_cheb_weight(params["conv1_w"]); b1 = _pad_bias(params["conv1_b"], _FP)
    w2 = _pack_cheb_weight(params["conv2_w"]); b2 = _pad_bias(params["conv2_b"], _FP)
    w3 = _pack_cheb_weight(params["conv3_w"]); b3 = _pad_bias(params["conv3_b"], _FP)
    lw = jnp.zeros((_FP, _CP), jnp.float32).at[:f_hidden, :num_classes].set(
        params["lin_w"]).astype(jnp.bfloat16)
    lb = _pad_bias(params["lin_b"], _CP)

    out_p = gcn_fused(l_blocks, pool_rows, x_blocks,
                      w1, b1, w2, b2, w3, b3, lw, lb, K=K)
    return out_p[:, 0, :num_classes]


# ---------------------------------------------------------------------------
# Pure-JAX references (dense global L / P)
# ---------------------------------------------------------------------------
def build_scaled_laplacian(edge_index, edge_attr, num_nodes):
    src, dst = edge_index[0], edge_index[1]
    A = jnp.zeros((num_nodes, num_nodes), jnp.float32).at[src, dst].add(edge_attr)
    deg = A.sum(axis=1)
    d_inv_sqrt = jnp.where(deg > 0.0, 1.0 / jnp.sqrt(deg), 0.0)
    return -(d_inv_sqrt[:, None] * A * d_inv_sqrt[None, :])


def build_pool_matrix(batch, num_graphs, num_nodes):
    one_hot = (batch[None, :] == jnp.arange(num_graphs)[:, None]).astype(jnp.float32)
    counts = one_hot.sum(axis=1, keepdims=True)
    return one_hot / jnp.maximum(counts, 1.0)


def gcn_forward_ref(params, x, edge_index, edge_attr, batch, num_graphs,
                    *, mirror_kernel=False):
    """Reference.  mirror_kernel=True replays the kernel's bf16 casts exactly."""
    n = x.shape[0]
    L = build_scaled_laplacian(edge_index, edge_attr, n)
    if mirror_kernel:
        L = L.astype(jnp.bfloat16)
    P = build_pool_matrix(batch, num_graphs, n)
    hi = jax.lax.Precision.HIGHEST

    def dot(a, b):
        if mirror_kernel:
            return jnp.dot(a.astype(jnp.bfloat16), b.astype(jnp.bfloat16),
                           preferred_element_type=jnp.float32)
        return jnp.dot(a, b, precision=hi)

    def cheb(h, w, b):
        k_order = w.shape[0]
        acc = dot(h, w[0])
        if k_order > 1:
            t_prev = h
            t_cur = dot(L, h)
            acc = acc + dot(t_cur, w[1])
            for k in range(2, k_order):
                t_next = 2.0 * dot(L, t_cur) - t_prev
                acc = acc + dot(t_next, w[k])
                t_prev, t_cur = t_cur, t_next
        return jnp.maximum(acc + b[None, :], 0.0)

    h = cheb(x, params["conv1_w"], params["conv1_b"])
    h = cheb(h, params["conv2_w"], params["conv2_b"])
    h = cheb(h, params["conv3_w"], params["conv3_b"])
    pooled = dot(P, h)
    return dot(pooled, params["lin_w"]) + params["lin_b"][None, :]


# ---------------------------------------------------------------------------
if __name__ == "__main__":
    num_features = 4
    num_classes = 3
    k_order = 3
    num_graphs = 2
    nodes_per_graph = 8
    N = num_graphs * nodes_per_graph  # 16 nodes total

    key = jax.random.PRNGKey(0)
    key, kx, ke = jax.random.split(key, 3)

    # Node features.
    x = jax.random.normal(kx, (N, num_features), jnp.float32)

    # Deterministic bidirectional ring edges inside each graph.
    src, dst = [], []
    for g in range(num_graphs):
        off = g * nodes_per_graph
        for i in range(nodes_per_graph):
            a, b_ = off + i, off + (i + 1) % nodes_per_graph
            src += [a, b_]
            dst += [b_, a]
    edge_index = jnp.array([src, dst], dtype=jnp.int32)
    edge_attr = 0.5 + jax.random.uniform(ke, (edge_index.shape[1],), jnp.float32)

    batch = jnp.repeat(jnp.arange(num_graphs, dtype=jnp.int32), nodes_per_graph)

    params = init_params(jax.random.PRNGKey(42), num_features, num_classes, k_order)

    out = gcn_forward(params, x, edge_index, edge_attr, batch, num_graphs)
    out = jax.block_until_ready(out)
    assert out.shape == (num_graphs, num_classes)

    # Tight check against a reference that mirrors the kernel's bf16 casts.
    ref_matched = gcn_forward_ref(params, x, edge_index, edge_attr, batch,
                                  num_graphs, mirror_kernel=True)
    assert jnp.allclose(out, ref_matched, atol=2e-3, rtol=2e-3), (out, ref_matched)

    # Loose check against the full-f32 (original-module-semantics) reference;
    # tolerance documents the intentional bf16 MXU-input semantics of the kernel.
    ref_f32 = gcn_forward_ref(params, x, edge_index, edge_attr, batch, num_graphs)
    assert jnp.allclose(out, ref_f32, atol=5e-2, rtol=5e-2), (out, ref_f32)

    print("KERNEL_OK")
</pallas_src>

<mosaic_0001>
module attributes {stable_mosaic.version = 11 : i64} {
  func.func @gcn_fused_kernel(%arg0: i32, %arg1: memref<1x128x128xbf16, #tpu.memory_space<vmem>>, %arg2: memref<1x1x128xf32, #tpu.memory_space<vmem>>, %arg3: memref<1x128x128xf32, #tpu.memory_space<vmem>>, %arg4: memref<3x128x128xbf16, #tpu.memory_space<vmem>>, %arg5: memref<1x128xf32, #tpu.memory_space<vmem>>, %arg6: memref<3x128x128xbf16, #tpu.memory_space<vmem>>, %arg7: memref<1x128xf32, #tpu.memory_space<vmem>>, %arg8: memref<3x128x128xbf16, #tpu.memory_space<vmem>>, %arg9: memref<1x128xf32, #tpu.memory_space<vmem>>, %arg10: memref<128x128xbf16, #tpu.memory_space<vmem>>, %arg11: memref<1x128xf32, #tpu.memory_space<vmem>>, %arg12: memref<1x1x128xf32, #tpu.memory_space<vmem>>) attributes {dimension_semantics = [#tpu.dimension_semantics<parallel>], iteration_bounds = array<i64: 2>, scalar_prefetch = 0 : i64, scratch_operands = 0 : i64, tpu.core_type = #tpu.core_type<tc>, window_params = [{transform_indices = @transform_0, window_bounds = array<i64: 1, 128, 128>}, {transform_indices = @transform_1, window_bounds = array<i64: 1, 1, 128>}, {transform_indices = @transform_2, window_bounds = array<i64: 1, 128, 128>}, {pipeline_mode = #tpu.pipeline_mode<synchronous>, transform_indices = @transform_3, window_bounds = array<i64: 3, 128, 128>}, {pipeline_mode = #tpu.pipeline_mode<synchronous>, transform_indices = @transform_4, window_bounds = array<i64: 1, 128>}, {pipeline_mode = #tpu.pipeline_mode<synchronous>, transform_indices = @transform_5, window_bounds = array<i64: 3, 128, 128>}, {pipeline_mode = #tpu.pipeline_mode<synchronous>, transform_indices = @transform_6, window_bounds = array<i64: 1, 128>}, {pipeline_mode = #tpu.pipeline_mode<synchronous>, transform_indices = @transform_7, window_bounds = array<i64: 3, 128, 128>}, {pipeline_mode = #tpu.pipeline_mode<synchronous>, transform_indices = @transform_8, window_bounds = array<i64: 1, 128>}, {pipeline_mode = #tpu.pipeline_mode<synchronous>, transform_indices = @transform_9, window_bounds = array<i64: 128, 128>}, {pipeline_mode = #tpu.pipeline_mode<synchronous>, transform_indices = @transform_10, window_bounds = array<i64: 1, 128>}, {transform_indices = @transform_11, window_bounds = array<i64: 1, 1, 128>}]} {
    %c0 = arith.constant 0 : index
    %c0_0 = arith.constant 0 : index
    %c0_1 = arith.constant 0 : index
    %0 = vector.load %arg1[%c0, %c0_0, %c0_1] : memref<1x128x128xbf16, #tpu.memory_space<vmem>>, vector<1x128x128xbf16>
    %1 = vector.shape_cast %0 : vector<1x128x128xbf16> to vector<128x128xbf16>
    %c0_2 = arith.constant 0 : index
    %c0_3 = arith.constant 0 : index
    %c0_4 = arith.constant 0 : index
    %2 = vector.load %arg3[%c0_2, %c0_3, %c0_4] : memref<1x128x128xf32, #tpu.memory_space<vmem>>, vector<1x128x128xf32>
    %3 = vector.shape_cast %2 : vector<1x128x128xf32> to vector<128x128xf32>
    %4 = arith.truncf %3 : vector<128x128xf32> to vector<128x128xbf16>
    %c0_5 = arith.constant 0 : index
    %c0_6 = arith.constant 0 : index
    %c0_7 = arith.constant 0 : index
    %5 = vector.load %arg4[%c0_5, %c0_6, %c0_7] : memref<3x128x128xbf16, #tpu.memory_space<vmem>>, vector<1x128x128xbf16>
    %6 = vector.shape_cast %5 : vector<1x128x128xbf16> to vector<128x128xbf16>
    %cst = arith.constant dense<0.000000e+00> : vector<128x128xf32>
    %7 = tpu.matmul %4, %6, %cst {dimension_numbers = #tpu.dot_dimension_numbers<[1], [0], [0], [1], [0, 0, 1, 1], [], []>} : vector<128x128xbf16>, vector<128x128xbf16>, vector<128x128xf32> -> vector<128x128xf32>
    %cst_8 = arith.constant dense<0.000000e+00> : vector<128x128xf32>
    %8 = tpu.matmul %1, %4, %cst_8 {dimension_numbers = #tpu.dot_dimension_numbers<[1], [0], [0], [1], [0, 0, 1, 1], [], []>} : vector<128x128xbf16>, vector<128x128xbf16>, vector<128x128xf32> -> vector<128x128xf32>
    %9 = arith.truncf %8 : vector<128x128xf32> to vector<128x128xbf16>
    %c1 = arith.constant 1 : index
    %c0_9 = arith.constant 0 : index
    %c0_10 = arith.constant 0 : index
    %10 = vector.load %arg4[%c1, %c0_9, %c0_10] : memref<3x128x128xbf16, #tpu.memory_space<vmem>>, vector<1x128x128xbf16>
    %11 = vector.shape_cast %10 : vector<1x128x128xbf16> to vector<128x128xbf16>
    %cst_11 = arith.constant dense<0.000000e+00> : vector<128x128xf32>
    %12 = tpu.matmul %9, %11, %cst_11 {dimension_numbers = #tpu.dot_dimension_numbers<[1], [0], [0], [1], [0, 0, 1, 1], [], []>} : vector<128x128xbf16>, vector<128x128xbf16>, vector<128x128xf32> -> vector<128x128xf32>
    %13 = arith.addf %7, %12 : vector<128x128xf32>
    %cst_12 = arith.constant dense<0.000000e+00> : vector<128x128xf32>
    %14 = tpu.matmul %1, %9, %cst_12 {dimension_numbers = #tpu.dot_dimension_numbers<[1], [0], [0], [1], [0, 0, 1, 1], [], []>} : vector<128x128xbf16>, vector<128x128xbf16>, vector<128x128xf32> -> vector<128x128xf32>
    %cst_13 = arith.constant 2.000000e+00 : f32
    %15 = vector.broadcast %cst_13 : f32 to vector<128x128xf32>
    %16 = arith.mulf %15, %14 : vector<128x128xf32>
    %17 = arith.subf %16, %3 : vector<128x128xf32>
    %18 = arith.truncf %17 : vector<128x128xf32> to vector<128x128xbf16>
    %c2 = arith.constant 2 : index
    %c0_14 = arith.constant 0 : index
    %c0_15 = arith.constant 0 : index
    %19 = vector.load %arg4[%c2, %c0_14, %c0_15] : memref<3x128x128xbf16, #tpu.memory_space<vmem>>, vector<1x128x128xbf16>
    %20 = vector.shape_cast %19 : vector<1x128x128xbf16> to vector<128x128xbf16>
    %cst_16 = arith.constant dense<0.000000e+00> : vector<128x128xf32>
    %21 = tpu.matmul %18, %20, %cst_16 {dimension_numbers = #tpu.dot_dimension_numbers<[1], [0], [0], [1], [0, 0, 1, 1], [], []>} : vector<128x128xbf16>, vector<128x128xbf16>, vector<128x128xf32> -> vector<128x128xf32>
    %22 = arith.addf %13, %21 : vector<128x128xf32>
    %c0_17 = arith.constant 0 : index
    %c0_18 = arith.constant 0 : index
    %23 = vector.load %arg5[%c0_17, %c0_18] : memref<1x128xf32, #tpu.memory_space<vmem>>, vector<1x128xf32>
    %24 = vector.broadcast %23 : vector<1x128xf32> to vector<128x128xf32>
    %25 = arith.addf %22, %24 : vector<128x128xf32>
    %cst_19 = arith.constant 0.000000e+00 : f32
    %26 = vector.broadcast %cst_19 : f32 to vector<128x128xf32>
    %27 = arith.maximumf %25, %26 : vector<128x128xf32>
    %28 = arith.truncf %27 : vector<128x128xf32> to vector<128x128xbf16>
    %c0_20 = arith.constant 0 : index
    %c0_21 = arith.constant 0 : index
    %c0_22 = arith.constant 0 : index
    %29 = vector.load %arg6[%c0_20, %c0_21, %c0_22] : memref<3x128x128xbf16, #tpu.memory_space<vmem>>, vector<1x128x128xbf16>
    %30 = vector.shape_cast %29 : vector<1x128x128xbf16> to vector<128x128xbf16>
    %cst_23 = arith.constant dense<0.000000e+00> : vector<128x128xf32>
    %31 = tpu.matmul %28, %30, %cst_23 {dimension_numbers = #tpu.dot_dimension_numbers<[1], [0], [0], [1], [0, 0, 1, 1], [], []>} : vector<128x128xbf16>, vector<128x128xbf16>, vector<128x128xf32> -> vector<128x128xf32>
    %cst_24 = arith.constant dense<0.000000e+00> : vector<128x128xf32>
    %32 = tpu.matmul %1, %28, %cst_24 {dimension_numbers = #tpu.dot_dimension_numbers<[1], [0], [0], [1], [0, 0, 1, 1], [], []>} : vector<128x128xbf16>, vector<128x128xbf16>, vector<128x128xf32> -> vector<128x128xf32>
    %33 = arith.truncf %32 : vector<128x128xf32> to vector<128x128xbf16>
    %c1_25 = arith.constant 1 : index
    %c0_26 = arith.constant 0 : index
    %c0_27 = arith.constant 0 : index
    %34 = vector.load %arg6[%c1_25, %c0_26, %c0_27] : memref<3x128x128xbf16, #tpu.memory_space<vmem>>, vector<1x128x128xbf16>
    %35 = vector.shape_cast %34 : vector<1x128x128xbf16> to vector<128x128xbf16>
    %cst_28 = arith.constant dense<0.000000e+00> : vector<128x128xf32>
    %36 = tpu.matmul %33, %35, %cst_28 {dimension_numbers = #tpu.dot_dimension_numbers<[1], [0], [0], [1], [0, 0, 1, 1], [], []>} : vector<128x128xbf16>, vector<128x128xbf16>, vector<128x128xf32> -> vector<128x128xf32>
    %37 = arith.addf %31, %36 : vector<128x128xf32>
    %cst_29 = arith.constant dense<0.000000e+00> : vector<128x128xf32>
    %38 = tpu.matmul %1, %33, %cst_29 {dimension_numbers = #tpu.dot_dimension_numbers<[1], [0], [0], [1], [0, 0, 1, 1], [], []>} : vector<128x128xbf16>, vector<128x128xbf16>, vector<128x128xf32> -> vector<128x128xf32>
    %cst_30 = arith.constant 2.000000e+00 : f32
    %39 = vector.broadcast %cst_30 : f32 to vector<128x128xf32>
    %40 = arith.mulf %39, %38 : vector<128x128xf32>
    %41 = arith.subf %40, %27 : vector<128x128xf32>
    %42 = arith.truncf %41 : vector<128x128xf32> to vector<128x128xbf16>
    %c2_31 = arith.constant 2 : index
    %c0_32 = arith.constant 0 : index
    %c0_33 = arith.constant 0 : index
    %43 = vector.load %arg6[%c2_31, %c0_32, %c0_33] : memref<3x128x128xbf16, #tpu.memory_space<vmem>>, vector<1x128x128xbf16>
    %44 = vector.shape_cast %43 : vector<1x128x128xbf16> to vector<128x128xbf16>
    %cst_34 = arith.constant dense<0.000000e+00> : vector<128x128xf32>
    %45 = tpu.matmul %42, %44, %cst_34 {dimension_numbers = #tpu.dot_dimension_numbers<[1], [0], [0], [1], [0, 0, 1, 1], [], []>} : vector<128x128xbf16>, vector<128x128xbf16>, vector<128x128xf32> -> vector<128x128xf32>
    %46 = arith.addf %37, %45 : vector<128x128xf32>
    %c0_35 = arith.constant 0 : index
    %c0_36 = arith.constant 0 : index
    %47 = vector.load %arg7[%c0_35, %c0_36] : memref<1x128xf32, #tpu.memory_space<vmem>>, vector<1x128xf32>
    %48 = vector.broadcast %47 : vector<1x128xf32> to vector<128x128xf32>
    %49 = arith.addf %46, %48 : vector<128x128xf32>
    %cst_37 = arith.constant 0.000000e+00 : f32
    %50 = vector.broadcast %cst_37 : f32 to vector<128x128xf32>
    %51 = arith.maximumf %49, %50 : vector<128x128xf32>
    %52 = arith.truncf %51 : vector<128x128xf32> to vector<128x128xbf16>
    %c0_38 = arith.constant 0 : index
    %c0_39 = arith.constant 0 : index
    %c0_40 = arith.constant 0 : index
    %53 = vector.load %arg8[%c0_38, %c0_39, %c0_40] : memref<3x128x128xbf16, #tpu.memory_space<vmem>>, vector<1x128x128xbf16>
    %54 = vector.shape_cast %53 : vector<1x128x128xbf16> to vector<128x128xbf16>
    %cst_41 = arith.constant dense<0.000000e+00> : vector<128x128xf32>
    %55 = tpu.matmul %52, %54, %cst_41 {dimension_numbers = #tpu.dot_dimension_numbers<[1], [0], [0], [1], [0, 0, 1, 1], [], []>} : vector<128x128xbf16>, vector<128x128xbf16>, vector<128x128xf32> -> vector<128x128xf32>
    %cst_42 = arith.constant dense<0.000000e+00> : vector<128x128xf32>
    %56 = tpu.matmul %1, %52, %cst_42 {dimension_numbers = #tpu.dot_dimension_numbers<[1], [0], [0], [1], [0, 0, 1, 1], [], []>} : vector<128x128xbf16>, vector<128x128xbf16>, vector<128x128xf32> -> vector<128x128xf32>
    %57 = arith.truncf %56 : vector<128x128xf32> to vector<128x128xbf16>
    %c1_43 = arith.constant 1 : index
    %c0_44 = arith.constant 0 : index
    %c0_45 = arith.constant 0 : index
    %58 = vector.load %arg8[%c1_43, %c0_44, %c0_45] : memref<3x128x128xbf16, #tpu.memory_space<vmem>>, vector<1x128x128xbf16>
    %59 = vector.shape_cast %58 : vector<1x128x128xbf16> to vector<128x128xbf16>
    %cst_46 = arith.constant dense<0.000000e+00> : vector<128x128xf32>
    %60 = tpu.matmul %57, %59, %cst_46 {dimension_numbers = #tpu.dot_dimension_numbers<[1], [0], [0], [1], [0, 0, 1, 1], [], []>} : vector<128x128xbf16>, vector<128x128xbf16>, vector<128x128xf32> -> vector<128x128xf32>
    %61 = arith.addf %55, %60 : vector<128x128xf32>
    %cst_47 = arith.constant dense<0.000000e+00> : vector<128x128xf32>
    %62 = tpu.matmul %1, %57, %cst_47 {dimension_numbers = #tpu.dot_dimension_numbers<[1], [0], [0], [1], [0, 0, 1, 1], [], []>} : vector<128x128xbf16>, vector<128x128xbf16>, vector<128x128xf32> -> vector<128x128xf32>
    %cst_48 = arith.constant 2.000000e+00 : f32
    %63 = vector.broadcast %cst_48 : f32 to vector<128x128xf32>
    %64 = arith.mulf %63, %62 : vector<128x128xf32>
    %65 = arith.subf %64, %51 : vector<128x128xf32>
    %66 = arith.truncf %65 : vector<128x128xf32> to vector<128x128xbf16>
    %c2_49 = arith.constant 2 : index
    %c0_50 = arith.constant 0 : index
    %c0_51 = arith.constant 0 : index
    %67 = vector.load %arg8[%c2_49, %c0_50, %c0_51] : memref<3x128x128xbf16, #tpu.memory_space<vmem>>, vector<1x128x128xbf16>
    %68 = vector.shape_cast %67 : vector<1x128x128xbf16> to vector<128x128xbf16>
    %cst_52 = arith.constant dense<0.000000e+00> : vector<128x128xf32>
    %69 = tpu.matmul %66, %68, %cst_52 {dimension_numbers = #tpu.dot_dimension_numbers<[1], [0], [0], [1], [0, 0, 1, 1], [], []>} : vector<128x128xbf16>, vector<128x128xbf16>, vector<128x128xf32> -> vector<128x128xf32>
    %70 = arith.addf %61, %69 : vector<128x128xf32>
    %c0_53 = arith.constant 0 : index
    %c0_54 = arith.constant 0 : index
    %71 = vector.load %arg9[%c0_53, %c0_54] : memref<1x128xf32, #tpu.memory_space<vmem>>, vector<1x128xf32>
    %72 = vector.broadcast %71 : vector<1x128xf32> to vector<128x128xf32>
    %73 = arith.addf %70, %72 : vector<128x128xf32>
    %cst_55 = arith.constant 0.000000e+00 : f32
    %74 = vector.broadcast %cst_55 : f32 to vector<128x128xf32>
    %75 = arith.maximumf %73, %74 : vector<128x128xf32>
    %c0_56 = arith.constant 0 : index
    %c0_57 = arith.constant 0 : index
    %c0_58 = arith.constant 0 : index
    %76 = vector.load %arg2[%c0_56, %c0_57, %c0_58] : memref<1x1x128xf32, #tpu.memory_space<vmem>>, vector<1x1x128xf32>
    %77 = vector.shape_cast %76 : vector<1x1x128xf32> to vector<1x128xf32>
    %78 = arith.truncf %77 : vector<1x128xf32> to vector<1x128xbf16>
    %79 = arith.truncf %75 : vector<128x128xf32> to vector<128x128xbf16>
    %cst_59 = arith.constant dense<0.000000e+00> : vector<1x128xf32>
    %80 = tpu.matmul %78, %79, %cst_59 {dimension_numbers = #tpu.dot_dimension_numbers<[1], [0], [0], [1], [0, 0, 1, 1], [], []>} : vector<1x128xbf16>, vector<128x128xbf16>, vector<1x128xf32> -> vector<1x128xf32>
    %81 = arith.truncf %80 : vector<1x128xf32> to vector<1x128xbf16>
    %c0_60 = arith.constant 0 : index
    %c0_61 = arith.constant 0 : index
    %82 = vector.load %arg10[%c0_60, %c0_61] : memref<128x128xbf16, #tpu.memory_space<vmem>>, vector<128x128xbf16>
    %cst_62 = arith.constant dense<0.000000e+00> : vector<1x128xf32>
    %83 = tpu.matmul %81, %82, %cst_62 {dimension_numbers = #tpu.dot_dimension_numbers<[1], [0], [0], [1], [0, 0, 1, 1], [], []>} : vector<1x128xbf16>, vector<128x128xbf16>, vector<1x128xf32> -> vector<1x128xf32>
    %c0_63 = arith.constant 0 : index
    %c0_64 = arith.constant 0 : index
    %84 = vector.load %arg11[%c0_63, %c0_64] : memref<1x128xf32, #tpu.memory_space<vmem>>, vector<1x128xf32>
    %85 = arith.addf %83, %84 : vector<1x128xf32>
    %c0_65 = arith.constant 0 : index
    %c0_66 = arith.constant 0 : index
    %c0_67 = arith.constant 0 : index
    %86 = vector.load %arg12[%c0_65, %c0_66, %c0_67] : memref<1x1x128xf32, #tpu.memory_space<vmem>>, vector<1x1x128xf32>
    %87 = vector.shape_cast %86 : vector<1x1x128xf32> to vector<1x128xf32>
    %88 = vector.shape_cast %85 : vector<1x128xf32> to vector<1x1x128xf32>
    tpu.vector_store %arg12[%c0_65, %c0_66, %c0_67], %88 {strides = array<i32>} : memref<1x1x128xf32, #tpu.memory_space<vmem>>, vector<1x1x128xf32>,
    return
  }
  func.func @transform_0(%arg0: i32) -> (i32, i32, i32) {
    %c0_i32 = arith.constant 0 : i32
    %c0_i32_0 = arith.constant 0 : i32
    %c0_i32_1 = arith.constant 0 : i32
    return %arg0, %c0_i32, %c0_i32_0 : i32, i32, i32
  }
  func.func @transform_1(%arg0: i32) -> (i32, i32, i32) {
    %c0_i32 = arith.constant 0 : i32
    %c0_i32_0 = arith.constant 0 : i32
    %c0_i32_1 = arith.constant 0 : i32
    return %arg0, %c0_i32, %c0_i32_0 : i32, i32, i32
  }
  func.func @transform_2(%arg0: i32) -> (i32, i32, i32) {
    %c0_i32 = arith.constant 0 : i32
    %c0_i32_0 = arith.constant 0 : i32
    %c0_i32_1 = arith.constant 0 : i32
    return %arg0, %c0_i32, %c0_i32_0 : i32, i32, i32
  }
  func.func @transform_3(%arg0: i32) -> (i32, i32, i32) {
    %c0_i32 = arith.constant 0 : i32
    %c0_i32_0 = arith.constant 0 : i32
    %c0_i32_1 = arith.constant 0 : i32
    %c0_i32_2 = arith.constant 0 : i32
    return %c0_i32, %c0_i32_0, %c0_i32_1 : i32, i32, i32
  }
  func.func @transform_4(%arg0: i32) -> (i32, i32) {
    %c0_i32 = arith.constant 0 : i32
    %c0_i32_0 = arith.constant 0 : i32
    %c0_i32_1 = arith.constant 0 : i32
    return %c0_i32, %c0_i32_0 : i32, i32
  }
  func.func @transform_5(%arg0: i32) -> (i32, i32, i32) {
    %c0_i32 = arith.constant 0 : i32
    %c0_i32_0 = arith.constant 0 : i32
    %c0_i32_1 = arith.constant 0 : i32
    %c0_i32_2 = arith.constant 0 : i32
    return %c0_i32, %c0_i32_0, %c0_i32_1 : i32, i32, i32
  }
  func.func @transform_6(%arg0: i32) -> (i32, i32) {
    %c0_i32 = arith.constant 0 : i32
    %c0_i32_0 = arith.constant 0 : i32
    %c0_i32_1 = arith.constant 0 : i32
    return %c0_i32, %c0_i32_0 : i32, i32
  }
  func.func @transform_7(%arg0: i32) -> (i32, i32, i32) {
    %c0_i32 = arith.constant 0 : i32
    %c0_i32_0 = arith.constant 0 : i32
    %c0_i32_1 = arith.constant 0 : i32
    %c0_i32_2 = arith.constant 0 : i32
    return %c0_i32, %c0_i32_0, %c0_i32_1 : i32, i32, i32
  }
  func.func @transform_8(%arg0: i32) -> (i32, i32) {
    %c0_i32 = arith.constant 0 : i32
    %c0_i32_0 = arith.constant 0 : i32
    %c0_i32_1 = arith.constant 0 : i32
    return %c0_i32, %c0_i32_0 : i32, i32
  }
  func.func @transform_9(%arg0: i32) -> (i32, i32) {
    %c0_i32 = arith.constant 0 : i32
    %c0_i32_0 = arith.constant 0 : i32
    %c0_i32_1 = arith.constant 0 : i32
    return %c0_i32, %c0_i32_0 : i32, i32
  }
  func.func @transform_10(%arg0: i32) -> (i32, i32) {
    %c0_i32 = arith.constant 0 : i32
    %c0_i32_0 = arith.constant 0 : i32
    %c0_i32_1 = arith.constant 0 : i32
    return %c0_i32, %c0_i32_0 : i32, i32
  }
  func.func @transform_11(%arg0: i32) -> (i32, i32, i32) {
    %c0_i32 = arith.constant 0 : i32
    %c0_i32_0 = arith.constant 0 : i32
    %c0_i32_1 = arith.constant 0 : i32
    return %arg0, %c0_i32, %c0_i32_0 : i32, i32, i32
  }
}

</mosaic_0001>

<llo_original>
// kernel: tpu_custom_call.1
$region0: #{tpu_custom_call.1}
  #allocation0 [shape = 'u32[]', space=smem, size = 0x4, offset = 0x4, fixed_abs, tag = 'smem constant byte address 0x4 - core index']
  #allocation1 [shape = 'u32[144,128]{1,0:T(1,128)}', space=vmem, size = 0x12000, scoped, tag = 'internal scratch']
  %s0 = inlined_call_operand.hbm [shape: bf16[2,128,128], index: 0, kind: input, shape index: {}]
  %s1 = inlined_call_operand.vmem [shape: f32[2,1,128], index: 1, kind: input, shape index: {}]
  %s2 = inlined_call_operand.hbm [shape: f32[2,128,128], index: 2, kind: input, shape index: {}]
  %s3 = inlined_call_operand.hbm [shape: bf16[3,128,128], index: 3, kind: input, shape index: {}]
  %s4 = inlined_call_operand.vmem [shape: f32[1,128], index: 4, kind: input, shape index: {}]
  %s5 = inlined_call_operand.hbm [shape: bf16[3,128,128], index: 5, kind: input, shape index: {}]
  %s6 = inlined_call_operand.vmem [shape: f32[1,128], index: 6, kind: input, shape index: {}]
  %s7 = inlined_call_operand.hbm [shape: bf16[3,128,128], index: 7, kind: input, shape index: {}]
  %s8 = inlined_call_operand.vmem [shape: f32[1,128], index: 8, kind: input, shape index: {}]
  %s9 = inlined_call_operand.hbm [shape: bf16[128,128], index: 9, kind: input, shape index: {}]
  %s10 = inlined_call_operand.vmem [shape: f32[1,128], index: 10, kind: input, shape index: {}]
  %s11 = inlined_call_operand.hbm [shape: f32[2,1,128], index: 11, kind: output, shape index: {}]
  %s12 = sld [smem:[#allocation0]]
  $region101: #{tpu_custom_call.1} parent=0
    _
  %s14 = ssub.s32 1, %s12
  %s15 = scalar_select 0, %s14, %s12
  $region1: #{tpu_custom_call.1} parent=0
    #allocation2 [shape = 'u8[65536]{0}', space=vmem, size = 0x10000, scoped, tag = 'input window, operand 0']
    #allocation3 [shape = 's32[2]{0}', space=sflag, size = 0x8, scoped, tag = 'scoped memory for tpu_custom_call.1']
    #allocation4 [shape = 's32[2]{0}', space=sflag, size = 0x8, scoped, tag = 'scoped memory for tpu_custom_call.1']
    #allocation5 [shape = 'u8[131072]{0}', space=vmem, size = 0x20000, scoped, tag = 'input window, operand 2']
    #allocation6 [shape = 's32[2]{0}', space=sflag, size = 0x8, scoped, tag = 'scoped memory for tpu_custom_call.1']
    #allocation7 [shape = 'u8[98304]{0}', space=vmem, size = 0x18000, scoped, tag = 'input window, operand 3, single buffered']
    #allocation8 [shape = 'u8[98304]{0}', space=vmem, size = 0x18000, scoped, tag = 'input window, operand 5, single buffered']
    #allocation9 [shape = 's32[1]{0}', space=sflag, size = 0x4, scoped, tag = 'scoped memory for tpu_custom_call.1']
    #allocation10 [shape = 'u8[98304]{0}', space=vmem, size = 0x18000, scoped, tag = 'input window, operand 7, single buffered']
    #allocation11 [shape = 'u8[32768]{0}', space=vmem, size = 0x8000, scoped, tag = 'input window, operand 9, single buffered']
    #allocation12 [shape = 's32[1]{0}', space=sflag, size = 0x4, scoped, tag = 'scoped memory for tpu_custom_call.1']
    #allocation13 [shape = 'u8[1024]{0}', space=vmem, size = 0x400, scoped, tag = 'output window, operand 0']
    %16 = vsyncpa [#allocation3], 0
    %s17 = scalar_lea.sflag [#allocation3], 1
    %18 = vsyncpa %s17, 0
    %19 = vsyncpa [#allocation6], 0
    %s20 = scalar_lea.sflag [#allocation6], 1
    %21 = vsyncpa %s20, 0
    %22 = vsyncpa [#allocation9], 0
    %23 = vsyncpa [#allocation12], 0
    %24 = vsyncpa [#allocation4], 0
    %s25 = scalar_lea.sflag [#allocation4], 1
    %26 = vsyncpa %s25, 0
    loop: start=0, step=1, limit=4
    $region2: #{tpu_custom_call.1} parent=1 // loop_pre_header
      _
    $region3: #{tpu_custom_call.1} parent=1 // loop_header
      %s28 = sphi 0, %s32
      %p29 = scmp.ge.s32.totalorder %s28, 4
      %s38 = sphi 0, %s40
      %s41 = sphi 0, %s38
      %s42 = sphi 0, %s41
      %s58 = sphi 0, %s42
      %s64 = sphi 0, %s66
      %s67 = sphi 0, %s64
      %s68 = sphi 0, %s67
      %s84 = sphi 0, %s68
      %s90 = sphi 0, %s92
      %s93 = sphi 0, %s90
      %s94 = sphi 0, %s93
      %s110 = sphi 0, %s94
      %s114 = sphi 0, %s114
      %s116 = sphi 0, %s114
      %s117 = sphi 0, %s116
      %s131 = sphi 0, %s117
      %s135 = sphi 0, %s135
      %s137 = sphi 0, %s135
      %s138 = sphi 0, %s137
      %s152 = sphi 0, %s138
      %s156 = sphi 0, %s156
      %s158 = sphi 0, %s156
      %s159 = sphi 0, %s158
      %s173 = sphi 0, %s159
      %s177 = sphi 0, %s177
      %s179 = sphi 0, %s177
      %s180 = sphi 0, %s179
      %s194 = sphi 0, %s180
      %s198 = sphi 0, %s198
      %s200 = sphi 0, %s198
      %s201 = sphi 0, %s200
      %s215 = sphi 0, %s201
      %s219 = sphi 0, %s219
      %s221 = sphi 0, %s219
      %s222 = sphi 0, %s221
      %s236 = sphi 0, %s222
      %s240 = sphi 0, %s240
      %s242 = sphi 0, %s240
      %s243 = sphi 0, %s242
      %s257 = sphi 0, %s243
      %s261 = sphi 0, %s261
      %s263 = sphi 0, %s261
      %s264 = sphi 0, %s263
      %s278 = sphi 0, %s264
      %s284 = sphi 0, %s286
      %s287 = sphi 0, %s284
      %s288 = sphi 0, %s287
      %s304 = sphi 0, %s288
    $region4: #{tpu_custom_call.1} parent=1 // loop_header_branch
      %31 = sbr.rel (%p29) target = $region8
    $region5: #{tpu_custom_call.1} parent=1 // loop_body
      %s33 = ssub.s32 %s28, 1
      %s34 = ssub.s32 %s28, 2
      %s35 = sadd.s32 %s28, 1
      %s36 = ssub.s32 %s28, %s35
      %p37 = scmp.eq.s32.totalorder %s36, 0
      %s39 = sadd.s32 %s38, 1
      %s40 = scalar_select %p37, %s38, %s39
      %p43 = pneg %p37
      %p44 = scmp.eq.s32.totalorder %s28, 1
      %p45 = por %p43, %p44
      %p46 = scmp.ne.s32.totalorder %s38, %s41
      %p47 = scmp.eq.s32.totalorder %s28, 0
      %p48 = por %p46, %p47
      %p49 = scmp.ne.s32.totalorder %s38, %s41
      %p50 = scmp.eq.s32.totalorder %s33, 1
      %p51 = por %p49, %p50
      %p52 = scmp.ne.s32.totalorder %s41, %s42
      %p53 = scmp.eq.s32.totalorder %s33, 0
      %p54 = por %p52, %p53
      %p55 = scmp.ne.s32.totalorder %s41, %s42
      %p56 = scmp.eq.s32.totalorder %s34, 1
      %p57 = por %p55, %p56
      %p59 = scmp.ne.s32.totalorder %s42, %s58
      %p60 = scmp.eq.s32.totalorder %s34, 0
      %p61 = por %p59, %p60
      %s62 = ssub.s32 %s28, %s35
      %p63 = scmp.eq.s32.totalorder %s62, 0
      %s65 = sadd.s32 %s64, 1
      %s66 = scalar_select %p63, %s64, %s65
      %p69 = pneg %p63
      %p70 = scmp.eq.s32.totalorder %s28, 1
      %p71 = por %p69, %p70
      %p72 = scmp.ne.s32.totalorder %s64, %s67
      %p73 = scmp.eq.s32.totalorder %s28, 0
      %p74 = por %p72, %p73
      %p75 = scmp.ne.s32.totalorder %s64, %s67
      %p76 = scmp.eq.s32.totalorder %s33, 1
      %p77 = por %p75, %p76
      %p78 = scmp.ne.s32.totalorder %s67, %s68
      %p79 = scmp.eq.s32.totalorder %s33, 0
      %p80 = por %p78, %p79
      %p81 = scmp.ne.s32.totalorder %s67, %s68
      %p82 = scmp.eq.s32.totalorder %s34, 1
      %p83 = por %p81, %p82
      %p85 = scmp.ne.s32.totalorder %s68, %s84
      %p86 = scmp.eq.s32.totalorder %s34, 0
      %p87 = por %p85, %p86
      %s88 = ssub.s32 %s28, %s35
      %p89 = scmp.eq.s32.totalorder %s88, 0
      %s91 = sadd.s32 %s90, 1
      %s92 = scalar_select %p89, %s90, %s91
      %p95 = pneg %p89
      %p96 = scmp.eq.s32.totalorder %s28, 1
      %p97 = por %p95, %p96
      %p98 = scmp.ne.s32.totalorder %s90, %s93
      %p99 = scmp.eq.s32.totalorder %s28, 0
      %p100 = por %p98, %p99
      %p101 = scmp.ne.s32.totalorder %s90, %s93
      %p102 = scmp.eq.s32.totalorder %s33, 1
      %p103 = por %p101, %p102
      %p104 = scmp.ne.s32.totalorder %s93, %s94
      %p105 = scmp.eq.s32.totalorder %s33, 0
      %p106 = por %p104, %p105
      %p107 = scmp.ne.s32.totalorder %s93, %s94
      %p108 = scmp.eq.s32.totalorder %s34, 1
      %p109 = por %p107, %p108
      %p111 = scmp.ne.s32.totalorder %s94, %s110
      %p112 = scmp.eq.s32.totalorder %s34, 0
      %p113 = por %p111, %p112
      %s115 = sadd.s32 %s114, 1
      %p118 = scmp.eq.s32.totalorder %s28, 1
      %p119 = scmp.ne.s32.totalorder %s114, %s116
      %p120 = scmp.eq.s32.totalorder %s28, 0
      %p121 = por %p119, %p120
      %p122 = scmp.ne.s32.totalorder %s114, %s116
      %p123 = scmp.eq.s32.totalorder %s33, 1
      %p124 = por %p122, %p123
      %p125 = scmp.ne.s32.totalorder %s116, %s117
      %p126 = scmp.eq.s32.totalorder %s33, 0
      %p127 = por %p125, %p126
      %p128 = scmp.ne.s32.totalorder %s116, %s117
      %p129 = scmp.eq.s32.totalorder %s34, 1
      %p130 = por %p128, %p129
      %p132 = scmp.ne.s32.totalorder %s117, %s131
      %p133 = scmp.eq.s32.totalorder %s34, 0
      %p134 = por %p132, %p133
      %s136 = sadd.s32 %s135, 1
      %p139 = scmp.eq.s32.totalorder %s28, 1
      %p140 = scmp.ne.s32.totalorder %s135, %s137
      %p141 = scmp.eq.s32.totalorder %s28, 0
      %p142 = por %p140, %p141
      %p143 = scmp.ne.s32.totalorder %s135, %s137
      %p144 = scmp.eq.s32.totalorder %s33, 1
      %p145 = por %p143, %p144
      %p146 = scmp.ne.s32.totalorder %s137, %s138
      %p147 = scmp.eq.s32.totalorder %s33, 0
      %p148 = por %p146, %p147
      %p149 = scmp.ne.s32.totalorder %s137, %s138
      %p150 = scmp.eq.s32.totalorder %s34, 1
      %p151 = por %p149, %p150
      %p153 = scmp.ne.s32.totalorder %s138, %s152
      %p154 = scmp.eq.s32.totalorder %s34, 0
      %p155 = por %p153, %p154
      %s157 = sadd.s32 %s156, 1
      %p160 = scmp.eq.s32.totalorder %s28, 1
      %p161 = scmp.ne.s32.totalorder %s156, %s158
      %p162 = scmp.eq.s32.totalorder %s28, 0
      %p163 = por %p161, %p162
      %p164 = scmp.ne.s32.totalorder %s156, %s158
      %p165 = scmp.eq.s32.totalorder %s33, 1
      %p166 = por %p164, %p165
      %p167 = scmp.ne.s32.totalorder %s158, %s159
      %p168 = scmp.eq.s32.totalorder %s33, 0
      %p169 = por %p167, %p168
      %p170 = scmp.ne.s32.totalorder %s158, %s159
      %p171 = scmp.eq.s32.totalorder %s34, 1
      %p172 = por %p170, %p171
      %p174 = scmp.ne.s32.totalorder %s159, %s173
      %p175 = scmp.eq.s32.totalorder %s34, 0
      %p176 = por %p174, %p175
      %s178 = sadd.s32 %s177, 1
      %p181 = scmp.eq.s32.totalorder %s28, 1
      %p182 = scmp.ne.s32.totalorder %s177, %s179
      %p183 = scmp.eq.s32.totalorder %s28, 0
      %p184 = por %p182, %p183
      %p185 = scmp.ne.s32.totalorder %s177, %s179
      %p186 = scmp.eq.s32.totalorder %s33, 1
      %p187 = por %p185, %p186
      %p188 = scmp.ne.s32.totalorder %s179, %s180
      %p189 = scmp.eq.s32.totalorder %s33, 0
      %p190 = por %p188, %p189
      %p191 = scmp.ne.s32.totalorder %s179, %s180
      %p192 = scmp.eq.s32.totalorder %s34, 1
      %p193 = por %p191, %p192
      %p195 = scmp.ne.s32.totalorder %s180, %s194
      %p196 = scmp.eq.s32.totalorder %s34, 0
      %p197 = por %p195, %p196
      %s199 = sadd.s32 %s198, 1
      %p202 = scmp.eq.s32.totalorder %s28, 1
      %p203 = scmp.ne.s32.totalorder %s198, %s200
      %p204 = scmp.eq.s32.totalorder %s28, 0
      %p205 = por %p203, %p204
      %p206 = scmp.ne.s32.totalorder %s198, %s200
      %p207 = scmp.eq.s32.totalorder %s33, 1
      %p208 = por %p206, %p207
      %p209 = scmp.ne.s32.totalorder %s200, %s201
      %p210 = scmp.eq.s32.totalorder %s33, 0
      %p211 = por %p209, %p210
      %p212 = scmp.ne.s32.totalorder %s200, %s201
      %p213 = scmp.eq.s32.totalorder %s34, 1
      %p214 = por %p212, %p213
      %p216 = scmp.ne.s32.totalorder %s201, %s215
      %p217 = scmp.eq.s32.totalorder %s34, 0
      %p218 = por %p216, %p217
      %s220 = sadd.s32 %s219, 1
      %p223 = scmp.eq.s32.totalorder %s28, 1
      %p224 = scmp.ne.s32.totalorder %s219, %s221
      %p225 = scmp.eq.s32.totalorder %s28, 0
      %p226 = por %p224, %p225
      %p227 = scmp.ne.s32.totalorder %s219, %s221
      %p228 = scmp.eq.s32.totalorder %s33, 1
      %p229 = por %p227, %p228
      %p230 = scmp.ne.s32.totalorder %s221, %s222
      %p231 = scmp.eq.s32.totalorder %s33, 0
      %p232 = por %p230, %p231
      %p233 = scmp.ne.s32.totalorder %s221, %s222
      %p234 = scmp.eq.s32.totalorder %s34, 1
      %p235 = por %p233, %p234
      %p237 = scmp.ne.s32.totalorder %s222, %s236
      %p238 = scmp.eq.s32.totalorder %s34, 0
      %p239 = por %p237, %p238
      %s241 = sadd.s32 %s240, 1
      %p244 = scmp.eq.s32.totalorder %s28, 1
      %p245 = scmp.ne.s32.totalorder %s240, %s242
      %p246 = scmp.eq.s32.totalorder %s28, 0
      %p247 = por %p245, %p246
      %p248 = scmp.ne.s32.totalorder %s240, %s242
      %p249 = scmp.eq.s32.totalorder %s33, 1
      %p250 = por %p248, %p249
      %p251 = scmp.ne.s32.totalorder %s242, %s243
      %p252 = scmp.eq.s32.totalorder %s33, 0
      %p253 = por %p251, %p252
      %p254 = scmp.ne.s32.totalorder %s242, %s243
      %p255 = scmp.eq.s32.totalorder %s34, 1
      %p256 = por %p254, %p255
      %p258 = scmp.ne.s32.totalorder %s243, %s257
      %p259 = scmp.eq.s32.totalorder %s34, 0
      %p260 = por %p258, %p259
      %s262 = sadd.s32 %s261, 1
      %p265 = scmp.eq.s32.totalorder %s28, 1
      %p266 = scmp.ne.s32.totalorder %s261, %s263
      %p267 = scmp.eq.s32.totalorder %s28, 0
      %p268 = por %p266, %p267
      %p269 = scmp.ne.s32.totalorder %s261, %s263
      %p270 = scmp.eq.s32.totalorder %s33, 1
      %p271 = por %p269, %p270
      %p272 = scmp.ne.s32.totalorder %s263, %s264
      %p273 = scmp.eq.s32.totalorder %s33, 0
      %p274 = por %p272, %p273
      %p275 = scmp.ne.s32.totalorder %s263, %s264
      %p276 = scmp.eq.s32.totalorder %s34, 1
      %p277 = por %p275, %p276
      %p279 = scmp.ne.s32.totalorder %s264, %s278
      %p280 = scmp.eq.s32.totalorder %s34, 0
      %p281 = por %p279, %p280
      %s282 = ssub.s32 %s28, %s35
      %p283 = scmp.eq.s32.totalorder %s282, 0
      %s285 = sadd.s32 %s284, 1
      %s286 = scalar_select %p283, %s284, %s285
      %p289 = pneg %p283
      %p290 = scmp.eq.s32.totalorder %s28, 1
      %p291 = por %p289, %p290
      %p292 = scmp.ne.s32.totalorder %s284, %s287
      %p293 = scmp.eq.s32.totalorder %s28, 0
      %p294 = por %p292, %p293
      %p295 = scmp.ne.s32.totalorder %s284, %s287
      %p296 = scmp.eq.s32.totalorder %s33, 1
      %p297 = por %p295, %p296
      %p298 = scmp.ne.s32.totalorder %s287, %s288
      %p299 = scmp.eq.s32.totalorder %s33, 0
      %p300 = por %p298, %p299
      %p301 = scmp.ne.s32.totalorder %s287, %s288
      %p302 = scmp.eq.s32.totalorder %s34, 1
      %p303 = por %p301, %p302
      %p305 = scmp.ne.s32.totalorder %s288, %s304
      %p306 = scmp.eq.s32.totalorder %s34, 0
      %p307 = por %p305, %p306
      %p308 = scmp.le.s32.totalorder 1, %s28
      %p309 = scmp.lt.s32.totalorder %s28, 3
      %p310 = pnand %p308, %p309
      %p311 = pneg %p310
      // Predicated region
      $region9: #{tpu_custom_call.1} parent=5 // pred_check
        _
      $region10: #{tpu_custom_call.1} parent=5 // pred_check_branch
        %313 = sbr.rel (%p310) target = $region12
      $region11: #{tpu_custom_call.1} parent=5 // pred_region
        %s314 = ssub.s32 %s28, 1
        // Predicated region
        $region13: #{tpu_custom_call.1} parent=11 // pred_check
          %p315 = pneg %p127
        $region14: #{tpu_custom_call.1} parent=11 // pred_check_branch
          %317 = sbr.rel (%p315) target = $region16
        $region15: #{tpu_custom_call.1} parent=11 // pred_region
          %s319 = ssub.s32 3072, 3072
          %320 = vsyncadd [#allocation6], %s319
          %s321 = sshll.u32 [#allocation7], 4
          %s322 = int_to_ptr.vmem [resolvable:$true] %s321
          %327 = dma.hbm_to_vmem [thread:$0]  %s3, 3072, %s322, [#allocation6], 64, 64, 4
        $region16: #{tpu_custom_call.1} parent=11 // pred_fallthru
          _
        // Predicated region
        $region17: #{tpu_custom_call.1} parent=11 // pred_check
          %p328 = pneg %p148
        $region18: #{tpu_custom_call.1} parent=11 // pred_check_branch
          %330 = sbr.rel (%p328) target = $region20
        $region19: #{tpu_custom_call.1} parent=11 // pred_region
          _
        $region20: #{tpu_custom_call.1} parent=11 // pred_fallthru
          _
        // Predicated region
        $region21: #{tpu_custom_call.1} parent=11 // pred_check
          %p331 = pneg %p169
        $region22: #{tpu_custom_call.1} parent=11 // pred_check_branch
          %333 = sbr.rel (%p331) target = $region24
        $region23: #{tpu_custom_call.1} parent=11 // pred_region
          %s335 = ssub.s32 3072, 3072
          %336 = vsyncadd [#allocation9], %s335
          %s337 = sshll.u32 [#allocation8], 4
          %s338 = int_to_ptr.vmem [resolvable:$true] %s337
          %343 = dma.hbm_to_vmem [thread:$0]  %s5, 3072, %s338, [#allocation9], 64, 64, 4
        $region24: #{tpu_custom_call.1} parent=11 // pred_fallthru
          _
        // Predicated region
        $region25: #{tpu_custom_call.1} parent=11 // pred_check
          %p344 = pneg %p190
        $region26: #{tpu_custom_call.1} parent=11 // pred_check_branch
          %346 = sbr.rel (%p344) target = $region28
        $region27: #{tpu_custom_call.1} parent=11 // pred_region
          _
        $region28: #{tpu_custom_call.1} parent=11 // pred_fallthru
          _
        // Predicated region
        $region29: #{tpu_custom_call.1} parent=11 // pred_check
          %p347 = pneg %p211
        $region30: #{tpu_custom_call.1} parent=11 // pred_check_branch
          %349 = sbr.rel (%p347) target = $region32
        $region31: #{tpu_custom_call.1} parent=11 // pred_region
          %s351 = ssub.s32 3072, 3072
          %352 = vsyncadd [#allocation9], %s351
          %s353 = sshll.u32 [#allocation10], 4
          %s354 = int_to_ptr.vmem [resolvable:$true] %s353
          %359 = dma.hbm_to_vmem [thread:$0]  %s7, 3072, %s354, [#allocation9], 64, 64, 4
        $region32: #{tpu_custom_call.1} parent=11 // pred_fallthru
          _
        // Predicated region
        $region33: #{tpu_custom_call.1} parent=11 // pred_check
          %p360 = pneg %p232
        $region34: #{tpu_custom_call.1} parent=11 // pred_check_branch
          %362 = sbr.rel (%p360) target = $region36
        $region35: #{tpu_custom_call.1} parent=11 // pred_region
          _
        $region36: #{tpu_custom_call.1} parent=11 // pred_fallthru
          _
        // Predicated region
        $region37: #{tpu_custom_call.1} parent=11 // pred_check
          %p363 = pneg %p253
        $region38: #{tpu_custom_call.1} parent=11 // pred_check_branch
          %365 = sbr.rel (%p363) target = $region40
        $region39: #{tpu_custom_call.1} parent=11 // pred_region
          %s367 = ssub.s32 1024, 1024
          %368 = vsyncadd [#allocation12], %s367
          %s369 = sshll.u32 [#allocation11], 4
          %s370 = int_to_ptr.vmem [resolvable:$true] %s369
          %375 = dma.hbm_to_vmem [thread:$0]  %s9, 1024, %s370, [#allocation12], 64, 64, 4
        $region40: #{tpu_custom_call.1} parent=11 // pred_fallthru
          _
        // Predicated region
        $region41: #{tpu_custom_call.1} parent=11 // pred_check
          %p376 = pneg %p274
        $region42: #{tpu_custom_call.1} parent=11 // pred_check_branch
          %378 = sbr.rel (%p376) target = $region44
        $region43: #{tpu_custom_call.1} parent=11 // pred_region
          _
        $region44: #{tpu_custom_call.1} parent=11 // pred_fallthru
          _
      $region12: #{tpu_custom_call.1} parent=5 // pred_fallthru
        _
      %p379 = scmp.lt.s32.totalorder %s28, 2
      // Predicated region
      $region45: #{tpu_custom_call.1} parent=5 // pred_check
        %p380 = pneg %p379
      $region46: #{tpu_custom_call.1} parent=5 // pred_check_branch
        %382 = sbr.rel (%p380) target = $region48
      $region47: #{tpu_custom_call.1} parent=5 // pred_region
        // Predicated region
        $region49: #{tpu_custom_call.1} parent=47 // pred_check
          %p383 = pneg %p48
        $region50: #{tpu_custom_call.1} parent=47 // pred_check_branch
          %385 = sbr.rel (%p383) target = $region52
        $region51: #{tpu_custom_call.1} parent=47 // pred_region
          %s386 = sand.u32 %s38, 1
          %s387 = scalar_lea.sflag [#allocation3], %s386
          %s388 = sand.u32 %s38, 1
          %s389 = smul.addr %s388, 64
          %s390 = scalar_lea.vmem [#allocation2], %s389
          %s392 = ssub.s32 1024, 1024
          %393 = vsyncadd %s387, %s392
          %s394 = smul.addr %s28, 16
          %s395 = smul.addr %s394, 64
          %s396 = scalar_lea.hbm %s0, %s395
          %s397 = sshll.u32 %s390, 4
          %s398 = int_to_ptr.vmem [resolvable:$true] %s397
          %403 = dma.hbm_to_vmem [thread:$0]  %s396, 1024, %s398, %s387, 64, 64, 4
        $region52: #{tpu_custom_call.1} parent=47 // pred_fallthru
          _
        // Predicated region
        $region53: #{tpu_custom_call.1} parent=47 // pred_check
          %p404 = pneg %p74
        $region54: #{tpu_custom_call.1} parent=47 // pred_check_branch
          %406 = sbr.rel (%p404) target = $region56
        $region55: #{tpu_custom_call.1} parent=47 // pred_region
          %p407 = scmp.lt.s32.totalorder %s28, 1
          %s408 = scalar_select %p407, %s28, 1
          %s409 = scalar_lea.vmem %s1, %s408
        $region56: #{tpu_custom_call.1} parent=47 // pred_fallthru
          _
        // Predicated region
        $region57: #{tpu_custom_call.1} parent=47 // pred_check
          %p410 = pneg %p100
        $region58: #{tpu_custom_call.1} parent=47 // pred_check_branch
          %412 = sbr.rel (%p410) target = $region60
        $region59: #{tpu_custom_call.1} parent=47 // pred_region
          %s413 = sand.u32 %s28, 1
          %s414 = scalar_lea.sflag [#allocation6], %s413
          %s415 = sand.u32 %s90, 1
          %s416 = smul.addr %s415, 128
          %s417 = scalar_lea.vmem [#allocation5], %s416
          %s419 = ssub.s32 2048, 2048
          %420 = vsyncadd %s414, %s419
          %s421 = smul.addr %s28, 16
          %s422 = smul.addr %s421, 128
          %s423 = scalar_lea.hbm %s2, %s422
          %s424 = sshll.u32 %s417, 4
          %s425 = int_to_ptr.vmem [resolvable:$true] %s424
          %430 = dma.hbm_to_vmem [thread:$0]  %s423, 2048, %s425, %s414, 128, 128, 8
        $region60: #{tpu_custom_call.1} parent=47 // pred_fallthru
          _
      $region48: #{tpu_custom_call.1} parent=5 // pred_fallthru
        _
      %p431 = scmp.le.s32.totalorder 1, %s28
      %p432 = scmp.lt.s32.totalorder %s28, 3
      %p433 = pnand %p431, %p432
      %p434 = pneg %p433
      // Predicated region
      $region61: #{tpu_custom_call.1} parent=5 // pred_check
        _
      $region62: #{tpu_custom_call.1} parent=5 // pred_check_branch
        %436 = sbr.rel (%p433) target = $region64
      $region63: #{tpu_custom_call.1} parent=5 // pred_region
        %s437 = ssub.s32 %s28, 1
        %s438 = sand.u32 %s41, 1
        %s439 = scalar_lea.sflag [#allocation3], %s438
        %s440 = sand.u32 %s41, 1
        %s441 = smul.addr %s440, 64
        %s442 = scalar_lea.vmem [#allocation2], %s441
        // Predicated region
        $region65: #{tpu_custom_call.1} parent=63 // pred_check
          %p443 = pneg %p54
        $region66: #{tpu_custom_call.1} parent=63 // pred_check_branch
          %445 = sbr.rel (%p443) target = $region68
        $region67: #{tpu_custom_call.1} parent=63 // pred_region
          %446 = dma.done %s439, 1024
        $region68: #{tpu_custom_call.1} parent=63 // pred_fallthru
          _
        %s447 = sand.u32 %s33, 1
        %s448 = scalar_lea.sflag [#allocation6], %s447
        %s449 = sand.u32 %s93, 1
        %s450 = smul.addr %s449, 128
        %s451 = scalar_lea.vmem [#allocation5], %s450
        // Predicated region
        $region69: #{tpu_custom_call.1} parent=63 // pred_check
          %p452 = pneg %p106
        $region70: #{tpu_custom_call.1} parent=63 // pred_check_branch
          %454 = sbr.rel (%p452) target = $region72
        $region71: #{tpu_custom_call.1} parent=63 // pred_region
          %455 = dma.done %s448, 2048
        $region72: #{tpu_custom_call.1} parent=63 // pred_fallthru
          _
        // Predicated region
        $region73: #{tpu_custom_call.1} parent=63 // pred_check
          %p456 = pneg %p127
        $region74: #{tpu_custom_call.1} parent=63 // pred_check_branch
          %458 = sbr.rel (%p456) target = $region76
        $region75: #{tpu_custom_call.1} parent=63 // pred_region
          %459 = dma.done [#allocation6], 3072
        $region76: #{tpu_custom_call.1} parent=63 // pred_fallthru
          _
        // Predicated region
        $region77: #{tpu_custom_call.1} parent=63 // pred_check
          %p460 = pneg %p169
        $region78: #{tpu_custom_call.1} parent=63 // pred_check_branch
          %462 = sbr.rel (%p460) target = $region80
        $region79: #{tpu_custom_call.1} parent=63 // pred_region
          %463 = dma.done [#allocation9], 3072
        $region80: #{tpu_custom_call.1} parent=63 // pred_fallthru
          _
        // Predicated region
        $region81: #{tpu_custom_call.1} parent=63 // pred_check
          %p464 = pneg %p211
        $region82: #{tpu_custom_call.1} parent=63 // pred_check_branch
          %466 = sbr.rel (%p464) target = $region84
        $region83: #{tpu_custom_call.1} parent=63 // pred_region
          %467 = dma.done [#allocation9], 3072
        $region84: #{tpu_custom_call.1} parent=63 // pred_fallthru
          _
        // Predicated region
        $region85: #{tpu_custom_call.1} parent=63 // pred_check
          %p468 = pneg %p253
        $region86: #{tpu_custom_call.1} parent=63 // pred_check_branch
          %470 = sbr.rel (%p468) target = $region88
        $region87: #{tpu_custom_call.1} parent=63 // pred_region
          %471 = dma.done [#allocation12], 1024
        $region88: #{tpu_custom_call.1} parent=63 // pred_fallthru
          _
        %s472 = sand.u32 %s41, 1
        %s473 = scalar_lea.sflag [#allocation3], %s472
        %s474 = sand.u32 %s41, 1
        %s475 = smul.addr %s474, 64
        %s476 = scalar_lea.vmem [#allocation2], %s475
        %p477 = pneg %p54
        %p478 = pneg %p51
        %p479 = scmp.lt.s32.totalorder %s33, 1
        %s480 = scalar_select %p479, %s33, 1
        %s481 = scalar_lea.vmem %s1, %s480
        %p482 = pneg %p80
        %p483 = pneg %p77
        %s484 = sand.u32 %s33, 1
        %s485 = scalar_lea.sflag [#allocation6], %s484
        %s486 = sand.u32 %s93, 1
        %s487 = smul.addr %s486, 128
        %s488 = scalar_lea.vmem [#allocation5], %s487
        %p489 = pneg %p106
        %p490 = pneg %p103
        %p491 = pneg %p127
        %p492 = pneg %p124
        %p493 = pneg %p148
        %p494 = pneg %p145
        %p495 = pneg %p169
        %p496 = pneg %p166
        %p497 = pneg %p190
        %p498 = pneg %p187
        %p499 = pneg %p211
        %p500 = pneg %p208
        %p501 = pneg %p232
        %p502 = pneg %p229
        %p503 = pneg %p253
        %p504 = pneg %p250
        %p505 = pneg %p274
        %p506 = pneg %p271
        %p507 = pneg %p300
        %p508 = pneg %p297
        %s509 = sand.u32 %s287, 1
        %s510 = scalar_lea.sflag [#allocation4], %s509
        %s511 = sand.u32 %s287, 1
        %s512 = scalar_lea.vmem [#allocation13], %s511
        %p513 = scmp.lt.s32.totalorder %s33, 1
        %s514 = scalar_select %p513, %s33, 1
        %s515 = scalar_lea.vmem %s1, %s514
        %v517 = vld [vmem:[%s442] sm:$0xf]
        %v518 = vld [vmem:[%s442 + $0x4] sm:$0xf]
        %v519 = vld [vmem:[%s442 + $0x8] sm:$0xf]
        %v520 = vld [vmem:[%s442 + $0xc] sm:$0xf]
        %v521 = vld [vmem:[%s442 + $0x10] sm:$0xf]
        %v522 = vld [vmem:[%s442 + $0x14] sm:$0xf]
        %v523 = vld [vmem:[%s442 + $0x18] sm:$0xf]
        %v524 = vld [vmem:[%s442 + $0x1c] sm:$0xf]
        %v525 = vld [vmem:[%s442 + $0x20] sm:$0xf]
        %v526 = vld [vmem:[%s442 + $0x24] sm:$0xf]
        %v527 = vld [vmem:[%s442 + $0x28] sm:$0xf]
        %v528 = vld [vmem:[%s442 + $0x2c] sm:$0xf]
        %v529 = vld [vmem:[%s442 + $0x30] sm:$0xf]
        %v530 = vld [vmem:[%s442 + $0x34] sm:$0xf]
        %v531 = vld [vmem:[%s442 + $0x38] sm:$0xf]
        %v532 = vld [vmem:[%s442 + $0x3c] sm:$0xf]
        %v533 = vld [vmem:[%s451] sm:$0xff]
        %v534 = vld [vmem:[%s451 + $0x8] sm:$0xff]
        %v535 = vld [vmem:[%s451 + $0x10] sm:$0xff]
        %v536 = vld [vmem:[%s451 + $0x18] sm:$0xff]
        %v537 = vld [vmem:[%s451 + $0x20] sm:$0xff]
        %v538 = vld [vmem:[%s451 + $0x28] sm:$0xff]
        %v539 = vld [vmem:[%s451 + $0x30] sm:$0xff]
        %v540 = vld [vmem:[%s451 + $0x38] sm:$0xff]
        %v541 = vld [vmem:[%s451 + $0x40] sm:$0xff]
        %v542 = vld [vmem:[%s451 + $0x48] sm:$0xff]
        %v543 = vld [vmem:[%s451 + $0x50] sm:$0xff]
        %v544 = vld [vmem:[%s451 + $0x58] sm:$0xff]
        %v545 = vld [vmem:[%s451 + $0x60] sm:$0xff]
        %v546 = vld [vmem:[%s451 + $0x68] sm:$0xff]
        %v547 = vld [vmem:[%s451 + $0x70] sm:$0xff]
        %v548 = vld [vmem:[%s451 + $0x78] sm:$0xff]
        %v549 = vpack.c.bf16 %v534, %v533
        %v550 = vpack.c.bf16 %v536, %v535
        %v551 = vpack.c.bf16 %v538, %v537
        %v552 = vpack.c.bf16 %v540, %v539
        %v553 = vpack.c.bf16 %v542, %v541
        %v554 = vpack.c.bf16 %v544, %v543
        %v555 = vpack.c.bf16 %v546, %v545
        %v556 = vpack.c.bf16 %v548, %v547
        %v557 = vld [vmem:[#allocation7] sm:$0xf]
        %v558 = vld [vmem:[#allocation7 + $0x4] sm:$0xf]
        %v559 = vld [vmem:[#allocation7 + $0x8] sm:$0xf]
        %v560 = vld [vmem:[#allocation7 + $0xc] sm:$0xf]
        %v561 = vld [vmem:[#allocation7 + $0x10] sm:$0xf]
        %v562 = vld [vmem:[#allocation7 + $0x14] sm:$0xf]
        %v563 = vld [vmem:[#allocation7 + $0x18] sm:$0xf]
        %v564 = vld [vmem:[#allocation7 + $0x1c] sm:$0xf]
        %v565 = vld [vmem:[#allocation7 + $0x20] sm:$0xf]
        %v566 = vld [vmem:[#allocation7 + $0x24] sm:$0xf]
        %v567 = vld [vmem:[#allocation7 + $0x28] sm:$0xf]
        %v568 = vld [vmem:[#allocation7 + $0x2c] sm:$0xf]
        %v569 = vld [vmem:[#allocation7 + $0x30] sm:$0xf]
        %v570 = vld [vmem:[#allocation7 + $0x34] sm:$0xf]
        %v571 = vld [vmem:[#allocation7 + $0x38] sm:$0xf]
        %v572 = vld [vmem:[#allocation7 + $0x3c] sm:$0xf]
        %v589 = vunpack.c.l.b16 %v517
        %v590 = vunpack.c.l.b16 %v518
        %v591 = vunpack.c.l.b16 %v519
        %v592 = vunpack.c.l.b16 %v520
        %v593 = vunpack.c.l.b16 %v521
        %v594 = vunpack.c.l.b16 %v522
        %v595 = vunpack.c.l.b16 %v523
        %v596 = vunpack.c.l.b16 %v524
        %v597 = vunpack.c.l.b16 %v525
        %v598 = vunpack.c.l.b16 %v526
        %v599 = vunpack.c.l.b16 %v527
        %v600 = vunpack.c.l.b16 %v528
        %v601 = vunpack.c.l.b16 %v529
        %v602 = vunpack.c.l.b16 %v530
        %v603 = vunpack.c.l.b16 %v531
        %v604 = vunpack.c.l.b16 %v532
        %v605 = vpack.c.b16 %v590, %v589
        %v606 = vpack.c.b16 %v592, %v591
        %v607 = vpack.c.b16 %v594, %v593
        %v608 = vpack.c.b16 %v596, %v595
        %v609 = vpack.c.b16 %v598, %v597
        %v610 = vpack.c.b16 %v600, %v599
        %v611 = vpack.c.b16 %v602, %v601
        %v612 = vpack.c.b16 %v604, %v603
        %621 = vmatprep.subr.bf16.mxu0 0
        %622 = vmatpush1.bf16.msra.mxu0 %v549
        %623 = vmatprep.subr.bf16.mxu0 0
        %624 = vmatpush1.bf16.msra.mxu0 %v550
        %625 = vmatprep.subr.bf16.mxu0 0
        %626 = vmatpush1.bf16.msra.mxu0 %v551
        %627 = vmatprep.subr.bf16.mxu0 0
        %628 = vmatpush1.bf16.msra.mxu0 %v552
        %629 = vmatprep.subr.bf16.mxu0 0
        %630 = vmatpush1.bf16.msra.mxu0 %v553
        %631 = vmatprep.subr.bf16.mxu0 0
        %632 = vmatpush1.bf16.msra.mxu0 %v554
        %633 = vmatprep.subr.bf16.mxu0 0
        %634 = vmatpush1.bf16.msra.mxu0 %v555
        %635 = vmatprep.subr.bf16.mxu0 0
        %636 = vmatpush1.bf16.msra.mxu0 %v556
        %637 = vmatprep.subr.bf16.mxu0 0
        %638 = vmatpush1.bf16.msra.mxu0 0
        %639 = vmatprep.subr.bf16.mxu0 0
        %640 = vmatpush1.bf16.msra.mxu0 0
        %641 = vmatprep.subr.bf16.mxu0 0
        %642 = vmatpush1.bf16.msra.mxu0 0
        %643 = vmatprep.subr.bf16.mxu0 0
        %644 = vmatpush1.bf16.msra.mxu0 0
        %645 = vmatprep.subr.bf16.mxu0 0
        %646 = vmatpush1.bf16.msra.mxu0 0
        %647 = vmatprep.subr.bf16.mxu0 0
        %648 = vmatpush1.bf16.msra.mxu0 0
        %649 = vmatprep.subr.bf16.mxu0 0
        %650 = vmatpush1.bf16.msra.mxu0 0
        %651 = vmatprep.subr.bf16.mxu0 0
        %652 = vmatpush1.bf16.msra.mxu0 0
        %653 = vmatprep.mubr.bf16.mxu0 0
        %654 = vmatmul.mubr.bf16.gmra.mrb[0].mxu0 %v605
        %v655 = vpop.f32.mrb[0].mxu0
        %v656 = vadd.f32 0.0, %v655
        %v657 = vpop.f32.mrb[0].mxu0
        %v658 = vpop.f32.mrb[0].mxu0
        %v659 = vadd.f32 0.0, %v658
        %v660 = vpop.f32.mrb[0].mxu0
        %661 = vmatprep.mubr.bf16.mxu0 0
        %662 = vmatmul.mubr.bf16.gmra.mrb[0].mxu0 %v606
        %v663 = vpop.f32.mrb[0].mxu0
        %v664 = vadd.f32 0.0, %v663
        %v665 = vpop.f32.mrb[0].mxu0
        %v666 = vpop.f32.mrb[0].mxu0
        %v667 = vadd.f32 0.0, %v666
        %v668 = vpop.f32.mrb[0].mxu0
        %669 = vmatprep.mubr.bf16.mxu0 0
        %670 = vmatmul.mubr.bf16.gmra.mrb[0].mxu0 %v607
        %v671 = vpop.f32.mrb[0].mxu0
        %v672 = vadd.f32 0.0, %v671
        %v673 = vpop.f32.mrb[0].mxu0
        %v674 = vpop.f32.mrb[0].mxu0
        %v675 = vadd.f32 0.0, %v674
        %v676 = vpop.f32.mrb[0].mxu0
        %677 = vmatprep.mubr.bf16.mxu0 0
        %678 = vmatmul.mubr.bf16.gmra.mrb[0].mxu0 %v608
        %v679 = vpop.f32.mrb[0].mxu0
        %v680 = vadd.f32 0.0, %v679
        %v681 = vpop.f32.mrb[0].mxu0
        %v682 = vpop.f32.mrb[0].mxu0
        %v683 = vadd.f32 0.0, %v682
        %v684 = vpop.f32.mrb[0].mxu0
        %685 = vmatprep.mubr.bf16.mxu0 0
        %686 = vmatmul.mubr.bf16.gmra.mrb[0].mxu0 %v609
        %v687 = vpop.f32.mrb[0].mxu0
        %v688 = vadd.f32 0.0, %v687
        %v689 = vpop.f32.mrb[0].mxu0
        %v690 = vpop.f32.mrb[0].mxu0
        %v691 = vadd.f32 0.0, %v690
        %v692 = vpop.f32.mrb[0].mxu0
        %693 = vmatprep.mubr.bf16.mxu0 0
        %694 = vmatmul.mubr.bf16.gmra.mrb[0].mxu0 %v610
        %v695 = vpop.f32.mrb[0].mxu0
        %v696 = vadd.f32 0.0, %v695
        %v697 = vpop.f32.mrb[0].mxu0
        %v698 = vpop.f32.mrb[0].mxu0
        %v699 = vadd.f32 0.0, %v698
        %v700 = vpop.f32.mrb[0].mxu0
        %701 = vmatprep.mubr.bf16.mxu0 0
        %702 = vmatmul.mubr.bf16.gmra.mrb[0].mxu0 %v611
        %v703 = vpop.f32.mrb[0].mxu0
        %v704 = vadd.f32 0.0, %v703
        %v705 = vpop.f32.mrb[0].mxu0
        %v706 = vpop.f32.mrb[0].mxu0
        %v707 = vadd.f32 0.0, %v706
        %v708 = vpop.f32.mrb[0].mxu0
        %709 = vmatprep.mubr.bf16.mxu0 0
        %710 = vmatmul.mubr.bf16.gmra.mrb[0].mxu0 %v612
        %v711 = vpop.f32.mrb[0].mxu0
        %v712 = vadd.f32 0.0, %v711
        %v713 = vpop.f32.mrb[0].mxu0
        %v714 = vpop.f32.mrb[0].mxu0
        %v715 = vadd.f32 0.0, %v714
        %v716 = vpop.f32.mrb[0].mxu0
        %717 = vdwg.mxu0
        %v718 = vpack.c.bf16 %v659, %v656
        %v719 = vpack.c.bf16 %v667, %v664
        %v720 = vpack.c.bf16 %v675, %v672
        %v721 = vpack.c.bf16 %v683, %v680
        %v722 = vpack.c.bf16 %v691, %v688
        %v723 = vpack.c.bf16 %v699, %v696
        %v724 = vpack.c.bf16 %v707, %v704
        %v725 = vpack.c.bf16 %v715, %v712
        %s726 = scalar_lea.vmem [#allocation7], 64
        %v727 = vld [vmem:[%s726] sm:$0xf]
        %v728 = vld [vmem:[%s726 + $0x4] sm:$0xf]
        %v729 = vld [vmem:[%s726 + $0x8] sm:$0xf]
        %v730 = vld [vmem:[%s726 + $0xc] sm:$0xf]
        %v731 = vld [vmem:[%s726 + $0x10] sm:$0xf]
        %v732 = vld [vmem:[%s726 + $0x14] sm:$0xf]
        %v733 = vld [vmem:[%s726 + $0x18] sm:$0xf]
        %v734 = vld [vmem:[%s726 + $0x1c] sm:$0xf]
        %v735 = vld [vmem:[%s726 + $0x20] sm:$0xf]
        %v736 = vld [vmem:[%s726 + $0x24] sm:$0xf]
        %v737 = vld [vmem:[%s726 + $0x28] sm:$0xf]
        %v738 = vld [vmem:[%s726 + $0x2c] sm:$0xf]
        %v739 = vld [vmem:[%s726 + $0x30] sm:$0xf]
        %v740 = vld [vmem:[%s726 + $0x34] sm:$0xf]
        %v741 = vld [vmem:[%s726 + $0x38] sm:$0xf]
        %v742 = vld [vmem:[%s726 + $0x3c] sm:$0xf]
        %v759 = vunpack.c.l.b16 %v727
        %v760 = vunpack.c.l.b16 %v728
        %v761 = vunpack.c.l.b16 %v729
        %v762 = vunpack.c.l.b16 %v730
        %v763 = vunpack.c.l.b16 %v731
        %v764 = vunpack.c.l.b16 %v732
        %v765 = vunpack.c.l.b16 %v733
        %v766 = vunpack.c.l.b16 %v734
        %v767 = vunpack.c.l.b16 %v735
        %v768 = vunpack.c.l.b16 %v736
        %v769 = vunpack.c.l.b16 %v737
        %v770 = vunpack.c.l.b16 %v738
        %v771 = vunpack.c.l.b16 %v739
        %v772 = vunpack.c.l.b16 %v740
        %v773 = vunpack.c.l.b16 %v741
        %v774 = vunpack.c.l.b16 %v742
        %v775 = vpack.c.b16 %v760, %v759
        %v776 = vpack.c.b16 %v762, %v761
        %v777 = vpack.c.b16 %v764, %v763
        %v778 = vpack.c.b16 %v766, %v765
        %v779 = vpack.c.b16 %v768, %v767
        %v780 = vpack.c.b16 %v770, %v769
        %v781 = vpack.c.b16 %v772, %v771
        %v782 = vpack.c.b16 %v774, %v773
        %791 = vmatprep.subr.bf16.mxu0 0
        %792 = vmatpush1.bf16.msra.mxu0 %v775
        %793 = vmatprep.subr.bf16.mxu0 0
        %794 = vmatpush1.bf16.msra.mxu0 %v776
        %795 = vmatprep.subr.bf16.mxu0 0
        %796 = vmatpush1.bf16.msra.mxu0 %v777
        %797 = vmatprep.subr.bf16.mxu0 0
        %798 = vmatpush1.bf16.msra.mxu0 %v778
        %799 = vmatprep.subr.bf16.mxu0 0
        %800 = vmatpush1.bf16.msra.mxu0 %v779
        %801 = vmatprep.subr.bf16.mxu0 0
        %802 = vmatpush1.bf16.msra.mxu0 %v780
        %803 = vmatprep.subr.bf16.mxu0 0
        %804 = vmatpush1.bf16.msra.mxu0 %v781
        %805 = vmatprep.subr.bf16.mxu0 0
        %806 = vmatpush1.bf16.msra.mxu0 %v782
        %807 = vmatprep.subr.bf16.mxu0 0
        %808 = vmatpush1.bf16.msra.mxu0 0
        %809 = vmatprep.subr.bf16.mxu0 0
        %810 = vmatpush1.bf16.msra.mxu0 0
        %811 = vmatprep.subr.bf16.mxu0 0
        %812 = vmatpush1.bf16.msra.mxu0 0
        %813 = vmatprep.subr.bf16.mxu0 0
        %814 = vmatpush1.bf16.msra.mxu0 0
        %815 = vmatprep.subr.bf16.mxu0 0
        %816 = vmatpush1.bf16.msra.mxu0 0
        %817 = vmatprep.subr.bf16.mxu0 0
        %818 = vmatpush1.bf16.msra.mxu0 0
        %819 = vmatprep.subr.bf16.mxu0 0
        %820 = vmatpush1.bf16.msra.mxu0 0
        %821 = vmatprep.subr.bf16.mxu0 0
        %822 = vmatpush1.bf16.msra.mxu0 0
        %823 = vmatprep.mubr.bf16.mxu0 0
        %824 = vmatmul.mubr.bf16.gmra.mrb[0].mxu0 %v718
        %v825 = vpop.f32.mrb[0].mxu0
        %v826 = vadd.f32 0.0, %v825
        %v827 = vpop.f32.mrb[0].mxu0
        %v828 = vpop.f32.mrb[0].mxu0
        %v829 = vadd.f32 0.0, %v828
        %v830 = vpop.f32.mrb[0].mxu0
        %831 = vmatprep.mubr.bf16.mxu0 0
        %832 = vmatmul.mubr.bf16.gmra.mrb[0].mxu0 %v719
        %v833 = vpop.f32.mrb[0].mxu0
        %v834 = vadd.f32 0.0, %v833
        %v835 = vpop.f32.mrb[0].mxu0
        %v836 = vpop.f32.mrb[0].mxu0
        %v837 = vadd.f32 0.0, %v836
        %v838 = vpop.f32.mrb[0].mxu0
        %839 = vmatprep.mubr.bf16.mxu0 0
        %840 = vmatmul.mubr.bf16.gmra.mrb[0].mxu0 %v720
        %v841 = vpop.f32.mrb[0].mxu0
        %v842 = vadd.f32 0.0, %v841
        %v843 = vpop.f32.mrb[0].mxu0
        %v844 = vpop.f32.mrb[0].mxu0
        %v845 = vadd.f32 0.0, %v844
        %v846 = vpop.f32.mrb[0].mxu0
        %847 = vmatprep.mubr.bf16.mxu0 0
        %848 = vmatmul.mubr.bf16.gmra.mrb[0].mxu0 %v721
        %v849 = vpop.f32.mrb[0].mxu0
        %v850 = vadd.f32 0.0, %v849
        %v851 = vpop.f32.mrb[0].mxu0
        %v852 = vpop.f32.mrb[0].mxu0
        %v853 = vadd.f32 0.0, %v852
        %v854 = vpop.f32.mrb[0].mxu0
        %855 = vmatprep.mubr.bf16.mxu0 0
        %856 = vmatmul.mubr.bf16.gmra.mrb[0].mxu0 %v722
        %v857 = vpop.f32.mrb[0].mxu0
        %v858 = vadd.f32 0.0, %v857
        %v859 = vpop.f32.mrb[0].mxu0
        %v860 = vpop.f32.mrb[0].mxu0
        %v861 = vadd.f32 0.0, %v860
        %v862 = vpop.f32.mrb[0].mxu0
        %863 = vmatprep.mubr.bf16.mxu0 0
        %864 = vmatmul.mubr.bf16.gmra.mrb[0].mxu0 %v723
        %v865 = vpop.f32.mrb[0].mxu0
        %v866 = vadd.f32 0.0, %v865
        %v867 = vpop.f32.mrb[0].mxu0
        %v868 = vpop.f32.mrb[0].mxu0
        %v869 = vadd.f32 0.0, %v868
        %v870 = vpop.f32.mrb[0].mxu0
        %871 = vmatprep.mubr.bf16.mxu0 0
        %872 = vmatmul.mubr.bf16.gmra.mrb[0].mxu0 %v724
        %v873 = vpop.f32.mrb[0].mxu0
        %v874 = vadd.f32 0.0, %v873
        %v875 = vpop.f32.mrb[0].mxu0
        %v876 = vpop.f32.mrb[0].mxu0
        %v877 = vadd.f32 0.0, %v876
        %v878 = vpop.f32.mrb[0].mxu0
        %879 = vmatprep.mubr.bf16.mxu0 0
        %880 = vmatmul.mubr.bf16.gmra.mrb[0].mxu0 %v725
        %v881 = vpop.f32.mrb[0].mxu0
        %v882 = vadd.f32 0.0, %v881
        %v883 = vpop.f32.mrb[0].mxu0
        %v884 = vpop.f32.mrb[0].mxu0
        %v885 = vadd.f32 0.0, %v884
        %v886 = vpop.f32.mrb[0].mxu0
        %887 = vdwg.mxu0
        %v904 = vunpack.c.l.b16 %v557
        %v905 = vunpack.c.l.b16 %v558
        %v906 = vunpack.c.l.b16 %v559
        %v907 = vunpack.c.l.b16 %v560
        %v908 = vunpack.c.l.b16 %v561
        %v909 = vunpack.c.l.b16 %v562
        %v910 = vunpack.c.l.b16 %v563
        %v911 = vunpack.c.l.b16 %v564
        %v912 = vunpack.c.l.b16 %v565
        %v913 = vunpack.c.l.b16 %v566
        %v914 = vunpack.c.l.b16 %v567
        %v915 = vunpack.c.l.b16 %v568
        %v916 = vunpack.c.l.b16 %v569
        %v917 = vunpack.c.l.b16 %v570
        %v918 = vunpack.c.l.b16 %v571
        %v919 = vunpack.c.l.b16 %v572
        %v920 = vpack.c.b16 %v905, %v904
        %v921 = vpack.c.b16 %v907, %v906
        %v922 = vpack.c.b16 %v909, %v908
        %v923 = vpack.c.b16 %v911, %v910
        %v924 = vpack.c.b16 %v913, %v912
        %v925 = vpack.c.b16 %v915, %v914
        %v926 = vpack.c.b16 %v917, %v916
        %v927 = vpack.c.b16 %v919, %v918
        %936 = vmatprep.subr.bf16.mxu0 0
        %937 = vmatpush1.bf16.msra.mxu0 %v920
        %938 = vmatprep.subr.bf16.mxu0 0
        %939 = vmatpush1.bf16.msra.mxu0 %v921
        %940 = vmatprep.subr.bf16.mxu0 0
        %941 = vmatpush1.bf16.msra.mxu0 %v922
        %942 = vmatprep.subr.bf16.mxu0 0
        %943 = vmatpush1.bf16.msra.mxu0 %v923
        %944 = vmatprep.subr.bf16.mxu0 0
        %945 = vmatpush1.bf16.msra.mxu0 %v924
        %946 = vmatprep.subr.bf16.mxu0 0
        %947 = vmatpush1.bf16.msra.mxu0 %v925
        %948 = vmatprep.subr.bf16.mxu0 0
        %949 = vmatpush1.bf16.msra.mxu0 %v926
        %950 = vmatprep.subr.bf16.mxu0 0
        %951 = vmatpush1.bf16.msra.mxu0 %v927
        %952 = vmatprep.subr.bf16.mxu0 0
        %953 = vmatpush1.bf16.msra.mxu0 0
        %954 = vmatprep.subr.bf16.mxu0 0
        %955 = vmatpush1.bf16.msra.mxu0 0
        %956 = vmatprep.subr.bf16.mxu0 0
        %957 = vmatpush1.bf16.msra.mxu0 0
        %958 = vmatprep.subr.bf16.mxu0 0
        %959 = vmatpush1.bf16.msra.mxu0 0
        %960 = vmatprep.subr.bf16.mxu0 0
        %961 = vmatpush1.bf16.msra.mxu0 0
        %962 = vmatprep.subr.bf16.mxu0 0
        %963 = vmatpush1.bf16.msra.mxu0 0
        %964 = vmatprep.subr.bf16.mxu0 0
        %965 = vmatpush1.bf16.msra.mxu0 0
        %966 = vmatprep.subr.bf16.mxu0 0
        %967 = vmatpush1.bf16.msra.mxu0 0
        %968 = vmatprep.mubr.bf16.mxu0 0
        %969 = vmatmul.mubr.bf16.gmra.mrb[0].mxu0 %v549
        %v970 = vpop.f32.mrb[0].mxu0
        %v971 = vadd.f32 %v826, %v970
        %v972 = vpop.f32.mrb[0].mxu0
        %v973 = vpop.f32.mrb[0].mxu0
        %v974 = vadd.f32 %v829, %v973
        %v975 = vpop.f32.mrb[0].mxu0
        %976 = vmatprep.mubr.bf16.mxu0 0
        %977 = vmatmul.mubr.bf16.gmra.mrb[0].mxu0 %v550
        %v978 = vpop.f32.mrb[0].mxu0
        %v979 = vadd.f32 %v834, %v978
        %v980 = vpop.f32.mrb[0].mxu0
        %v981 = vpop.f32.mrb[0].mxu0
        %v982 = vadd.f32 %v837, %v981
        %v983 = vpop.f32.mrb[0].mxu0
        %984 = vmatprep.mubr.bf16.mxu0 0
        %985 = vmatmul.mubr.bf16.gmra.mrb[0].mxu0 %v551
        %v986 = vpop.f32.mrb[0].mxu0
        %v987 = vadd.f32 %v842, %v986
        %v988 = vpop.f32.mrb[0].mxu0
        %v989 = vpop.f32.mrb[0].mxu0
        %v990 = vadd.f32 %v845, %v989
        %v991 = vpop.f32.mrb[0].mxu0
        %992 = vmatprep.mubr.bf16.mxu0 0
        %993 = vmatmul.mubr.bf16.gmra.mrb[0].mxu0 %v552
        %v994 = vpop.f32.mrb[0].mxu0
        %v995 = vadd.f32 %v850, %v994
        %v996 = vpop.f32.mrb[0].mxu0
        %v997 = vpop.f32.mrb[0].mxu0
        %v998 = vadd.f32 %v853, %v997
        %v999 = vpop.f32.mrb[0].mxu0
        %1000 = vmatprep.mubr.bf16.mxu0 0
        %1001 = vmatmul.mubr.bf16.gmra.mrb[0].mxu0 %v553
        %v1002 = vpop.f32.mrb[0].mxu0
        %v1003 = vadd.f32 %v858, %v1002
        %v1004 = vpop.f32.mrb[0].mxu0
        %v1005 = vpop.f32.mrb[0].mxu0
        %v1006 = vadd.f32 %v861, %v1005
        %v1007 = vpop.f32.mrb[0].mxu0
        %1008 = vmatprep.mubr.bf16.mxu0 0
        %1009 = vmatmul.mubr.bf16.gmra.mrb[0].mxu0 %v554
        %v1010 = vpop.f32.mrb[0].mxu0
        %v1011 = vadd.f32 %v866, %v1010
        %v1012 = vpop.f32.mrb[0].mxu0
        %v1013 = vpop.f32.mrb[0].mxu0
        %v1014 = vadd.f32 %v869, %v1013
        %v1015 = vpop.f32.mrb[0].mxu0
        %1016 = vmatprep.mubr.bf16.mxu0 0
        %1017 = vmatmul.mubr.bf16.gmra.mrb[0].mxu0 %v555
        %v1018 = vpop.f32.mrb[0].mxu0
        %v1019 = vadd.f32 %v874, %v1018
        %v1020 = vpop.f32.mrb[0].mxu0
        %v1021 = vpop.f32.mrb[0].mxu0
        %v1022 = vadd.f32 %v877, %v1021
        %v1023 = vpop.f32.mrb[0].mxu0
        %1024 = vmatprep.mubr.bf16.mxu0 0
        %1025 = vmatmul.mubr.bf16.gmra.mrb[0].mxu0 %v556
        %v1026 = vpop.f32.mrb[0].mxu0
        %v1027 = vadd.f32 %v882, %v1026
        %v1028 = vpop.f32.mrb[0].mxu0
        %v1029 = vpop.f32.mrb[0].mxu0
        %v1030 = vadd.f32 %v885, %v1029
        %v1031 = vpop.f32.mrb[0].mxu0
        %1032 = vdwg.mxu0
        %1033 = vmatprep.subr.bf16.mxu0 0
        %1034 = vmatpush1.bf16.msra.mxu0 %v718
        %1035 = vmatprep.subr.bf16.mxu0 0
        %1036 = vmatpush1.bf16.msra.mxu0 %v719
        %1037 = vmatprep.subr.bf16.mxu0 0
        %1038 = vmatpush1.bf16.msra.mxu0 %v720
        %1039 = vmatprep.subr.bf16.mxu0 0
        %1040 = vmatpush1.bf16.msra.mxu0 %v721
        %1041 = vmatprep.subr.bf16.mxu0 0
        %1042 = vmatpush1.bf16.msra.mxu0 %v722
        %1043 = vmatprep.subr.bf16.mxu0 0
        %1044 = vmatpush1.bf16.msra.mxu0 %v723
        %1045 = vmatprep.subr.bf16.mxu0 0
        %1046 = vmatpush1.bf16.msra.mxu0 %v724
        %1047 = vmatprep.subr.bf16.mxu0 0
        %1048 = vmatpush1.bf16.msra.mxu0 %v725
        %1049 = vmatprep.subr.bf16.mxu0 0
        %1050 = vmatpush1.bf16.msra.mxu0 0
        %1051 = vmatprep.subr.bf16.mxu0 0
        %1052 = vmatpush1.bf16.msra.mxu0 0
        %1053 = vmatprep.subr.bf16.mxu0 0
        %1054 = vmatpush1.bf16.msra.mxu0 0
        %1055 = vmatprep.subr.bf16.mxu0 0
        %1056 = vmatpush1.bf16.msra.mxu0 0
        %1057 = vmatprep.subr.bf16.mxu0 0
        %1058 = vmatpush1.bf16.msra.mxu0 0
        %1059 = vmatprep.subr.bf16.mxu0 0
        %1060 = vmatpush1.bf16.msra.mxu0 0
        %1061 = vmatprep.subr.bf16.mxu0 0
        %1062 = vmatpush1.bf16.msra.mxu0 0
        %1063 = vmatprep.subr.bf16.mxu0 0
        %1064 = vmatpush1.bf16.msra.mxu0 0
        %1065 = vmatprep.mubr.bf16.mxu0 0
        %1066 = vmatmul.mubr.bf16.gmra.mrb[0].mxu0 %v605
        %v1067 = vpop.f32.mrb[0].mxu0
        %v1068 = vadd.f32 0.0, %v1067
        %v1069 = vpop.f32.mrb[0].mxu0
        %v1070 = vpop.f32.mrb[0].mxu0
        %v1071 = vadd.f32 0.0, %v1070
        %v1072 = vpop.f32.mrb[0].mxu0
        %1073 = vmatprep.mubr.bf16.mxu0 0
        %1074 = vmatmul.mubr.bf16.gmra.mrb[0].mxu0 %v606
        %v1075 = vpop.f32.mrb[0].mxu0
        %v1076 = vadd.f32 0.0, %v1075
        %v1077 = vpop.f32.mrb[0].mxu0
        %v1078 = vpop.f32.mrb[0].mxu0
        %v1079 = vadd.f32 0.0, %v1078
        %v1080 = vpop.f32.mrb[0].mxu0
        %1081 = vmatprep.mubr.bf16.mxu0 0
        %1082 = vmatmul.mubr.bf16.gmra.mrb[0].mxu0 %v607
        %v1083 = vpop.f32.mrb[0].mxu0
        %v1084 = vadd.f32 0.0, %v1083
        %v1085 = vpop.f32.mrb[0].mxu0
        %v1086 = vpop.f32.mrb[0].mxu0
        %v1087 = vadd.f32 0.0, %v1086
        %v1088 = vpop.f32.mrb[0].mxu0
        %1089 = vmatprep.mubr.bf16.mxu0 0
        %1090 = vmatmul.mubr.bf16.gmra.mrb[0].mxu0 %v608
        %v1091 = vpop.f32.mrb[0].mxu0
        %v1092 = vadd.f32 0.0, %v1091
        %v1093 = vpop.f32.mrb[0].mxu0
        %v1094 = vpop.f32.mrb[0].mxu0
        %v1095 = vadd.f32 0.0, %v1094
        %v1096 = vpop.f32.mrb[0].mxu0
        %1097 = vmatprep.mubr.bf16.mxu0 0
        %1098 = vmatmul.mubr.bf16.gmra.mrb[0].mxu0 %v609
        %v1099 = vpop.f32.mrb[0].mxu0
        %v1100 = vadd.f32 0.0, %v1099
        %v1101 = vpop.f32.mrb[0].mxu0
        %v1102 = vpop.f32.mrb[0].mxu0
        %v1103 = vadd.f32 0.0, %v1102
        %v1104 = vpop.f32.mrb[0].mxu0
        %1105 = vmatprep.mubr.bf16.mxu0 0
        %1106 = vmatmul.mubr.bf16.gmra.mrb[0].mxu0 %v610
        %v1107 = vpop.f32.mrb[0].mxu0
        %v1108 = vadd.f32 0.0, %v1107
        %v1109 = vpop.f32.mrb[0].mxu0
        %v1110 = vpop.f32.mrb[0].mxu0
        %v1111 = vadd.f32 0.0, %v1110
        %v1112 = vpop.f32.mrb[0].mxu0
        %1113 = vmatprep.mubr.bf16.mxu0 0
        %1114 = vmatmul.mubr.bf16.gmra.mrb[0].mxu0 %v611
        %v1115 = vpop.f32.mrb[0].mxu0
        %v1116 = vadd.f32 0.0, %v1115
        %v1117 = vpop.f32.mrb[0].mxu0
        %v1118 = vpop.f32.mrb[0].mxu0
        %v1119 = vadd.f32 0.0, %v1118
        %v1120 = vpop.f32.mrb[0].mxu0
        %1121 = vmatprep.mubr.bf16.mxu0 0
        %1122 = vmatmul.mubr.bf16.gmra.mrb[0].mxu0 %v612
        %v1123 = vpop.f32.mrb[0].mxu0
        %v1124 = vadd.f32 0.0, %v1123
        %v1125 = vpop.f32.mrb[0].mxu0
        %v1126 = vpop.f32.mrb[0].mxu0
        %v1127 = vadd.f32 0.0, %v1126
        %v1128 = vpop.f32.mrb[0].mxu0
        %1129 = vdwg.mxu0
        %v1130 = vmul.f32 %v1068, 2.0
        %v1131 = vmul.f32 %v1071, 2.0
        %v1132 = vmul.f32 %v1076, 2.0
        %v1133 = vmul.f32 %v1079, 2.0
        %v1134 = vmul.f32 %v1084, 2.0
        %v1135 = vmul.f32 %v1087, 2.0
        %v1136 = vmul.f32 %v1092, 2.0
        %v1137 = vmul.f32 %v1095, 2.0
        %v1138 = vmul.f32 %v1100, 2.0
        %v1139 = vmul.f32 %v1103, 2.0
        %v1140 = vmul.f32 %v1108, 2.0
        %v1141 = vmul.f32 %v1111, 2.0
        %v1142 = vmul.f32 %v1116, 2.0
        %v1143 = vmul.f32 %v1119, 2.0
        %v1144 = vmul.f32 %v1124, 2.0
        %v1145 = vmul.f32 %v1127, 2.0
        %v1146 = vsub.f32 %v1130, %v533
        %v1147 = vsub.f32 %v1131, %v534
        %v1148 = vsub.f32 %v1132, %v535
        %v1149 = vsub.f32 %v1133, %v536
        %v1150 = vsub.f32 %v1134, %v537
        %v1151 = vsub.f32 %v1135, %v538
        %v1152 = vsub.f32 %v1136, %v539
        %v1153 = vsub.f32 %v1137, %v540
        %v1154 = vsub.f32 %v1138, %v541
        %v1155 = vsub.f32 %v1139, %v542
        %v1156 = vsub.f32 %v1140, %v543
        %v1157 = vsub.f32 %v1141, %v544
        %v1158 = vsub.f32 %v1142, %v545
        %v1159 = vsub.f32 %v1143, %v546
        %v1160 = vsub.f32 %v1144, %v547
        %v1161 = vsub.f32 %v1145, %v548
        %v1162 = vpack.c.bf16 %v1147, %v1146
        %v1163 = vpack.c.bf16 %v1149, %v1148
        %v1164 = vpack.c.bf16 %v1151, %v1150
        %v1165 = vpack.c.bf16 %v1153, %v1152
        %v1166 = vpack.c.bf16 %v1155, %v1154
        %v1167 = vpack.c.bf16 %v1157, %v1156
        %v1168 = vpack.c.bf16 %v1159, %v1158
        %v1169 = vpack.c.bf16 %v1161, %v1160
        %s1170 = scalar_lea.vmem [#allocation7], 128
        %v1171 = vld [vmem:[%s1170] sm:$0xf]
        %v1172 = vld [vmem:[%s1170 + $0x4] sm:$0xf]
        %v1173 = vld [vmem:[%s1170 + $0x8] sm:$0xf]
        %v1174 = vld [vmem:[%s1170 + $0xc] sm:$0xf]
        %v1175 = vld [vmem:[%s1170 + $0x10] sm:$0xf]
        %v1176 = vld [vmem:[%s1170 + $0x14] sm:$0xf]
        %v1177 = vld [vmem:[%s1170 + $0x18] sm:$0xf]
        %v1178 = vld [vmem:[%s1170 + $0x1c] sm:$0xf]
        %v1179 = vld [vmem:[%s1170 + $0x20] sm:$0xf]
        %v1180 = vld [vmem:[%s1170 + $0x24] sm:$0xf]
        %v1181 = vld [vmem:[%s1170 + $0x28] sm:$0xf]
        %v1182 = vld [vmem:[%s1170 + $0x2c] sm:$0xf]
        %v1183 = vld [vmem:[%s1170 + $0x30] sm:$0xf]
        %v1184 = vld [vmem:[%s1170 + $0x34] sm:$0xf]
        %v1185 = vld [vmem:[%s1170 + $0x38] sm:$0xf]
        %v1186 = vld [vmem:[%s1170 + $0x3c] sm:$0xf]
        %v1203 = vunpack.c.l.b16 %v1171
        %v1204 = vunpack.c.l.b16 %v1172
        %v1205 = vunpack.c.l.b16 %v1173
        %v1206 = vunpack.c.l.b16 %v1174
        %v1207 = vunpack.c.l.b16 %v1175
        %v1208 = vunpack.c.l.b16 %v1176
        %v1209 = vunpack.c.l.b16 %v1177
        %v1210 = vunpack.c.l.b16 %v1178
        %v1211 = vunpack.c.l.b16 %v1179
        %v1212 = vunpack.c.l.b16 %v1180
        %v1213 = vunpack.c.l.b16 %v1181
        %v1214 = vunpack.c.l.b16 %v1182
        %v1215 = vunpack.c.l.b16 %v1183
        %v1216 = vunpack.c.l.b16 %v1184
        %v1217 = vunpack.c.l.b16 %v1185
        %v1218 = vunpack.c.l.b16 %v1186
        %v1219 = vpack.c.b16 %v1204, %v1203
        %v1220 = vpack.c.b16 %v1206, %v1205
        %v1221 = vpack.c.b16 %v1208, %v1207
        %v1222 = vpack.c.b16 %v1210, %v1209
        %v1223 = vpack.c.b16 %v1212, %v1211
        %v1224 = vpack.c.b16 %v1214, %v1213
        %v1225 = vpack.c.b16 %v1216, %v1215
        %v1226 = vpack.c.b16 %v1218, %v1217
        %1235 = vmatprep.subr.bf16.mxu0 0
        %1236 = vmatpush1.bf16.msra.mxu0 %v1219
        %1237 = vmatprep.subr.bf16.mxu0 0
        %1238 = vmatpush1.bf16.msra.mxu0 %v1220
        %1239 = vmatprep.subr.bf16.mxu0 0
        %1240 = vmatpush1.bf16.msra.mxu0 %v1221
        %1241 = vmatprep.subr.bf16.mxu0 0
        %1242 = vmatpush1.bf16.msra.mxu0 %v1222
        %1243 = vmatprep.subr.bf16.mxu0 0
        %1244 = vmatpush1.bf16.msra.mxu0 %v1223
        %1245 = vmatprep.subr.bf16.mxu0 0
        %1246 = vmatpush1.bf16.msra.mxu0 %v1224
        %1247 = vmatprep.subr.bf16.mxu0 0
        %1248 = vmatpush1.bf16.msra.mxu0 %v1225
        %1249 = vmatprep.subr.bf16.mxu0 0
        %1250 = vmatpush1.bf16.msra.mxu0 %v1226
        %1251 = vmatprep.subr.bf16.mxu0 0
        %1252 = vmatpush1.bf16.msra.mxu0 0
        %1253 = vmatprep.subr.bf16.mxu0 0
        %1254 = vmatpush1.bf16.msra.mxu0 0
        %1255 = vmatprep.subr.bf16.mxu0 0
        %1256 = vmatpush1.bf16.msra.mxu0 0
        %1257 = vmatprep.subr.bf16.mxu0 0
        %1258 = vmatpush1.bf16.msra.mxu0 0
        %1259 = vmatprep.subr.bf16.mxu0 0
        %1260 = vmatpush1.bf16.msra.mxu0 0
        %1261 = vmatprep.subr.bf16.mxu0 0
        %1262 = vmatpush1.bf16.msra.mxu0 0
        %1263 = vmatprep.subr.bf16.mxu0 0
        %1264 = vmatpush1.bf16.msra.mxu0 0
        %1265 = vmatprep.subr.bf16.mxu0 0
        %1266 = vmatpush1.bf16.msra.mxu0 0
        %1267 = vmatprep.mubr.bf16.mxu0 0
        %1268 = vmatmul.mubr.bf16.gmra.mrb[0].mxu0 %v1162
        %v1269 = vpop.f32.mrb[0].mxu0
        %v1270 = vadd.f32 0.0, %v1269
        %v1271 = vpop.f32.mrb[0].mxu0
        %v1272 = vpop.f32.mrb[0].mxu0
        %v1273 = vadd.f32 0.0, %v1272
        %v1274 = vpop.f32.mrb[0].mxu0
        %1275 = vmatprep.mubr.bf16.mxu0 0
        %1276 = vmatmul.mubr.bf16.gmra.mrb[0].mxu0 %v1163
        %v1277 = vpop.f32.mrb[0].mxu0
        %v1278 = vadd.f32 0.0, %v1277
        %v1279 = vpop.f32.mrb[0].mxu0
        %v1280 = vpop.f32.mrb[0].mxu0
        %v1281 = vadd.f32 0.0, %v1280
        %v1282 = vpop.f32.mrb[0].mxu0
        %1283 = vmatprep.mubr.bf16.mxu0 0
        %1284 = vmatmul.mubr.bf16.gmra.mrb[0].mxu0 %v1164
        %v1285 = vpop.f32.mrb[0].mxu0
        %v1286 = vadd.f32 0.0, %v1285
        %v1287 = vpop.f32.mrb[0].mxu0
        %v1288 = vpop.f32.mrb[0].mxu0
        %v1289 = vadd.f32 0.0, %v1288
        %v1290 = vpop.f32.mrb[0].mxu0
        %1291 = vmatprep.mubr.bf16.mxu0 0
        %1292 = vmatmul.mubr.bf16.gmra.mrb[0].mxu0 %v1165
        %v1293 = vpop.f32.mrb[0].mxu0
        %v1294 = vadd.f32 0.0, %v1293
        %v1295 = vpop.f32.mrb[0].mxu0
        %v1296 = vpop.f32.mrb[0].mxu0
        %v1297 = vadd.f32 0.0, %v1296
        %v1298 = vpop.f32.mrb[0].mxu0
        %1299 = vmatprep.mubr.bf16.mxu0 0
        %1300 = vmatmul.mubr.bf16.gmra.mrb[0].mxu0 %v1166
        %v1301 = vpop.f32.mrb[0].mxu0
        %v1302 = vadd.f32 0.0, %v1301
        %v1303 = vpop.f32.mrb[0].mxu0
        %v1304 = vpop.f32.mrb[0].mxu0
        %v1305 = vadd.f32 0.0, %v1304
        %v1306 = vpop.f32.mrb[0].mxu0
        %1307 = vmatprep.mubr.bf16.mxu0 0
        %1308 = vmatmul.mubr.bf16.gmra.mrb[0].mxu0 %v1167
        %v1309 = vpop.f32.mrb[0].mxu0
        %v1310 = vadd.f32 0.0, %v1309
        %v1311 = vpop.f32.mrb[0].mxu0
        %v1312 = vpop.f32.mrb[0].mxu0
        %v1313 = vadd.f32 0.0, %v1312
        %v1314 = vpop.f32.mrb[0].mxu0
        %1315 = vmatprep.mubr.bf16.mxu0 0
        %1316 = vmatmul.mubr.bf16.gmra.mrb[0].mxu0 %v1168
        %v1317 = vpop.f32.mrb[0].mxu0
        %v1318 = vadd.f32 0.0, %v1317
        %v1319 = vpop.f32.mrb[0].mxu0
        %v1320 = vpop.f32.mrb[0].mxu0
        %v1321 = vadd.f32 0.0, %v1320
        %v1322 = vpop.f32.mrb[0].mxu0
        %1323 = vmatprep.mubr.bf16.mxu0 0
        %1324 = vmatmul.mubr.bf16.gmra.mrb[0].mxu0 %v1169
        %v1325 = vpop.f32.mrb[0].mxu0
        %v1326 = vadd.f32 0.0, %v1325
        %v1327 = vpop.f32.mrb[0].mxu0
        %v1328 = vpop.f32.mrb[0].mxu0
        %v1329 = vadd.f32 0.0, %v1328
        %v1330 = vpop.f32.mrb[0].mxu0
        %1331 = vdwg.mxu0
        %v1332 = vadd.f32 %v971, %v1270
        %v1333 = vadd.f32 %v974, %v1273
        %v1334 = vadd.f32 %v979, %v1278
        %v1335 = vadd.f32 %v982, %v1281
        %v1336 = vadd.f32 %v987, %v1286
        %v1337 = vadd.f32 %v990, %v1289
        %v1338 = vadd.f32 %v995, %v1294
        %v1339 = vadd.f32 %v998, %v1297
        %v1340 = vadd.f32 %v1003, %v1302
        %v1341 = vadd.f32 %v1006, %v1305
        %v1342 = vadd.f32 %v1011, %v1310
        %v1343 = vadd.f32 %v1014, %v1313
        %v1344 = vadd.f32 %v1019, %v1318
        %v1345 = vadd.f32 %v1022, %v1321
        %v1346 = vadd.f32 %v1027, %v1326
        %v1347 = vadd.f32 %v1030, %v1329
        %v1348 = vld [vmem:[%s4] sm:$0x1]
        %v1350 = vlaneseq
        %v1351 = vshrl.u32 %v1350, 7
        %v1352 = vsub.s32 0, %v1351
        %v1353 = vrot.slane %v1348, %v1352
        %v1355 = vadd.f32 %v1332, %v1353
        %v1356 = vadd.f32 %v1333, %v1353
        %v1357 = vadd.f32 %v1334, %v1353
        %v1358 = vadd.f32 %v1335, %v1353
        %v1359 = vadd.f32 %v1336, %v1353
        %v1360 = vadd.f32 %v1337, %v1353
        %v1361 = vadd.f32 %v1338, %v1353
        %v1362 = vadd.f32 %v1339, %v1353
        %v1363 = vadd.f32 %v1340, %v1353
        %v1364 = vadd.f32 %v1341, %v1353
        %v1365 = vadd.f32 %v1342, %v1353
        %v1366 = vadd.f32 %v1343, %v1353
        %v1367 = vadd.f32 %v1344, %v1353
        %v1368 = vadd.f32 %v1345, %v1353
        %v1369 = vadd.f32 %v1346, %v1353
        %v1370 = vadd.f32 %v1347, %v1353
        %v1371 = vmax.f32 %v1355, 0.0
        %v1372 = vmax.f32 %v1356, 0.0
        %v1373 = vmax.f32 %v1357, 0.0
        %v1374 = vmax.f32 %v1358, 0.0
        %v1375 = vmax.f32 %v1359, 0.0
        %v1376 = vmax.f32 %v1360, 0.0
        %v1377 = vmax.f32 %v1361, 0.0
        %v1378 = vmax.f32 %v1362, 0.0
        %v1379 = vmax.f32 %v1363, 0.0
        %v1380 = vmax.f32 %v1364, 0.0
        %v1381 = vmax.f32 %v1365, 0.0
        %v1382 = vmax.f32 %v1366, 0.0
        %v1383 = vmax.f32 %v1367, 0.0
        %v1384 = vmax.f32 %v1368, 0.0
        %v1385 = vmax.f32 %v1369, 0.0
        %v1386 = vmax.f32 %v1370, 0.0
        %v1387 = vpack.c.bf16 %v1372, %v1371
        %v1388 = vpack.c.bf16 %v1374, %v1373
        %v1389 = vpack.c.bf16 %v1376, %v1375
        %v1390 = vpack.c.bf16 %v1378, %v1377
        %v1391 = vpack.c.bf16 %v1380, %v1379
        %v1392 = vpack.c.bf16 %v1382, %v1381
        %v1393 = vpack.c.bf16 %v1384, %v1383
        %v1394 = vpack.c.bf16 %v1386, %v1385
        %v1395 = vld [vmem:[#allocation8] sm:$0xf]
        %v1396 = vld [vmem:[#allocation8 + $0x4] sm:$0xf]
        %v1397 = vld [vmem:[#allocation8 + $0x8] sm:$0xf]
        %v1398 = vld [vmem:[#allocation8 + $0xc] sm:$0xf]
        %v1399 = vld [vmem:[#allocation8 + $0x10] sm:$0xf]
        %v1400 = vld [vmem:[#allocation8 + $0x14] sm:$0xf]
        %v1401 = vld [vmem:[#allocation8 + $0x18] sm:$0xf]
        %v1402 = vld [vmem:[#allocation8 + $0x1c] sm:$0xf]
        %v1403 = vld [vmem:[#allocation8 + $0x20] sm:$0xf]
        %v1404 = vld [vmem:[#allocation8 + $0x24] sm:$0xf]
        %v1405 = vld [vmem:[#allocation8 + $0x28] sm:$0xf]
        %v1406 = vld [vmem:[#allocation8 + $0x2c] sm:$0xf]
        %v1407 = vld [vmem:[#allocation8 + $0x30] sm:$0xf]
        %v1408 = vld [vmem:[#allocation8 + $0x34] sm:$0xf]
        %v1409 = vld [vmem:[#allocation8 + $0x38] sm:$0xf]
        %v1410 = vld [vmem:[#allocation8 + $0x3c] sm:$0xf]
        %1411 = vmatprep.subr.bf16.mxu0 0
        %1412 = vmatpush1.bf16.msra.mxu0 %v1387
        %1413 = vmatprep.subr.bf16.mxu0 0
        %1414 = vmatpush1.bf16.msra.mxu0 %v1388
        %1415 = vmatprep.subr.bf16.mxu0 0
        %1416 = vmatpush1.bf16.msra.mxu0 %v1389
        %1417 = vmatprep.subr.bf16.mxu0 0
        %1418 = vmatpush1.bf16.msra.mxu0 %v1390
        %1419 = vmatprep.subr.bf16.mxu0 0
        %1420 = vmatpush1.bf16.msra.mxu0 %v1391
        %1421 = vmatprep.subr.bf16.mxu0 0
        %1422 = vmatpush1.bf16.msra.mxu0 %v1392
        %1423 = vmatprep.subr.bf16.mxu0 0
        %1424 = vmatpush1.bf16.msra.mxu0 %v1393
        %1425 = vmatprep.subr.bf16.mxu0 0
        %1426 = vmatpush1.bf16.msra.mxu0 %v1394
        %1427 = vmatprep.subr.bf16.mxu0 0
        %1428 = vmatpush1.bf16.msra.mxu0 0
        %1429 = vmatprep.subr.bf16.mxu0 0
        %1430 = vmatpush1.bf16.msra.mxu0 0
        %1431 = vmatprep.subr.bf16.mxu0 0
        %1432 = vmatpush1.bf16.msra.mxu0 0
        %1433 = vmatprep.subr.bf16.mxu0 0
        %1434 = vmatpush1.bf16.msra.mxu0 0
        %1435 = vmatprep.subr.bf16.mxu0 0
        %1436 = vmatpush1.bf16.msra.mxu0 0
        %1437 = vmatprep.subr.bf16.mxu0 0
        %1438 = vmatpush1.bf16.msra.mxu0 0
        %1439 = vmatprep.subr.bf16.mxu0 0
        %1440 = vmatpush1.bf16.msra.mxu0 0
        %1441 = vmatprep.subr.bf16.mxu0 0
        %1442 = vmatpush1.bf16.msra.mxu0 0
        %1443 = vmatprep.mubr.bf16.mxu0 0
        %1444 = vmatmul.mubr.bf16.gmra.mrb[0].mxu0 %v605
        %v1445 = vpop.f32.mrb[0].mxu0
        %v1446 = vadd.f32 0.0, %v1445
        %v1447 = vpop.f32.mrb[0].mxu0
        %v1448 = vpop.f32.mrb[0].mxu0
        %v1449 = vadd.f32 0.0, %v1448
        %v1450 = vpop.f32.mrb[0].mxu0
        %1451 = vmatprep.mubr.bf16.mxu0 0
        %1452 = vmatmul.mubr.bf16.gmra.mrb[0].mxu0 %v606
        %v1453 = vpop.f32.mrb[0].mxu0
        %v1454 = vadd.f32 0.0, %v1453
        %v1455 = vpop.f32.mrb[0].mxu0
        %v1456 = vpop.f32.mrb[0].mxu0
        %v1457 = vadd.f32 0.0, %v1456
        %v1458 = vpop.f32.mrb[0].mxu0
        %1459 = vmatprep.mubr.bf16.mxu0 0
        %1460 = vmatmul.mubr.bf16.gmra.mrb[0].mxu0 %v607
        %v1461 = vpop.f32.mrb[0].mxu0
        %v1462 = vadd.f32 0.0, %v1461
        %v1463 = vpop.f32.mrb[0].mxu0
        %v1464 = vpop.f32.mrb[0].mxu0
        %v1465 = vadd.f32 0.0, %v1464
        %v1466 = vpop.f32.mrb[0].mxu0
        %1467 = vmatprep.mubr.bf16.mxu0 0
        %1468 = vmatmul.mubr.bf16.gmra.mrb[0].mxu0 %v608
        %v1469 = vpop.f32.mrb[0].mxu0
        %v1470 = vadd.f32 0.0, %v1469
        %v1471 = vpop.f32.mrb[0].mxu0
        %v1472 = vpop.f32.mrb[0].mxu0
        %v1473 = vadd.f32 0.0, %v1472
        %v1474 = vpop.f32.mrb[0].mxu0
        %1475 = vmatprep.mubr.bf16.mxu0 0
        %1476 = vmatmul.mubr.bf16.gmra.mrb[0].mxu0 %v609
        %v1477 = vpop.f32.mrb[0].mxu0
        %v1478 = vadd.f32 0.0, %v1477
        %v1479 = vpop.f32.mrb[0].mxu0
        %v1480 = vpop.f32.mrb[0].mxu0
        %v1481 = vadd.f32 0.0, %v1480
        %v1482 = vpop.f32.mrb[0].mxu0
        %1483 = vmatprep.mubr.bf16.mxu0 0
        %1484 = vmatmul.mubr.bf16.gmra.mrb[0].mxu0 %v610
        %v1485 = vpop.f32.mrb[0].mxu0
        %v1486 = vadd.f32 0.0, %v1485
        %v1487 = vpop.f32.mrb[0].mxu0
        %v1488 = vpop.f32.mrb[0].mxu0
        %v1489 = vadd.f32 0.0, %v1488
        %v1490 = vpop.f32.mrb[0].mxu0
        %1491 = vmatprep.mubr.bf16.mxu0 0
        %1492 = vmatmul.mubr.bf16.gmra.mrb[0].mxu0 %v611
        %v1493 = vpop.f32.mrb[0].mxu0
        %v1494 = vadd.f32 0.0, %v1493
        %v1495 = vpop.f32.mrb[0].mxu0
        %v1496 = vpop.f32.mrb[0].mxu0
        %v1497 = vadd.f32 0.0, %v1496
        %v1498 = vpop.f32.mrb[0].mxu0
        %1499 = vmatprep.mubr.bf16.mxu0 0
        %1500 = vmatmul.mubr.bf16.gmra.mrb[0].mxu0 %v612
        %v1501 = vpop.f32.mrb[0].mxu0
        %v1502 = vadd.f32 0.0, %v1501
        %v1503 = vpop.f32.mrb[0].mxu0
        %v1504 = vpop.f32.mrb[0].mxu0
        %v1505 = vadd.f32 0.0, %v1504
        %v1506 = vpop.f32.mrb[0].mxu0
        %1507 = vdwg.mxu0
        %v1508 = vpack.c.bf16 %v1449, %v1446
        %v1509 = vpack.c.bf16 %v1457, %v1454
        %v1510 = vpack.c.bf16 %v1465, %v1462
        %v1511 = vpack.c.bf16 %v1473, %v1470
        %v1512 = vpack.c.bf16 %v1481, %v1478
        %v1513 = vpack.c.bf16 %v1489, %v1486
        %v1514 = vpack.c.bf16 %v1497, %v1494
        %v1515 = vpack.c.bf16 %v1505, %v1502
        %s1516 = scalar_lea.vmem [#allocation8], 64
        %v1517 = vld [vmem:[%s1516] sm:$0xf]
        %v1518 = vld [vmem:[%s1516 + $0x4] sm:$0xf]
        %v1519 = vld [vmem:[%s1516 + $0x8] sm:$0xf]
        %v1520 = vld [vmem:[%s1516 + $0xc] sm:$0xf]
        %v1521 = vld [vmem:[%s1516 + $0x10] sm:$0xf]
        %v1522 = vld [vmem:[%s1516 + $0x14] sm:$0xf]
        %v1523 = vld [vmem:[%s1516 + $0x18] sm:$0xf]
        %v1524 = vld [vmem:[%s1516 + $0x1c] sm:$0xf]
        %v1525 = vld [vmem:[%s1516 + $0x20] sm:$0xf]
        %v1526 = vld [vmem:[%s1516 + $0x24] sm:$0xf]
        %v1527 = vld [vmem:[%s1516 + $0x28] sm:$0xf]
        %v1528 = vld [vmem:[%s1516 + $0x2c] sm:$0xf]
        %v1529 = vld [vmem:[%s1516 + $0x30] sm:$0xf]
        %v1530 = vld [vmem:[%s1516 + $0x34] sm:$0xf]
        %v1531 = vld [vmem:[%s1516 + $0x38] sm:$0xf]
        %v1532 = vld [vmem:[%s1516 + $0x3c] sm:$0xf]
        %v1549 = vunpack.c.l.b16 %v1517
        %v1550 = vunpack.c.l.b16 %v1518
        %v1551 = vunpack.c.l.b16 %v1519
        %v1552 = vunpack.c.l.b16 %v1520
        %v1553 = vunpack.c.l.b16 %v1521
        %v1554 = vunpack.c.l.b16 %v1522
        %v1555 = vunpack.c.l.b16 %v1523
        %v1556 = vunpack.c.l.b16 %v1524
        %v1557 = vunpack.c.l.b16 %v1525
        %v1558 = vunpack.c.l.b16 %v1526
        %v1559 = vunpack.c.l.b16 %v1527
        %v1560 = vunpack.c.l.b16 %v1528
        %v1561 = vunpack.c.l.b16 %v1529
        %v1562 = vunpack.c.l.b16 %v1530
        %v1563 = vunpack.c.l.b16 %v1531
        %v1564 = vunpack.c.l.b16 %v1532
        %v1565 = vpack.c.b16 %v1550, %v1549
        %v1566 = vpack.c.b16 %v1552, %v1551
        %v1567 = vpack.c.b16 %v1554, %v1553
        %v1568 = vpack.c.b16 %v1556, %v1555
        %v1569 = vpack.c.b16 %v1558, %v1557
        %v1570 = vpack.c.b16 %v1560, %v1559
        %v1571 = vpack.c.b16 %v1562, %v1561
        %v1572 = vpack.c.b16 %v1564, %v1563
        %1581 = vmatprep.subr.bf16.mxu0 0
        %1582 = vmatpush1.bf16.msra.mxu0 %v1565
        %1583 = vmatprep.subr.bf16.mxu0 0
        %1584 = vmatpush1.bf16.msra.mxu0 %v1566
        %1585 = vmatprep.subr.bf16.mxu0 0
        %1586 = vmatpush1.bf16.msra.mxu0 %v1567
        %1587 = vmatprep.subr.bf16.mxu0 0
        %1588 = vmatpush1.bf16.msra.mxu0 %v1568
        %1589 = vmatprep.subr.bf16.mxu0 0
        %1590 = vmatpush1.bf16.msra.mxu0 %v1569
        %1591 = vmatprep.subr.bf16.mxu0 0
        %1592 = vmatpush1.bf16.msra.mxu0 %v1570
        %1593 = vmatprep.subr.bf16.mxu0 0
        %1594 = vmatpush1.bf16.msra.mxu0 %v1571
        %1595 = vmatprep.subr.bf16.mxu0 0
        %1596 = vmatpush1.bf16.msra.mxu0 %v1572
        %1597 = vmatprep.subr.bf16.mxu0 0
        %1598 = vmatpush1.bf16.msra.mxu0 0
        %1599 = vmatprep.subr.bf16.mxu0 0
        %1600 = vmatpush1.bf16.msra.mxu0 0
        %1601 = vmatprep.subr.bf16.mxu0 0
        %1602 = vmatpush1.bf16.msra.mxu0 0
        %1603 = vmatprep.subr.bf16.mxu0 0
        %1604 = vmatpush1.bf16.msra.mxu0 0
        %1605 = vmatprep.subr.bf16.mxu0 0
        %1606 = vmatpush1.bf16.msra.mxu0 0
        %1607 = vmatprep.subr.bf16.mxu0 0
        %1608 = vmatpush1.bf16.msra.mxu0 0
        %1609 = vmatprep.subr.bf16.mxu0 0
        %1610 = vmatpush1.bf16.msra.mxu0 0
        %1611 = vmatprep.subr.bf16.mxu0 0
        %1612 = vmatpush1.bf16.msra.mxu0 0
        %1613 = vmatprep.mubr.bf16.mxu0 0
        %1614 = vmatmul.mubr.bf16.gmra.mrb[0].mxu0 %v1508
        %v1615 = vpop.f32.mrb[0].mxu0
        %v1616 = vadd.f32 0.0, %v1615
        %v1617 = vpop.f32.mrb[0].mxu0
        %v1618 = vpop.f32.mrb[0].mxu0
        %v1619 = vadd.f32 0.0, %v1618
        %v1620 = vpop.f32.mrb[0].mxu0
        %1621 = vmatprep.mubr.bf16.mxu0 0
        %1622 = vmatmul.mubr.bf16.gmra.mrb[0].mxu0 %v1509
        %v1623 = vpop.f32.mrb[0].mxu0
        %v1624 = vadd.f32 0.0, %v1623
        %v1625 = vpop.f32.mrb[0].mxu0
        %v1626 = vpop.f32.mrb[0].mxu0
        %v1627 = vadd.f32 0.0, %v1626
        %v1628 = vpop.f32.mrb[0].mxu0
        %1629 = vmatprep.mubr.bf16.mxu0 0
        %1630 = vmatmul.mubr.bf16.gmra.mrb[0].mxu0 %v1510
        %v1631 = vpop.f32.mrb[0].mxu0
        %v1632 = vadd.f32 0.0, %v1631
        %v1633 = vpop.f32.mrb[0].mxu0
        %v1634 = vpop.f32.mrb[0].mxu0
        %v1635 = vadd.f32 0.0, %v1634
        %v1636 = vpop.f32.mrb[0].mxu0
        %1637 = vmatprep.mubr.bf16.mxu0 0
        %1638 = vmatmul.mubr.bf16.gmra.mrb[0].mxu0 %v1511
        %v1639 = vpop.f32.mrb[0].mxu0
        %v1640 = vadd.f32 0.0, %v1639
        %v1641 = vpop.f32.mrb[0].mxu0
        %v1642 = vpop.f32.mrb[0].mxu0
        %v1643 = vadd.f32 0.0, %v1642
        %v1644 = vpop.f32.mrb[0].mxu0
        %1645 = vmatprep.mubr.bf16.mxu0 0
        %1646 = vmatmul.mubr.bf16.gmra.mrb[0].mxu0 %v1512
        %v1647 = vpop.f32.mrb[0].mxu0
        %v1648 = vadd.f32 0.0, %v1647
        %v1649 = vpop.f32.mrb[0].mxu0
        %v1650 = vpop.f32.mrb[0].mxu0
        %v1651 = vadd.f32 0.0, %v1650
        %v1652 = vpop.f32.mrb[0].mxu0
        %1653 = vmatprep.mubr.bf16.mxu0 0
        %1654 = vmatmul.mubr.bf16.gmra.mrb[0].mxu0 %v1513
        %v1655 = vpop.f32.mrb[0].mxu0
        %v1656 = vadd.f32 0.0, %v1655
        %v1657 = vpop.f32.mrb[0].mxu0
        %v1658 = vpop.f32.mrb[0].mxu0
        %v1659 = vadd.f32 0.0, %v1658
        %v1660 = vpop.f32.mrb[0].mxu0
        %1661 = vmatprep.mubr.bf16.mxu0 0
        %1662 = vmatmul.mubr.bf16.gmra.mrb[0].mxu0 %v1514
        %v1663 = vpop.f32.mrb[0].mxu0
        %v1664 = vadd.f32 0.0, %v1663
        %v1665 = vpop.f32.mrb[0].mxu0
        %v1666 = vpop.f32.mrb[0].mxu0
        %v1667 = vadd.f32 0.0, %v1666
        %v1668 = vpop.f32.mrb[0].mxu0
        %1669 = vmatprep.mubr.bf16.mxu0 0
        %1670 = vmatmul.mubr.bf16.gmra.mrb[0].mxu0 %v1515
        %v1671 = vpop.f32.mrb[0].mxu0
        %v1672 = vadd.f32 0.0, %v1671
        %v1673 = vpop.f32.mrb[0].mxu0
        %v1674 = vpop.f32.mrb[0].mxu0
        %v1675 = vadd.f32 0.0, %v1674
        %v1676 = vpop.f32.mrb[0].mxu0
        %1677 = vdwg.mxu0
        %v1694 = vunpack.c.l.b16 %v1395
        %v1695 = vunpack.c.l.b16 %v1396
        %v1696 = vunpack.c.l.b16 %v1397
        %v1697 = vunpack.c.l.b16 %v1398
        %v1698 = vunpack.c.l.b16 %v1399
        %v1699 = vunpack.c.l.b16 %v1400
        %v1700 = vunpack.c.l.b16 %v1401
        %v1701 = vunpack.c.l.b16 %v1402
        %v1702 = vunpack.c.l.b16 %v1403
        %v1703 = vunpack.c.l.b16 %v1404
        %v1704 = vunpack.c.l.b16 %v1405
        %v1705 = vunpack.c.l.b16 %v1406
        %v1706 = vunpack.c.l.b16 %v1407
        %v1707 = vunpack.c.l.b16 %v1408
        %v1708 = vunpack.c.l.b16 %v1409
        %v1709 = vunpack.c.l.b16 %v1410
        %v1710 = vpack.c.b16 %v1695, %v1694
        %v1711 = vpack.c.b16 %v1697, %v1696
        %v1712 = vpack.c.b16 %v1699, %v1698
        %v1713 = vpack.c.b16 %v1701, %v1700
        %v1714 = vpack.c.b16 %v1703, %v1702
        %v1715 = vpack.c.b16 %v1705, %v1704
        %v1716 = vpack.c.b16 %v1707, %v1706
        %v1717 = vpack.c.b16 %v1709, %v1708
        %1726 = vmatprep.subr.bf16.mxu0 0
        %1727 = vmatpush1.bf16.msra.mxu0 %v1710
        %1728 = vmatprep.subr.bf16.mxu0 0
        %1729 = vmatpush1.bf16.msra.mxu0 %v1711
        %1730 = vmatprep.subr.bf16.mxu0 0
        %1731 = vmatpush1.bf16.msra.mxu0 %v1712
        %1732 = vmatprep.subr.bf16.mxu0 0
        %1733 = vmatpush1.bf16.msra.mxu0 %v1713
        %1734 = vmatprep.subr.bf16.mxu0 0
        %1735 = vmatpush1.bf16.msra.mxu0 %v1714
        %1736 = vmatprep.subr.bf16.mxu0 0
        %1737 = vmatpush1.bf16.msra.mxu0 %v1715
        %1738 = vmatprep.subr.bf16.mxu0 0
        %1739 = vmatpush1.bf16.msra.mxu0 %v1716
        %1740 = vmatprep.subr.bf16.mxu0 0
        %1741 = vmatpush1.bf16.msra.mxu0 %v1717
        %1742 = vmatprep.subr.bf16.mxu0 0
        %1743 = vmatpush1.bf16.msra.mxu0 0
        %1744 = vmatprep.subr.bf16.mxu0 0
        %1745 = vmatpush1.bf16.msra.mxu0 0
        %1746 = vmatprep.subr.bf16.mxu0 0
        %1747 = vmatpush1.bf16.msra.mxu0 0
        %1748 = vmatprep.subr.bf16.mxu0 0
        %1749 = vmatpush1.bf16.msra.mxu0 0
        %1750 = vmatprep.subr.bf16.mxu0 0
        %1751 = vmatpush1.bf16.msra.mxu0 0
        %1752 = vmatprep.subr.bf16.mxu0 0
        %1753 = vmatpush1.bf16.msra.mxu0 0
        %1754 = vmatprep.subr.bf16.mxu0 0
        %1755 = vmatpush1.bf16.msra.mxu0 0
        %1756 = vmatprep.subr.bf16.mxu0 0
        %1757 = vmatpush1.bf16.msra.mxu0 0
        %1758 = vmatprep.mubr.bf16.mxu0 0
        %1759 = vmatmul.mubr.bf16.gmra.mrb[0].mxu0 %v1387
        %v1760 = vpop.f32.mrb[0].mxu0
        %v1761 = vadd.f32 %v1616, %v1760
        %v1762 = vpop.f32.mrb[0].mxu0
        %v1763 = vpop.f32.mrb[0].mxu0
        %v1764 = vadd.f32 %v1619, %v1763
        %v1765 = vpop.f32.mrb[0].mxu0
        %1766 = vmatprep.mubr.bf16.mxu0 0
        %1767 = vmatmul.mubr.bf16.gmra.mrb[0].mxu0 %v1388
        %v1768 = vpop.f32.mrb[0].mxu0
        %v1769 = vadd.f32 %v1624, %v1768
        %v1770 = vpop.f32.mrb[0].mxu0
        %v1771 = vpop.f32.mrb[0].mxu0
        %v1772 = vadd.f32 %v1627, %v1771
        %v1773 = vpop.f32.mrb[0].mxu0
        %1774 = vmatprep.mubr.bf16.mxu0 0
        %1775 = vmatmul.mubr.bf16.gmra.mrb[0].mxu0 %v1389
        %v1776 = vpop.f32.mrb[0].mxu0
        %v1777 = vadd.f32 %v1632, %v1776
        %v1778 = vpop.f32.mrb[0].mxu0
        %v1779 = vpop.f32.mrb[0].mxu0
        %v1780 = vadd.f32 %v1635, %v1779
        %v1781 = vpop.f32.mrb[0].mxu0
        %1782 = vmatprep.mubr.bf16.mxu0 0
        %1783 = vmatmul.mubr.bf16.gmra.mrb[0].mxu0 %v1390
        %v1784 = vpop.f32.mrb[0].mxu0
        %v1785 = vadd.f32 %v1640, %v1784
        %v1786 = vpop.f32.mrb[0].mxu0
        %v1787 = vpop.f32.mrb[0].mxu0
        %v1788 = vadd.f32 %v1643, %v1787
        %v1789 = vpop.f32.mrb[0].mxu0
        %1790 = vmatprep.mubr.bf16.mxu0 0
        %1791 = vmatmul.mubr.bf16.gmra.mrb[0].mxu0 %v1391
        %v1792 = vpop.f32.mrb[0].mxu0
        %v1793 = vadd.f32 %v1648, %v1792
        %v1794 = vpop.f32.mrb[0].mxu0
        %v1795 = vpop.f32.mrb[0].mxu0
        %v1796 = vadd.f32 %v1651, %v1795
        %v1797 = vpop.f32.mrb[0].mxu0
        %1798 = vmatprep.mubr.bf16.mxu0 0
        %1799 = vmatmul.mubr.bf16.gmra.mrb[0].mxu0 %v1392
        %v1800 = vpop.f32.mrb[0].mxu0
        %v1801 = vadd.f32 %v1656, %v1800
        %v1802 = vpop.f32.mrb[0].mxu0
        %v1803 = vpop.f32.mrb[0].mxu0
        %v1804 = vadd.f32 %v1659, %v1803
        %v1805 = vpop.f32.mrb[0].mxu0
        %1806 = vmatprep.mubr.bf16.mxu0 0
        %1807 = vmatmul.mubr.bf16.gmra.mrb[0].mxu0 %v1393
        %v1808 = vpop.f32.mrb[0].mxu0
        %v1809 = vadd.f32 %v1664, %v1808
        %v1810 = vpop.f32.mrb[0].mxu0
        %v1811 = vpop.f32.mrb[0].mxu0
        %v1812 = vadd.f32 %v1667, %v1811
        %v1813 = vpop.f32.mrb[0].mxu0
        %1814 = vmatprep.mubr.bf16.mxu0 0
        %1815 = vmatmul.mubr.bf16.gmra.mrb[0].mxu0 %v1394
        %v1816 = vpop.f32.mrb[0].mxu0
        %v1817 = vadd.f32 %v1672, %v1816
        %v1818 = vpop.f32.mrb[0].mxu0
        %v1819 = vpop.f32.mrb[0].mxu0
        %v1820 = vadd.f32 %v1675, %v1819
        %v1821 = vpop.f32.mrb[0].mxu0
        %1822 = vdwg.mxu0
        %1823 = vmatprep.subr.bf16.mxu0 0
        %1824 = vmatpush1.bf16.msra.mxu0 %v1508
        %1825 = vmatprep.subr.bf16.mxu0 0
        %1826 = vmatpush1.bf16.msra.mxu0 %v1509
        %1827 = vmatprep.subr.bf16.mxu0 0
        %1828 = vmatpush1.bf16.msra.mxu0 %v1510
        %1829 = vmatprep.subr.bf16.mxu0 0
        %1830 = vmatpush1.bf16.msra.mxu0 %v1511
        %1831 = vmatprep.subr.bf16.mxu0 0
        %1832 = vmatpush1.bf16.msra.mxu0 %v1512
        %1833 = vmatprep.subr.bf16.mxu0 0
        %1834 = vmatpush1.bf16.msra.mxu0 %v1513
        %1835 = vmatprep.subr.bf16.mxu0 0
        %1836 = vmatpush1.bf16.msra.mxu0 %v1514
        %1837 = vmatprep.subr.bf16.mxu0 0
        %1838 = vmatpush1.bf16.msra.mxu0 %v1515
        %1839 = vmatprep.subr.bf16.mxu0 0
        %1840 = vmatpush1.bf16.msra.mxu0 0
        %1841 = vmatprep.subr.bf16.mxu0 0
        %1842 = vmatpush1.bf16.msra.mxu0 0
        %1843 = vmatprep.subr.bf16.mxu0 0
        %1844 = vmatpush1.bf16.msra.mxu0 0
        %1845 = vmatprep.subr.bf16.mxu0 0
        %1846 = vmatpush1.bf16.msra.mxu0 0
        %1847 = vmatprep.subr.bf16.mxu0 0
        %1848 = vmatpush1.bf16.msra.mxu0 0
        %1849 = vmatprep.subr.bf16.mxu0 0
        %1850 = vmatpush1.bf16.msra.mxu0 0
        %1851 = vmatprep.subr.bf16.mxu0 0
        %1852 = vmatpush1.bf16.msra.mxu0 0
        %1853 = vmatprep.subr.bf16.mxu0 0
        %1854 = vmatpush1.bf16.msra.mxu0 0
        %1855 = vmatprep.mubr.bf16.mxu0 0
        %1856 = vmatmul.mubr.bf16.gmra.mrb[0].mxu0 %v605
        %v1857 = vpop.f32.mrb[0].mxu0
        %v1858 = vadd.f32 0.0, %v1857
        %v1859 = vpop.f32.mrb[0].mxu0
        %v1860 = vpop.f32.mrb[0].mxu0
        %v1861 = vadd.f32 0.0, %v1860
        %v1862 = vpop.f32.mrb[0].mxu0
        %1863 = vmatprep.mubr.bf16.mxu0 0
        %1864 = vmatmul.mubr.bf16.gmra.mrb[0].mxu0 %v606
        %v1865 = vpop.f32.mrb[0].mxu0
        %v1866 = vadd.f32 0.0, %v1865
        %v1867 = vpop.f32.mrb[0].mxu0
        %v1868 = vpop.f32.mrb[0].mxu0
        %v1869 = vadd.f32 0.0, %v1868
        %v1870 = vpop.f32.mrb[0].mxu0
        %1871 = vmatprep.mubr.bf16.mxu0 0
        %1872 = vmatmul.mubr.bf16.gmra.mrb[0].mxu0 %v607
        %v1873 = vpop.f32.mrb[0].mxu0
        %v1874 = vadd.f32 0.0, %v1873
        %v1875 = vpop.f32.mrb[0].mxu0
        %v1876 = vpop.f32.mrb[0].mxu0
        %v1877 = vadd.f32 0.0, %v1876
        %v1878 = vpop.f32.mrb[0].mxu0
        %1879 = vmatprep.mubr.bf16.mxu0 0
        %1880 = vmatmul.mubr.bf16.gmra.mrb[0].mxu0 %v608
        %v1881 = vpop.f32.mrb[0].mxu0
        %v1882 = vadd.f32 0.0, %v1881
        %v1883 = vpop.f32.mrb[0].mxu0
        %v1884 = vpop.f32.mrb[0].mxu0
        %v1885 = vadd.f32 0.0, %v1884
        %v1886 = vpop.f32.mrb[0].mxu0
        %1887 = vmatprep.mubr.bf16.mxu0 0
        %1888 = vmatmul.mubr.bf16.gmra.mrb[0].mxu0 %v609
        %v1889 = vpop.f32.mrb[0].mxu0
        %v1890 = vadd.f32 0.0, %v1889
        %v1891 = vpop.f32.mrb[0].mxu0
        %v1892 = vpop.f32.mrb[0].mxu0
        %v1893 = vadd.f32 0.0, %v1892
        %v1894 = vpop.f32.mrb[0].mxu0
        %1895 = vmatprep.mubr.bf16.mxu0 0
        %1896 = vmatmul.mubr.bf16.gmra.mrb[0].mxu0 %v610
        %v1897 = vpop.f32.mrb[0].mxu0
        %v1898 = vadd.f32 0.0, %v1897
        %v1899 = vpop.f32.mrb[0].mxu0
        %v1900 = vpop.f32.mrb[0].mxu0
        %v1901 = vadd.f32 0.0, %v1900
        %v1902 = vpop.f32.mrb[0].mxu0
        %1903 = vmatprep.mubr.bf16.mxu0 0
        %1904 = vmatmul.mubr.bf16.gmra.mrb[0].mxu0 %v611
        %v1905 = vpop.f32.mrb[0].mxu0
        %v1906 = vadd.f32 0.0, %v1905
        %v1907 = vpop.f32.mrb[0].mxu0
        %v1908 = vpop.f32.mrb[0].mxu0
        %v1909 = vadd.f32 0.0, %v1908
        %v1910 = vpop.f32.mrb[0].mxu0
        %1911 = vmatprep.mubr.bf16.mxu0 0
        %1912 = vmatmul.mubr.bf16.gmra.mrb[0].mxu0 %v612
        %v1913 = vpop.f32.mrb[0].mxu0
        %v1914 = vadd.f32 0.0, %v1913
        %v1915 = vpop.f32.mrb[0].mxu0
        %v1916 = vpop.f32.mrb[0].mxu0
        %v1917 = vadd.f32 0.0, %v1916
        %v1918 = vpop.f32.mrb[0].mxu0
        %1919 = vdwg.mxu0
        %v1920 = vmul.f32 %v1858, 2.0
        %v1921 = vmul.f32 %v1861, 2.0
        %v1922 = vmul.f32 %v1866, 2.0
        %v1923 = vmul.f32 %v1869, 2.0
        %v1924 = vmul.f32 %v1874, 2.0
        %v1925 = vmul.f32 %v1877, 2.0
        %v1926 = vmul.f32 %v1882, 2.0
        %v1927 = vmul.f32 %v1885, 2.0
        %v1928 = vmul.f32 %v1890, 2.0
        %v1929 = vmul.f32 %v1893, 2.0
        %v1930 = vmul.f32 %v1898, 2.0
        %v1931 = vmul.f32 %v1901, 2.0
        %v1932 = vmul.f32 %v1906, 2.0
        %v1933 = vmul.f32 %v1909, 2.0
        %v1934 = vmul.f32 %v1914, 2.0
        %v1935 = vmul.f32 %v1917, 2.0
        %v1936 = vsub.f32 %v1920, %v1371
        %v1937 = vsub.f32 %v1921, %v1372
        %v1938 = vsub.f32 %v1922, %v1373
        %v1939 = vsub.f32 %v1923, %v1374
        %v1940 = vsub.f32 %v1924, %v1375
        %v1941 = vsub.f32 %v1925, %v1376
        %v1942 = vsub.f32 %v1926, %v1377
        %v1943 = vsub.f32 %v1927, %v1378
        %v1944 = vsub.f32 %v1928, %v1379
        %v1945 = vsub.f32 %v1929, %v1380
        %v1946 = vsub.f32 %v1930, %v1381
        %v1947 = vsub.f32 %v1931, %v1382
        %v1948 = vsub.f32 %v1932, %v1383
        %v1949 = vsub.f32 %v1933, %v1384
        %v1950 = vsub.f32 %v1934, %v1385
        %v1951 = vsub.f32 %v1935, %v1386
        %v1952 = vpack.c.bf16 %v1937, %v1936
        %v1953 = vpack.c.bf16 %v1939, %v1938
        %v1954 = vpack.c.bf16 %v1941, %v1940
        %v1955 = vpack.c.bf16 %v1943, %v1942
        %v1956 = vpack.c.bf16 %v1945, %v1944
        %v1957 = vpack.c.bf16 %v1947, %v1946
        %v1958 = vpack.c.bf16 %v1949, %v1948
        %v1959 = vpack.c.bf16 %v1951, %v1950
        %s1960 = scalar_lea.vmem [#allocation8], 128
        %v1961 = vld [vmem:[%s1960] sm:$0xf]
        %v1962 = vld [vmem:[%s1960 + $0x4] sm:$0xf]
        %v1963 = vld [vmem:[%s1960 + $0x8] sm:$0xf]
        %v1964 = vld [vmem:[%s1960 + $0xc] sm:$0xf]
        %v1965 = vld [vmem:[%s1960 + $0x10] sm:$0xf]
        %v1966 = vld [vmem:[%s1960 + $0x14] sm:$0xf]
        %v1967 = vld [vmem:[%s1960 + $0x18] sm:$0xf]
        %v1968 = vld [vmem:[%s1960 + $0x1c] sm:$0xf]
        %v1969 = vld [vmem:[%s1960 + $0x20] sm:$0xf]
        %v1970 = vld [vmem:[%s1960 + $0x24] sm:$0xf]
        %v1971 = vld [vmem:[%s1960 + $0x28] sm:$0xf]
        %v1972 = vld [vmem:[%s1960 + $0x2c] sm:$0xf]
        %v1973 = vld [vmem:[%s1960 + $0x30] sm:$0xf]
        %v1974 = vld [vmem:[%s1960 + $0x34] sm:$0xf]
        %v1975 = vld [vmem:[%s1960 + $0x38] sm:$0xf]
        %v1976 = vld [vmem:[%s1960 + $0x3c] sm:$0xf]
        %v1993 = vunpack.c.l.b16 %v1961
        %v1994 = vunpack.c.l.b16 %v1962
        %v1995 = vunpack.c.l.b16 %v1963
        %v1996 = vunpack.c.l.b16 %v1964
        %v1997 = vunpack.c.l.b16 %v1965
        %v1998 = vunpack.c.l.b16 %v1966
        %v1999 = vunpack.c.l.b16 %v1967
        %v2000 = vunpack.c.l.b16 %v1968
        %v2001 = vunpack.c.l.b16 %v1969
        %v2002 = vunpack.c.l.b16 %v1970
        %v2003 = vunpack.c.l.b16 %v1971
        %v2004 = vunpack.c.l.b16 %v1972
        %v2005 = vunpack.c.l.b16 %v1973
        %v2006 = vunpack.c.l.b16 %v1974
        %v2007 = vunpack.c.l.b16 %v1975
        %v2008 = vunpack.c.l.b16 %v1976
        %v2009 = vpack.c.b16 %v1994, %v1993
        %v2010 = vpack.c.b16 %v1996, %v1995
        %v2011 = vpack.c.b16 %v1998, %v1997
        %v2012 = vpack.c.b16 %v2000, %v1999
        %v2013 = vpack.c.b16 %v2002, %v2001
        %v2014 = vpack.c.b16 %v2004, %v2003
        %v2015 = vpack.c.b16 %v2006, %v2005
        %v2016 = vpack.c.b16 %v2008, %v2007
        %2025 = vmatprep.subr.bf16.mxu0 0
        %2026 = vmatpush1.bf16.msra.mxu0 %v2009
        %2027 = vmatprep.subr.bf16.mxu0 0
        %2028 = vmatpush1.bf16.msra.mxu0 %v2010
        %2029 = vmatprep.subr.bf16.mxu0 0
        %2030 = vmatpush1.bf16.msra.mxu0 %v2011
        %2031 = vmatprep.subr.bf16.mxu0 0
        %2032 = vmatpush1.bf16.msra.mxu0 %v2012
        %2033 = vmatprep.subr.bf16.mxu0 0
        %2034 = vmatpush1.bf16.msra.mxu0 %v2013
        %2035 = vmatprep.subr.bf16.mxu0 0
        %2036 = vmatpush1.bf16.msra.mxu0 %v2014
        %2037 = vmatprep.subr.bf16.mxu0 0
        %2038 = vmatpush1.bf16.msra.mxu0 %v2015
        %2039 = vmatprep.subr.bf16.mxu0 0
        %2040 = vmatpush1.bf16.msra.mxu0 %v2016
        %2041 = vmatprep.subr.bf16.mxu0 0
        %2042 = vmatpush1.bf16.msra.mxu0 0
        %2043 = vmatprep.subr.bf16.mxu0 0
        %2044 = vmatpush1.bf16.msra.mxu0 0
        %2045 = vmatprep.subr.bf16.mxu0 0
        %2046 = vmatpush1.bf16.msra.mxu0 0
        %2047 = vmatprep.subr.bf16.mxu0 0
        %2048 = vmatpush1.bf16.msra.mxu0 0
        %2049 = vmatprep.subr.bf16.mxu0 0
        %2050 = vmatpush1.bf16.msra.mxu0 0
        %2051 = vmatprep.subr.bf16.mxu0 0
        %2052 = vmatpush1.bf16.msra.mxu0 0
        %2053 = vmatprep.subr.bf16.mxu0 0
        %2054 = vmatpush1.bf16.msra.mxu0 0
        %2055 = vmatprep.subr.bf16.mxu0 0
        %2056 = vmatpush1.bf16.msra.mxu0 0
        %2057 = vmatprep.mubr.bf16.mxu0 0
        %2058 = vmatmul.mubr.bf16.gmra.mrb[0].mxu0 %v1952
        %v2059 = vpop.f32.mrb[0].mxu0
        %v2060 = vadd.f32 0.0, %v2059
        %v2061 = vpop.f32.mrb[0].mxu0
        %v2062 = vpop.f32.mrb[0].mxu0
        %v2063 = vadd.f32 0.0, %v2062
        %v2064 = vpop.f32.mrb[0].mxu0
        %2065 = vmatprep.mubr.bf16.mxu0 0
        %2066 = vmatmul.mubr.bf16.gmra.mrb[0].mxu0 %v1953
        %v2067 = vpop.f32.mrb[0].mxu0
        %v2068 = vadd.f32 0.0, %v2067
        %v2069 = vpop.f32.mrb[0].mxu0
        %v2070 = vpop.f32.mrb[0].mxu0
        %v2071 = vadd.f32 0.0, %v2070
        %v2072 = vpop.f32.mrb[0].mxu0
        %2073 = vmatprep.mubr.bf16.mxu0 0
        %2074 = vmatmul.mubr.bf16.gmra.mrb[0].mxu0 %v1954
        %v2075 = vpop.f32.mrb[0].mxu0
        %v2076 = vadd.f32 0.0, %v2075
        %v2077 = vpop.f32.mrb[0].mxu0
        %v2078 = vpop.f32.mrb[0].mxu0
        %v2079 = vadd.f32 0.0, %v2078
        %v2080 = vpop.f32.mrb[0].mxu0
        %2081 = vmatprep.mubr.bf16.mxu0 0
        %2082 = vmatmul.mubr.bf16.gmra.mrb[0].mxu0 %v1955
        %v2083 = vpop.f32.mrb[0].mxu0
        %v2084 = vadd.f32 0.0, %v2083
        %v2085 = vpop.f32.mrb[0].mxu0
        %v2086 = vpop.f32.mrb[0].mxu0
        %v2087 = vadd.f32 0.0, %v2086
        %v2088 = vpop.f32.mrb[0].mxu0
        %2089 = vmatprep.mubr.bf16.mxu0 0
        %2090 = vmatmul.mubr.bf16.gmra.mrb[0].mxu0 %v1956
        %v2091 = vpop.f32.mrb[0].mxu0
        %v2092 = vadd.f32 0.0, %v2091
        %v2093 = vpop.f32.mrb[0].mxu0
        %v2094 = vpop.f32.mrb[0].mxu0
        %v2095 = vadd.f32 0.0, %v2094
        %v2096 = vpop.f32.mrb[0].mxu0
        %2097 = vmatprep.mubr.bf16.mxu0 0
        %2098 = vmatmul.mubr.bf16.gmra.mrb[0].mxu0 %v1957
        %v2099 = vpop.f32.mrb[0].mxu0
        %v2100 = vadd.f32 0.0, %v2099
        %v2101 = vpop.f32.mrb[0].mxu0
        %v2102 = vpop.f32.mrb[0].mxu0
        %v2103 = vadd.f32 0.0, %v2102
        %v2104 = vpop.f32.mrb[0].mxu0
        %2105 = vmatprep.mubr.bf16.mxu0 0
        %2106 = vmatmul.mubr.bf16.gmra.mrb[0].mxu0 %v1958
        %v2107 = vpop.f32.mrb[0].mxu0
        %v2108 = vadd.f32 0.0, %v2107
        %v2109 = vpop.f32.mrb[0].mxu0
        %v2110 = vpop.f32.mrb[0].mxu0
        %v2111 = vadd.f32 0.0, %v2110
        %v2112 = vpop.f32.mrb[0].mxu0
        %2113 = vmatprep.mubr.bf16.mxu0 0
        %2114 = vmatmul.mubr.bf16.gmra.mrb[0].mxu0 %v1959
        %v2115 = vpop.f32.mrb[0].mxu0
        %v2116 = vadd.f32 0.0, %v2115
        %v2117 = vpop.f32.mrb[0].mxu0
        %v2118 = vpop.f32.mrb[0].mxu0
        %v2119 = vadd.f32 0.0, %v2118
        %v2120 = vpop.f32.mrb[0].mxu0
        %2121 = vdwg.mxu0
        %v2122 = vadd.f32 %v1761, %v2060
        %v2123 = vadd.f32 %v1764, %v2063
        %v2124 = vadd.f32 %v1769, %v2068
        %v2125 = vadd.f32 %v1772, %v2071
        %v2126 = vadd.f32 %v1777, %v2076
        %v2127 = vadd.f32 %v1780, %v2079
        %v2128 = vadd.f32 %v1785, %v2084
        %v2129 = vadd.f32 %v1788, %v2087
        %v2130 = vadd.f32 %v1793, %v2092
        %v2131 = vadd.f32 %v1796, %v2095
        %v2132 = vadd.f32 %v1801, %v2100
        %v2133 = vadd.f32 %v1804, %v2103
        %v2134 = vadd.f32 %v1809, %v2108
        %v2135 = vadd.f32 %v1812, %v2111
        %v2136 = vadd.f32 %v1817, %v2116
        %v2137 = vadd.f32 %v1820, %v2119
        %v2138 = vld [vmem:[%s6] sm:$0x1]
        %v2140 = vlaneseq
        %v2141 = vshrl.u32 %v2140, 7
        %v2142 = vsub.s32 0, %v2141
        %v2143 = vrot.slane %v2138, %v2142
        %v2145 = vadd.f32 %v2122, %v2143
        %v2146 = vadd.f32 %v2123, %v2143
        %v2147 = vadd.f32 %v2124, %v2143
        %v2148 = vadd.f32 %v2125, %v2143
        %v2149 = vadd.f32 %v2126, %v2143
        %v2150 = vadd.f32 %v2127, %v2143
        %v2151 = vadd.f32 %v2128, %v2143
        %v2152 = vadd.f32 %v2129, %v2143
        %v2153 = vadd.f32 %v2130, %v2143
        %v2154 = vadd.f32 %v2131, %v2143
        %v2155 = vadd.f32 %v2132, %v2143
        %v2156 = vadd.f32 %v2133, %v2143
        %v2157 = vadd.f32 %v2134, %v2143
        %v2158 = vadd.f32 %v2135, %v2143
        %v2159 = vadd.f32 %v2136, %v2143
        %v2160 = vadd.f32 %v2137, %v2143
        %v2161 = vmax.f32 %v2145, 0.0
        %v2162 = vmax.f32 %v2146, 0.0
        %v2163 = vmax.f32 %v2147, 0.0
        %v2164 = vmax.f32 %v2148, 0.0
        %v2165 = vmax.f32 %v2149, 0.0
        %v2166 = vmax.f32 %v2150, 0.0
        %v2167 = vmax.f32 %v2151, 0.0
        %v2168 = vmax.f32 %v2152, 0.0
        %v2169 = vmax.f32 %v2153, 0.0
        %v2170 = vmax.f32 %v2154, 0.0
        %v2171 = vmax.f32 %v2155, 0.0
        %v2172 = vmax.f32 %v2156, 0.0
        %v2173 = vmax.f32 %v2157, 0.0
        %v2174 = vmax.f32 %v2158, 0.0
        %v2175 = vmax.f32 %v2159, 0.0
        %v2176 = vmax.f32 %v2160, 0.0
        %v2177 = vpack.c.bf16 %v2162, %v2161
        %v2178 = vpack.c.bf16 %v2164, %v2163
        %v2179 = vpack.c.bf16 %v2166, %v2165
        %v2180 = vpack.c.bf16 %v2168, %v2167
        %v2181 = vpack.c.bf16 %v2170, %v2169
        %v2182 = vpack.c.bf16 %v2172, %v2171
        %v2183 = vpack.c.bf16 %v2174, %v2173
        %v2184 = vpack.c.bf16 %v2176, %v2175
        %v2185 = vld [vmem:[#allocation10] sm:$0xf]
        %v2186 = vld [vmem:[#allocation10 + $0x4] sm:$0xf]
        %v2187 = vld [vmem:[#allocation10 + $0x8] sm:$0xf]
        %v2188 = vld [vmem:[#allocation10 + $0xc] sm:$0xf]
        %v2189 = vld [vmem:[#allocation10 + $0x10] sm:$0xf]
        %v2190 = vld [vmem:[#allocation10 + $0x14] sm:$0xf]
        %v2191 = vld [vmem:[#allocation10 + $0x18] sm:$0xf]
        %v2192 = vld [vmem:[#allocation10 + $0x1c] sm:$0xf]
        %v2193 = vld [vmem:[#allocation10 + $0x20] sm:$0xf]
        %v2194 = vld [vmem:[#allocation10 + $0x24] sm:$0xf]
        %v2195 = vld [vmem:[#allocation10 + $0x28] sm:$0xf]
        %v2196 = vld [vmem:[#allocation10 + $0x2c] sm:$0xf]
        %v2197 = vld [vmem:[#allocation10 + $0x30] sm:$0xf]
        %v2198 = vld [vmem:[#allocation10 + $0x34] sm:$0xf]
        %v2199 = vld [vmem:[#allocation10 + $0x38] sm:$0xf]
        %v2200 = vld [vmem:[#allocation10 + $0x3c] sm:$0xf]
        %2201 = vmatprep.subr.bf16.mxu0 0
        %2202 = vmatpush1.bf16.msra.mxu0 %v2177
        %2203 = vmatprep.subr.bf16.mxu0 0
        %2204 = vmatpush1.bf16.msra.mxu0 %v2178
        %2205 = vmatprep.subr.bf16.mxu0 0
        %2206 = vmatpush1.bf16.msra.mxu0 %v2179
        %2207 = vmatprep.subr.bf16.mxu0 0
        %2208 = vmatpush1.bf16.msra.mxu0 %v2180
        %2209 = vmatprep.subr.bf16.mxu0 0
        %2210 = vmatpush1.bf16.msra.mxu0 %v2181
        %2211 = vmatprep.subr.bf16.mxu0 0
        %2212 = vmatpush1.bf16.msra.mxu0 %v2182
        %2213 = vmatprep.subr.bf16.mxu0 0
        %2214 = vmatpush1.bf16.msra.mxu0 %v2183
        %2215 = vmatprep.subr.bf16.mxu0 0
        %2216 = vmatpush1.bf16.msra.mxu0 %v2184
        %2217 = vmatprep.subr.bf16.mxu0 0
        %2218 = vmatpush1.bf16.msra.mxu0 0
        %2219 = vmatprep.subr.bf16.mxu0 0
        %2220 = vmatpush1.bf16.msra.mxu0 0
        %2221 = vmatprep.subr.bf16.mxu0 0
        %2222 = vmatpush1.bf16.msra.mxu0 0
        %2223 = vmatprep.subr.bf16.mxu0 0
        %2224 = vmatpush1.bf16.msra.mxu0 0
        %2225 = vmatprep.subr.bf16.mxu0 0
        %2226 = vmatpush1.bf16.msra.mxu0 0
        %2227 = vmatprep.subr.bf16.mxu0 0
        %2228 = vmatpush1.bf16.msra.mxu0 0
        %2229 = vmatprep.subr.bf16.mxu0 0
        %2230 = vmatpush1.bf16.msra.mxu0 0
        %2231 = vmatprep.subr.bf16.mxu0 0
        %2232 = vmatpush1.bf16.msra.mxu0 0
        %2233 = vmatprep.mubr.bf16.mxu0 0
        %2234 = vmatmul.mubr.bf16.gmra.mrb[0].mxu0 %v605
        %v2235 = vpop.f32.mrb[0].mxu0
        %v2236 = vadd.f32 0.0, %v2235
        %v2237 = vpop.f32.mrb[0].mxu0
        %v2238 = vpop.f32.mrb[0].mxu0
        %v2239 = vadd.f32 0.0, %v2238
        %v2240 = vpop.f32.mrb[0].mxu0
        %2241 = vmatprep.mubr.bf16.mxu0 0
        %2242 = vmatmul.mubr.bf16.gmra.mrb[0].mxu0 %v606
        %v2243 = vpop.f32.mrb[0].mxu0
        %v2244 = vadd.f32 0.0, %v2243
        %v2245 = vpop.f32.mrb[0].mxu0
        %v2246 = vpop.f32.mrb[0].mxu0
        %v2247 = vadd.f32 0.0, %v2246
        %v2248 = vpop.f32.mrb[0].mxu0
        %2249 = vmatprep.mubr.bf16.mxu0 0
        %2250 = vmatmul.mubr.bf16.gmra.mrb[0].mxu0 %v607
        %v2251 = vpop.f32.mrb[0].mxu0
        %v2252 = vadd.f32 0.0, %v2251
        %v2253 = vpop.f32.mrb[0].mxu0
        %v2254 = vpop.f32.mrb[0].mxu0
        %v2255 = vadd.f32 0.0, %v2254
        %v2256 = vpop.f32.mrb[0].mxu0
        %2257 = vmatprep.mubr.bf16.mxu0 0
        %2258 = vmatmul.mubr.bf16.gmra.mrb[0].mxu0 %v608
        %v2259 = vpop.f32.mrb[0].mxu0
        %v2260 = vadd.f32 0.0, %v2259
        %v2261 = vpop.f32.mrb[0].mxu0
        %v2262 = vpop.f32.mrb[0].mxu0
        %v2263 = vadd.f32 0.0, %v2262
        %v2264 = vpop.f32.mrb[0].mxu0
        %2265 = vmatprep.mubr.bf16.mxu0 0
        %2266 = vmatmul.mubr.bf16.gmra.mrb[0].mxu0 %v609
        %v2267 = vpop.f32.mrb[0].mxu0
        %v2268 = vadd.f32 0.0, %v2267
        %v2269 = vpop.f32.mrb[0].mxu0
        %v2270 = vpop.f32.mrb[0].mxu0
        %v2271 = vadd.f32 0.0, %v2270
        %v2272 = vpop.f32.mrb[0].mxu0
        %2273 = vmatprep.mubr.bf16.mxu0 0
        %2274 = vmatmul.mubr.bf16.gmra.mrb[0].mxu0 %v610
        %v2275 = vpop.f32.mrb[0].mxu0
        %v2276 = vadd.f32 0.0, %v2275
        %v2277 = vpop.f32.mrb[0].mxu0
        %v2278 = vpop.f32.mrb[0].mxu0
        %v2279 = vadd.f32 0.0, %v2278
        %v2280 = vpop.f32.mrb[0].mxu0
        %2281 = vmatprep.mubr.bf16.mxu0 0
        %2282 = vmatmul.mubr.bf16.gmra.mrb[0].mxu0 %v611
        %v2283 = vpop.f32.mrb[0].mxu0
        %v2284 = vadd.f32 0.0, %v2283
        %v2285 = vpop.f32.mrb[0].mxu0
        %v2286 = vpop.f32.mrb[0].mxu0
        %v2287 = vadd.f32 0.0, %v2286
        %v2288 = vpop.f32.mrb[0].mxu0
        %2289 = vmatprep.mubr.bf16.mxu0 0
        %2290 = vmatmul.mubr.bf16.gmra.mrb[0].mxu0 %v612
        %v2291 = vpop.f32.mrb[0].mxu0
        %v2292 = vadd.f32 0.0, %v2291
        %v2293 = vpop.f32.mrb[0].mxu0
        %v2294 = vpop.f32.mrb[0].mxu0
        %v2295 = vadd.f32 0.0, %v2294
        %v2296 = vpop.f32.mrb[0].mxu0
        %2297 = vdwg.mxu0
        %v2298 = vpack.c.bf16 %v2239, %v2236
        %v2299 = vpack.c.bf16 %v2247, %v2244
        %v2300 = vpack.c.bf16 %v2255, %v2252
        %v2301 = vpack.c.bf16 %v2263, %v2260
        %v2302 = vpack.c.bf16 %v2271, %v2268
        %v2303 = vpack.c.bf16 %v2279, %v2276
        %v2304 = vpack.c.bf16 %v2287, %v2284
        %v2305 = vpack.c.bf16 %v2295, %v2292
        %s2306 = scalar_lea.vmem [#allocation10], 64
        %v2307 = vld [vmem:[%s2306] sm:$0xf]
        %v2308 = vld [vmem:[%s2306 + $0x4] sm:$0xf]
        %v2309 = vld [vmem:[%s2306 + $0x8] sm:$0xf]
        %v2310 = vld [vmem:[%s2306 + $0xc] sm:$0xf]
        %v2311 = vld [vmem:[%s2306 + $0x10] sm:$0xf]
        %v2312 = vld [vmem:[%s2306 + $0x14] sm:$0xf]
        %v2313 = vld [vmem:[%s2306 + $0x18] sm:$0xf]
        %v2314 = vld [vmem:[%s2306 + $0x1c] sm:$0xf]
        %v2315 = vld [vmem:[%s2306 + $0x20] sm:$0xf]
        %v2316 = vld [vmem:[%s2306 + $0x24] sm:$0xf]
        %v2317 = vld [vmem:[%s2306 + $0x28] sm:$0xf]
        %v2318 = vld [vmem:[%s2306 + $0x2c] sm:$0xf]
        %v2319 = vld [vmem:[%s2306 + $0x30] sm:$0xf]
        %v2320 = vld [vmem:[%s2306 + $0x34] sm:$0xf]
        %v2321 = vld [vmem:[%s2306 + $0x38] sm:$0xf]
        %v2322 = vld [vmem:[%s2306 + $0x3c] sm:$0xf]
        %v2339 = vunpack.c.l.b16 %v2307
        %v2340 = vunpack.c.l.b16 %v2308
        %v2341 = vunpack.c.l.b16 %v2309
        %v2342 = vunpack.c.l.b16 %v2310
        %v2343 = vunpack.c.l.b16 %v2311
        %v2344 = vunpack.c.l.b16 %v2312
        %v2345 = vunpack.c.l.b16 %v2313
        %v2346 = vunpack.c.l.b16 %v2314
        %v2347 = vunpack.c.l.b16 %v2315
        %v2348 = vunpack.c.l.b16 %v2316
        %v2349 = vunpack.c.l.b16 %v2317
        %v2350 = vunpack.c.l.b16 %v2318
        %v2351 = vunpack.c.l.b16 %v2319
        %v2352 = vunpack.c.l.b16 %v2320
        %v2353 = vunpack.c.l.b16 %v2321
        %v2354 = vunpack.c.l.b16 %v2322
        %v2355 = vpack.c.b16 %v2340, %v2339
        %v2356 = vpack.c.b16 %v2342, %v2341
        %v2357 = vpack.c.b16 %v2344, %v2343
        %v2358 = vpack.c.b16 %v2346, %v2345
        %v2359 = vpack.c.b16 %v2348, %v2347
        %v2360 = vpack.c.b16 %v2350, %v2349
        %v2361 = vpack.c.b16 %v2352, %v2351
        %v2362 = vpack.c.b16 %v2354, %v2353
        %2371 = vmatprep.subr.bf16.mxu0 0
        %2372 = vmatpush1.bf16.msra.mxu0 %v2355
        %2373 = vmatprep.subr.bf16.mxu0 0
        %2374 = vmatpush1.bf16.msra.mxu0 %v2356
        %2375 = vmatprep.subr.bf16.mxu0 0
        %2376 = vmatpush1.bf16.msra.mxu0 %v2357
        %2377 = vmatprep.subr.bf16.mxu0 0
        %2378 = vmatpush1.bf16.msra.mxu0 %v2358
        %2379 = vmatprep.subr.bf16.mxu0 0
        %2380 = vmatpush1.bf16.msra.mxu0 %v2359
        %2381 = vmatprep.subr.bf16.mxu0 0
        %2382 = vmatpush1.bf16.msra.mxu0 %v2360
        %2383 = vmatprep.subr.bf16.mxu0 0
        %2384 = vmatpush1.bf16.msra.mxu0 %v2361
        %2385 = vmatprep.subr.bf16.mxu0 0
        %2386 = vmatpush1.bf16.msra.mxu0 %v2362
        %2387 = vmatprep.subr.bf16.mxu0 0
        %2388 = vmatpush1.bf16.msra.mxu0 0
        %2389 = vmatprep.subr.bf16.mxu0 0
        %2390 = vmatpush1.bf16.msra.mxu0 0
        %2391 = vmatprep.subr.bf16.mxu0 0
        %2392 = vmatpush1.bf16.msra.mxu0 0
        %2393 = vmatprep.subr.bf16.mxu0 0
        %2394 = vmatpush1.bf16.msra.mxu0 0
        %2395 = vmatprep.subr.bf16.mxu0 0
        %2396 = vmatpush1.bf16.msra.mxu0 0
        %2397 = vmatprep.subr.bf16.mxu0 0
        %2398 = vmatpush1.bf16.msra.mxu0 0
        %2399 = vmatprep.subr.bf16.mxu0 0
        %2400 = vmatpush1.bf16.msra.mxu0 0
        %2401 = vmatprep.subr.bf16.mxu0 0
        %2402 = vmatpush1.bf16.msra.mxu0 0
        %2403 = vmatprep.mubr.bf16.mxu0 0
        %2404 = vmatmul.mubr.bf16.gmra.mrb[0].mxu0 %v2298
        %v2405 = vpop.f32.mrb[0].mxu0
        %v2406 = vadd.f32 0.0, %v2405
        %v2407 = vpop.f32.mrb[0].mxu0
        %v2408 = vpop.f32.mrb[0].mxu0
        %v2409 = vadd.f32 0.0, %v2408
        %v2410 = vpop.f32.mrb[0].mxu0
        %2411 = vmatprep.mubr.bf16.mxu0 0
        %2412 = vmatmul.mubr.bf16.gmra.mrb[0].mxu0 %v2299
        %v2413 = vpop.f32.mrb[0].mxu0
        %v2414 = vadd.f32 0.0, %v2413
        %v2415 = vpop.f32.mrb[0].mxu0
        %v2416 = vpop.f32.mrb[0].mxu0
        %v2417 = vadd.f32 0.0, %v2416
        %v2418 = vpop.f32.mrb[0].mxu0
        %2419 = vmatprep.mubr.bf16.mxu0 0
        %2420 = vmatmul.mubr.bf16.gmra.mrb[0].mxu0 %v2300
        %v2421 = vpop.f32.mrb[0].mxu0
        %v2422 = vadd.f32 0.0, %v2421
        %v2423 = vpop.f32.mrb[0].mxu0
        %v2424 = vpop.f32.mrb[0].mxu0
        %v2425 = vadd.f32 0.0, %v2424
        %v2426 = vpop.f32.mrb[0].mxu0
        %2427 = vmatprep.mubr.bf16.mxu0 0
        %2428 = vmatmul.mubr.bf16.gmra.mrb[0].mxu0 %v2301
        %v2429 = vpop.f32.mrb[0].mxu0
        %v2430 = vadd.f32 0.0, %v2429
        %v2431 = vpop.f32.mrb[0].mxu0
        %v2432 = vpop.f32.mrb[0].mxu0
        %v2433 = vadd.f32 0.0, %v2432
        %v2434 = vpop.f32.mrb[0].mxu0
        %2435 = vmatprep.mubr.bf16.mxu0 0
        %2436 = vmatmul.mubr.bf16.gmra.mrb[0].mxu0 %v2302
        %v2437 = vpop.f32.mrb[0].mxu0
        %v2438 = vadd.f32 0.0, %v2437
        %v2439 = vpop.f32.mrb[0].mxu0
        %v2440 = vpop.f32.mrb[0].mxu0
        %v2441 = vadd.f32 0.0, %v2440
        %v2442 = vpop.f32.mrb[0].mxu0
        %2443 = vmatprep.mubr.bf16.mxu0 0
        %2444 = vmatmul.mubr.bf16.gmra.mrb[0].mxu0 %v2303
        %v2445 = vpop.f32.mrb[0].mxu0
        %v2446 = vadd.f32 0.0, %v2445
        %v2447 = vpop.f32.mrb[0].mxu0
        %v2448 = vpop.f32.mrb[0].mxu0
        %v2449 = vadd.f32 0.0, %v2448
        %v2450 = vpop.f32.mrb[0].mxu0
        %2451 = vmatprep.mubr.bf16.mxu0 0
        %2452 = vmatmul.mubr.bf16.gmra.mrb[0].mxu0 %v2304
        %v2453 = vpop.f32.mrb[0].mxu0
        %v2454 = vadd.f32 0.0, %v2453
        %v2455 = vpop.f32.mrb[0].mxu0
        %v2456 = vpop.f32.mrb[0].mxu0
        %v2457 = vadd.f32 0.0, %v2456
        %v2458 = vpop.f32.mrb[0].mxu0
        %2459 = vmatprep.mubr.bf16.mxu0 0
        %2460 = vmatmul.mubr.bf16.gmra.mrb[0].mxu0 %v2305
        %v2461 = vpop.f32.mrb[0].mxu0
        %v2462 = vadd.f32 0.0, %v2461
        %v2463 = vpop.f32.mrb[0].mxu0
        %v2464 = vpop.f32.mrb[0].mxu0
        %v2465 = vadd.f32 0.0, %v2464
        %v2466 = vpop.f32.mrb[0].mxu0
        %2467 = vdwg.mxu0
        %v2484 = vunpack.c.l.b16 %v2185
        %v2485 = vunpack.c.l.b16 %v2186
        %v2486 = vunpack.c.l.b16 %v2187
        %v2487 = vunpack.c.l.b16 %v2188
        %v2488 = vunpack.c.l.b16 %v2189
        %v2489 = vunpack.c.l.b16 %v2190
        %v2490 = vunpack.c.l.b16 %v2191
        %v2491 = vunpack.c.l.b16 %v2192
        %v2492 = vunpack.c.l.b16 %v2193
        %v2493 = vunpack.c.l.b16 %v2194
        %v2494 = vunpack.c.l.b16 %v2195
        %v2495 = vunpack.c.l.b16 %v2196
        %v2496 = vunpack.c.l.b16 %v2197
        %v2497 = vunpack.c.l.b16 %v2198
        %v2498 = vunpack.c.l.b16 %v2199
        %v2499 = vunpack.c.l.b16 %v2200
        %v2500 = vpack.c.b16 %v2485, %v2484
        %v2501 = vpack.c.b16 %v2487, %v2486
        %v2502 = vpack.c.b16 %v2489, %v2488
        %v2503 = vpack.c.b16 %v2491, %v2490
        %v2504 = vpack.c.b16 %v2493, %v2492
        %v2505 = vpack.c.b16 %v2495, %v2494
        %v2506 = vpack.c.b16 %v2497, %v2496
        %v2507 = vpack.c.b16 %v2499, %v2498
        %2516 = vmatprep.subr.bf16.mxu0 0
        %2517 = vmatpush1.bf16.msra.mxu0 %v2500
        %2518 = vmatprep.subr.bf16.mxu0 0
        %2519 = vmatpush1.bf16.msra.mxu0 %v2501
        %2520 = vmatprep.subr.bf16.mxu0 0
        %2521 = vmatpush1.bf16.msra.mxu0 %v2502
        %2522 = vmatprep.subr.bf16.mxu0 0
        %2523 = vmatpush1.bf16.msra.mxu0 %v2503
        %2524 = vmatprep.subr.bf16.mxu0 0
        %2525 = vmatpush1.bf16.msra.mxu0 %v2504
        %2526 = vmatprep.subr.bf16.mxu0 0
        %2527 = vmatpush1.bf16.msra.mxu0 %v2505
        %2528 = vmatprep.subr.bf16.mxu0 0
        %2529 = vmatpush1.bf16.msra.mxu0 %v2506
        %2530 = vmatprep.subr.bf16.mxu0 0
        %2531 = vmatpush1.bf16.msra.mxu0 %v2507
        %2532 = vmatprep.subr.bf16.mxu0 0
        %2533 = vmatpush1.bf16.msra.mxu0 0
        %2534 = vmatprep.subr.bf16.mxu0 0
        %2535 = vmatpush1.bf16.msra.mxu0 0
        %2536 = vmatprep.subr.bf16.mxu0 0
        %2537 = vmatpush1.bf16.msra.mxu0 0
        %2538 = vmatprep.subr.bf16.mxu0 0
        %2539 = vmatpush1.bf16.msra.mxu0 0
        %2540 = vmatprep.subr.bf16.mxu0 0
        %2541 = vmatpush1.bf16.msra.mxu0 0
        %2542 = vmatprep.subr.bf16.mxu0 0
        %2543 = vmatpush1.bf16.msra.mxu0 0
        %2544 = vmatprep.subr.bf16.mxu0 0
        %2545 = vmatpush1.bf16.msra.mxu0 0
        %2546 = vmatprep.subr.bf16.mxu0 0
        %2547 = vmatpush1.bf16.msra.mxu0 0
        %2548 = vmatprep.mubr.bf16.mxu0 0
        %2549 = vmatmul.mubr.bf16.gmra.mrb[0].mxu0 %v2177
        %v2550 = vpop.f32.mrb[0].mxu0
        %v2551 = vadd.f32 %v2406, %v2550
        %v2552 = vpop.f32.mrb[0].mxu0
        %v2553 = vpop.f32.mrb[0].mxu0
        %v2554 = vadd.f32 %v2409, %v2553
        %v2555 = vpop.f32.mrb[0].mxu0
        %2556 = vmatprep.mubr.bf16.mxu0 0
        %2557 = vmatmul.mubr.bf16.gmra.mrb[0].mxu0 %v2178
        %v2558 = vpop.f32.mrb[0].mxu0
        %v2559 = vadd.f32 %v2414, %v2558
        %v2560 = vpop.f32.mrb[0].mxu0
        %v2561 = vpop.f32.mrb[0].mxu0
        %v2562 = vadd.f32 %v2417, %v2561
        %v2563 = vpop.f32.mrb[0].mxu0
        %2564 = vmatprep.mubr.bf16.mxu0 0
        %2565 = vmatmul.mubr.bf16.gmra.mrb[0].mxu0 %v2179
        %v2566 = vpop.f32.mrb[0].mxu0
        %v2567 = vadd.f32 %v2422, %v2566
        %v2568 = vpop.f32.mrb[0].mxu0
        %v2569 = vpop.f32.mrb[0].mxu0
        %v2570 = vadd.f32 %v2425, %v2569
        %v2571 = vpop.f32.mrb[0].mxu0
        %2572 = vmatprep.mubr.bf16.mxu0 0
        %2573 = vmatmul.mubr.bf16.gmra.mrb[0].mxu0 %v2180
        %v2574 = vpop.f32.mrb[0].mxu0
        %v2575 = vadd.f32 %v2430, %v2574
        %v2576 = vpop.f32.mrb[0].mxu0
        %v2577 = vpop.f32.mrb[0].mxu0
        %v2578 = vadd.f32 %v2433, %v2577
        %v2579 = vpop.f32.mrb[0].mxu0
        %2580 = vmatprep.mubr.bf16.mxu0 0
        %2581 = vmatmul.mubr.bf16.gmra.mrb[0].mxu0 %v2181
        %v2582 = vpop.f32.mrb[0].mxu0
        %v2583 = vadd.f32 %v2438, %v2582
        %v2584 = vpop.f32.mrb[0].mxu0
        %v2585 = vpop.f32.mrb[0].mxu0
        %v2586 = vadd.f32 %v2441, %v2585
        %v2587 = vpop.f32.mrb[0].mxu0
        %2588 = vmatprep.mubr.bf16.mxu0 0
        %2589 = vmatmul.mubr.bf16.gmra.mrb[0].mxu0 %v2182
        %v2590 = vpop.f32.mrb[0].mxu0
        %v2591 = vadd.f32 %v2446, %v2590
        %v2592 = vpop.f32.mrb[0].mxu0
        %v2593 = vpop.f32.mrb[0].mxu0
        %v2594 = vadd.f32 %v2449, %v2593
        %v2595 = vpop.f32.mrb[0].mxu0
        %2596 = vmatprep.mubr.bf16.mxu0 0
        %2597 = vmatmul.mubr.bf16.gmra.mrb[0].mxu0 %v2183
        %v2598 = vpop.f32.mrb[0].mxu0
        %v2599 = vadd.f32 %v2454, %v2598
        %v2600 = vpop.f32.mrb[0].mxu0
        %v2601 = vpop.f32.mrb[0].mxu0
        %v2602 = vadd.f32 %v2457, %v2601
        %v2603 = vpop.f32.mrb[0].mxu0
        %2604 = vmatprep.mubr.bf16.mxu0 0
        %2605 = vmatmul.mubr.bf16.gmra.mrb[0].mxu0 %v2184
        %v2606 = vpop.f32.mrb[0].mxu0
        %v2607 = vadd.f32 %v2462, %v2606
        %v2608 = vpop.f32.mrb[0].mxu0
        %v2609 = vpop.f32.mrb[0].mxu0
        %v2610 = vadd.f32 %v2465, %v2609
        %v2611 = vpop.f32.mrb[0].mxu0
        %2612 = vdwg.mxu0
        %2613 = vmatprep.subr.bf16.mxu0 0
        %2614 = vmatpush1.bf16.msra.mxu0 %v2298
        %2615 = vmatprep.subr.bf16.mxu0 0
        %2616 = vmatpush1.bf16.msra.mxu0 %v2299
        %2617 = vmatprep.subr.bf16.mxu0 0
        %2618 = vmatpush1.bf16.msra.mxu0 %v2300
        %2619 = vmatprep.subr.bf16.mxu0 0
        %2620 = vmatpush1.bf16.msra.mxu0 %v2301
        %2621 = vmatprep.subr.bf16.mxu0 0
        %2622 = vmatpush1.bf16.msra.mxu0 %v2302
        %2623 = vmatprep.subr.bf16.mxu0 0
        %2624 = vmatpush1.bf16.msra.mxu0 %v2303
        %2625 = vmatprep.subr.bf16.mxu0 0
        %2626 = vmatpush1.bf16.msra.mxu0 %v2304
        %2627 = vmatprep.subr.bf16.mxu0 0
        %2628 = vmatpush1.bf16.msra.mxu0 %v2305
        %2629 = vmatprep.subr.bf16.mxu0 0
        %2630 = vmatpush1.bf16.msra.mxu0 0
        %2631 = vmatprep.subr.bf16.mxu0 0
        %2632 = vmatpush1.bf16.msra.mxu0 0
        %2633 = vmatprep.subr.bf16.mxu0 0
        %2634 = vmatpush1.bf16.msra.mxu0 0
        %2635 = vmatprep.subr.bf16.mxu0 0
        %2636 = vmatpush1.bf16.msra.mxu0 0
        %2637 = vmatprep.subr.bf16.mxu0 0
        %2638 = vmatpush1.bf16.msra.mxu0 0
        %2639 = vmatprep.subr.bf16.mxu0 0
        %2640 = vmatpush1.bf16.msra.mxu0 0
        %2641 = vmatprep.subr.bf16.mxu0 0
        %2642 = vmatpush1.bf16.msra.mxu0 0
        %2643 = vmatprep.subr.bf16.mxu0 0
        %2644 = vmatpush1.bf16.msra.mxu0 0
        %2645 = vmatprep.mubr.bf16.mxu0 0
        %2646 = vmatmul.mubr.bf16.gmra.mrb[0].mxu0 %v605
        %v2647 = vpop.f32.mrb[0].mxu0
        %v2648 = vadd.f32 0.0, %v2647
        %v2649 = vpop.f32.mrb[0].mxu0
        %v2650 = vpop.f32.mrb[0].mxu0
        %v2651 = vadd.f32 0.0, %v2650
        %v2652 = vpop.f32.mrb[0].mxu0
        %2653 = vmatprep.mubr.bf16.mxu0 0
        %2654 = vmatmul.mubr.bf16.gmra.mrb[0].mxu0 %v606
        %v2655 = vpop.f32.mrb[0].mxu0
        %v2656 = vadd.f32 0.0, %v2655
        %v2657 = vpop.f32.mrb[0].mxu0
        %v2658 = vpop.f32.mrb[0].mxu0
        %v2659 = vadd.f32 0.0, %v2658
        %v2660 = vpop.f32.mrb[0].mxu0
        %2661 = vmatprep.mubr.bf16.mxu0 0
        %2662 = vmatmul.mubr.bf16.gmra.mrb[0].mxu0 %v607
        %v2663 = vpop.f32.mrb[0].mxu0
        %v2664 = vadd.f32 0.0, %v2663
        %v2665 = vpop.f32.mrb[0].mxu0
        %v2666 = vpop.f32.mrb[0].mxu0
        %v2667 = vadd.f32 0.0, %v2666
        %v2668 = vpop.f32.mrb[0].mxu0
        %2669 = vmatprep.mubr.bf16.mxu0 0
        %2670 = vmatmul.mubr.bf16.gmra.mrb[0].mxu0 %v608
        %v2671 = vpop.f32.mrb[0].mxu0
        %v2672 = vadd.f32 0.0, %v2671
        %v2673 = vpop.f32.mrb[0].mxu0
        %v2674 = vpop.f32.mrb[0].mxu0
        %v2675 = vadd.f32 0.0, %v2674
        %v2676 = vpop.f32.mrb[0].mxu0
        %2677 = vmatprep.mubr.bf16.mxu0 0
        %2678 = vmatmul.mubr.bf16.gmra.mrb[0].mxu0 %v609
        %v2679 = vpop.f32.mrb[0].mxu0
        %v2680 = vadd.f32 0.0, %v2679
        %v2681 = vpop.f32.mrb[0].mxu0
        %v2682 = vpop.f32.mrb[0].mxu0
        %v2683 = vadd.f32 0.0, %v2682
        %v2684 = vpop.f32.mrb[0].mxu0
        %2685 = vmatprep.mubr.bf16.mxu0 0
        %2686 = vmatmul.mubr.bf16.gmra.mrb[0].mxu0 %v610
        %v2687 = vpop.f32.mrb[0].mxu0
        %v2688 = vadd.f32 0.0, %v2687
        %v2689 = vpop.f32.mrb[0].mxu0
        %v2690 = vpop.f32.mrb[0].mxu0
        %v2691 = vadd.f32 0.0, %v2690
        %v2692 = vpop.f32.mrb[0].mxu0
        %2693 = vmatprep.mubr.bf16.mxu0 0
        %2694 = vmatmul.mubr.bf16.gmra.mrb[0].mxu0 %v611
        %v2695 = vpop.f32.mrb[0].mxu0
        %v2696 = vadd.f32 0.0, %v2695
        %v2697 = vpop.f32.mrb[0].mxu0
        %v2698 = vpop.f32.mrb[0].mxu0
        %v2699 = vadd.f32 0.0, %v2698
        %v2700 = vpop.f32.mrb[0].mxu0
        %2701 = vmatprep.mubr.bf16.mxu0 0
        %2702 = vmatmul.mubr.bf16.gmra.mrb[0].mxu0 %v612
        %v2703 = vpop.f32.mrb[0].mxu0
        %v2704 = vadd.f32 0.0, %v2703
        %v2705 = vpop.f32.mrb[0].mxu0
        %v2706 = vpop.f32.mrb[0].mxu0
        %v2707 = vadd.f32 0.0, %v2706
        %v2708 = vpop.f32.mrb[0].mxu0
        %2709 = vdwg.mxu0
        %v2710 = vmul.f32 %v2648, 2.0
        %v2711 = vmul.f32 %v2651, 2.0
        %v2712 = vmul.f32 %v2656, 2.0
        %v2713 = vmul.f32 %v2659, 2.0
        %v2714 = vmul.f32 %v2664, 2.0
        %v2715 = vmul.f32 %v2667, 2.0
        %v2716 = vmul.f32 %v2672, 2.0
        %v2717 = vmul.f32 %v2675, 2.0
        %v2718 = vmul.f32 %v2680, 2.0
        %v2719 = vmul.f32 %v2683, 2.0
        %v2720 = vmul.f32 %v2688, 2.0
        %v2721 = vmul.f32 %v2691, 2.0
        %v2722 = vmul.f32 %v2696, 2.0
        %v2723 = vmul.f32 %v2699, 2.0
        %v2724 = vmul.f32 %v2704, 2.0
        %v2725 = vmul.f32 %v2707, 2.0
        %v2726 = vsub.f32 %v2710, %v2161
        %v2727 = vsub.f32 %v2711, %v2162
        %v2728 = vsub.f32 %v2712, %v2163
        %v2729 = vsub.f32 %v2713, %v2164
        %v2730 = vsub.f32 %v2714, %v2165
        %v2731 = vsub.f32 %v2715, %v2166
        %v2732 = vsub.f32 %v2716, %v2167
        %v2733 = vsub.f32 %v2717, %v2168
        %v2734 = vsub.f32 %v2718, %v2169
        %v2735 = vsub.f32 %v2719, %v2170
        %v2736 = vsub.f32 %v2720, %v2171
        %v2737 = vsub.f32 %v2721, %v2172
        %v2738 = vsub.f32 %v2722, %v2173
        %v2739 = vsub.f32 %v2723, %v2174
        %v2740 = vsub.f32 %v2724, %v2175
        %v2741 = vsub.f32 %v2725, %v2176
        %v2742 = vpack.c.bf16 %v2727, %v2726
        %v2743 = vpack.c.bf16 %v2729, %v2728
        %v2744 = vpack.c.bf16 %v2731, %v2730
        %v2745 = vpack.c.bf16 %v2733, %v2732
        %v2746 = vpack.c.bf16 %v2735, %v2734
        %v2747 = vpack.c.bf16 %v2737, %v2736
        %v2748 = vpack.c.bf16 %v2739, %v2738
        %v2749 = vpack.c.bf16 %v2741, %v2740
        %s2750 = scalar_lea.vmem [#allocation10], 128
        %v2751 = vld [vmem:[%s2750] sm:$0xf]
        %v2752 = vld [vmem:[%s2750 + $0x4] sm:$0xf]
        %v2753 = vld [vmem:[%s2750 + $0x8] sm:$0xf]
        %v2754 = vld [vmem:[%s2750 + $0xc] sm:$0xf]
        %v2755 = vld [vmem:[%s2750 + $0x10] sm:$0xf]
        %v2756 = vld [vmem:[%s2750 + $0x14] sm:$0xf]
        %v2757 = vld [vmem:[%s2750 + $0x18] sm:$0xf]
        %v2758 = vld [vmem:[%s2750 + $0x1c] sm:$0xf]
        %v2759 = vld [vmem:[%s2750 + $0x20] sm:$0xf]
        %v2760 = vld [vmem:[%s2750 + $0x24] sm:$0xf]
        %v2761 = vld [vmem:[%s2750 + $0x28] sm:$0xf]
        %v2762 = vld [vmem:[%s2750 + $0x2c] sm:$0xf]
        %v2763 = vld [vmem:[%s2750 + $0x30] sm:$0xf]
        %v2764 = vld [vmem:[%s2750 + $0x34] sm:$0xf]
        %v2765 = vld [vmem:[%s2750 + $0x38] sm:$0xf]
        %v2766 = vld [vmem:[%s2750 + $0x3c] sm:$0xf]
        %v2783 = vunpack.c.l.b16 %v2751
        %v2784 = vunpack.c.l.b16 %v2752
        %v2785 = vunpack.c.l.b16 %v2753
        %v2786 = vunpack.c.l.b16 %v2754
        %v2787 = vunpack.c.l.b16 %v2755
        %v2788 = vunpack.c.l.b16 %v2756
        %v2789 = vunpack.c.l.b16 %v2757
        %v2790 = vunpack.c.l.b16 %v2758
        %v2791 = vunpack.c.l.b16 %v2759
        %v2792 = vunpack.c.l.b16 %v2760
        %v2793 = vunpack.c.l.b16 %v2761
        %v2794 = vunpack.c.l.b16 %v2762
        %v2795 = vunpack.c.l.b16 %v2763
        %v2796 = vunpack.c.l.b16 %v2764
        %v2797 = vunpack.c.l.b16 %v2765
        %v2798 = vunpack.c.l.b16 %v2766
        %v2799 = vpack.c.b16 %v2784, %v2783
        %v2800 = vpack.c.b16 %v2786, %v2785
        %v2801 = vpack.c.b16 %v2788, %v2787
        %v2802 = vpack.c.b16 %v2790, %v2789
        %v2803 = vpack.c.b16 %v2792, %v2791
        %v2804 = vpack.c.b16 %v2794, %v2793
        %v2805 = vpack.c.b16 %v2796, %v2795
        %v2806 = vpack.c.b16 %v2798, %v2797
        %2815 = vmatprep.subr.bf16.mxu0 0
        %2816 = vmatpush1.bf16.msra.mxu0 %v2799
        %2817 = vmatprep.subr.bf16.mxu0 0
        %2818 = vmatpush1.bf16.msra.mxu0 %v2800
        %2819 = vmatprep.subr.bf16.mxu0 0
        %2820 = vmatpush1.bf16.msra.mxu0 %v2801
        %2821 = vmatprep.subr.bf16.mxu0 0
        %2822 = vmatpush1.bf16.msra.mxu0 %v2802
        %2823 = vmatprep.subr.bf16.mxu0 0
        %2824 = vmatpush1.bf16.msra.mxu0 %v2803
        %2825 = vmatprep.subr.bf16.mxu0 0
        %2826 = vmatpush1.bf16.msra.mxu0 %v2804
        %2827 = vmatprep.subr.bf16.mxu0 0
        %2828 = vmatpush1.bf16.msra.mxu0 %v2805
        %2829 = vmatprep.subr.bf16.mxu0 0
        %2830 = vmatpush1.bf16.msra.mxu0 %v2806
        %2831 = vmatprep.subr.bf16.mxu0 0
        %2832 = vmatpush1.bf16.msra.mxu0 0
        %2833 = vmatprep.subr.bf16.mxu0 0
        %2834 = vmatpush1.bf16.msra.mxu0 0
        %2835 = vmatprep.subr.bf16.mxu0 0
        %2836 = vmatpush1.bf16.msra.mxu0 0
        %2837 = vmatprep.subr.bf16.mxu0 0
        %2838 = vmatpush1.bf16.msra.mxu0 0
        %2839 = vmatprep.subr.bf16.mxu0 0
        %2840 = vmatpush1.bf16.msra.mxu0 0
        %2841 = vmatprep.subr.bf16.mxu0 0
        %2842 = vmatpush1.bf16.msra.mxu0 0
        %2843 = vmatprep.subr.bf16.mxu0 0
        %2844 = vmatpush1.bf16.msra.mxu0 0
        %2845 = vmatprep.subr.bf16.mxu0 0
        %2846 = vmatpush1.bf16.msra.mxu0 0
        %2847 = vmatprep.mubr.bf16.mxu0 0
        %2848 = vmatmul.mubr.bf16.gmra.mrb[0].mxu0 %v2742
        %v2849 = vpop.f32.mrb[0].mxu0
        %v2850 = vadd.f32 0.0, %v2849
        %v2851 = vpop.f32.mrb[0].mxu0
        %v2852 = vpop.f32.mrb[0].mxu0
        %v2853 = vadd.f32 0.0, %v2852
        %v2854 = vpop.f32.mrb[0].mxu0
        %2855 = vmatprep.mubr.bf16.mxu0 0
        %2856 = vmatmul.mubr.bf16.gmra.mrb[0].mxu0 %v2743
        %v2857 = vpop.f32.mrb[0].mxu0
        %v2858 = vadd.f32 0.0, %v2857
        %v2859 = vpop.f32.mrb[0].mxu0
        %v2860 = vpop.f32.mrb[0].mxu0
        %v2861 = vadd.f32 0.0, %v2860
        %v2862 = vpop.f32.mrb[0].mxu0
        %2863 = vmatprep.mubr.bf16.mxu0 0
        %2864 = vmatmul.mubr.bf16.gmra.mrb[0].mxu0 %v2744
        %v2865 = vpop.f32.mrb[0].mxu0
        %v2866 = vadd.f32 0.0, %v2865
        %v2867 = vpop.f32.mrb[0].mxu0
        %v2868 = vpop.f32.mrb[0].mxu0
        %v2869 = vadd.f32 0.0, %v2868
        %v2870 = vpop.f32.mrb[0].mxu0
        %2871 = vmatprep.mubr.bf16.mxu0 0
        %2872 = vmatmul.mubr.bf16.gmra.mrb[0].mxu0 %v2745
        %v2873 = vpop.f32.mrb[0].mxu0
        %v2874 = vadd.f32 0.0, %v2873
        %v2875 = vpop.f32.mrb[0].mxu0
        %v2876 = vpop.f32.mrb[0].mxu0
        %v2877 = vadd.f32 0.0, %v2876
        %v2878 = vpop.f32.mrb[0].mxu0
        %2879 = vmatprep.mubr.bf16.mxu0 0
        %2880 = vmatmul.mubr.bf16.gmra.mrb[0].mxu0 %v2746
        %v2881 = vpop.f32.mrb[0].mxu0
        %v2882 = vadd.f32 0.0, %v2881
        %v2883 = vpop.f32.mrb[0].mxu0
        %v2884 = vpop.f32.mrb[0].mxu0
        %v2885 = vadd.f32 0.0, %v2884
        %v2886 = vpop.f32.mrb[0].mxu0
        %2887 = vmatprep.mubr.bf16.mxu0 0
        %2888 = vmatmul.mubr.bf16.gmra.mrb[0].mxu0 %v2747
        %v2889 = vpop.f32.mrb[0].mxu0
        %v2890 = vadd.f32 0.0, %v2889
        %v2891 = vpop.f32.mrb[0].mxu0
        %v2892 = vpop.f32.mrb[0].mxu0
        %v2893 = vadd.f32 0.0, %v2892
        %v2894 = vpop.f32.mrb[0].mxu0
        %2895 = vmatprep.mubr.bf16.mxu0 0
        %2896 = vmatmul.mubr.bf16.gmra.mrb[0].mxu0 %v2748
        %v2897 = vpop.f32.mrb[0].mxu0
        %v2898 = vadd.f32 0.0, %v2897
        %v2899 = vpop.f32.mrb[0].mxu0
        %v2900 = vpop.f32.mrb[0].mxu0
        %v2901 = vadd.f32 0.0, %v2900
        %v2902 = vpop.f32.mrb[0].mxu0
        %2903 = vmatprep.mubr.bf16.mxu0 0
        %2904 = vmatmul.mubr.bf16.gmra.mrb[0].mxu0 %v2749
        %v2905 = vpop.f32.mrb[0].mxu0
        %v2906 = vadd.f32 0.0, %v2905
        %v2907 = vpop.f32.mrb[0].mxu0
        %v2908 = vpop.f32.mrb[0].mxu0
        %v2909 = vadd.f32 0.0, %v2908
        %v2910 = vpop.f32.mrb[0].mxu0
        %2911 = vdwg.mxu0
        %v2912 = vadd.f32 %v2551, %v2850
        %v2913 = vadd.f32 %v2554, %v2853
        %v2914 = vadd.f32 %v2559, %v2858
        %v2915 = vadd.f32 %v2562, %v2861
        %v2916 = vadd.f32 %v2567, %v2866
        %v2917 = vadd.f32 %v2570, %v2869
        %v2918 = vadd.f32 %v2575, %v2874
        %v2919 = vadd.f32 %v2578, %v2877
        %v2920 = vadd.f32 %v2583, %v2882
        %v2921 = vadd.f32 %v2586, %v2885
        %v2922 = vadd.f32 %v2591, %v2890
        %v2923 = vadd.f32 %v2594, %v2893
        %v2924 = vadd.f32 %v2599, %v2898
        %v2925 = vadd.f32 %v2602, %v2901
        %v2926 = vadd.f32 %v2607, %v2906
        %v2927 = vadd.f32 %v2610, %v2909
        %v2928 = vld [vmem:[%s8] sm:$0x1]
        %v2930 = vlaneseq
        %v2931 = vshrl.u32 %v2930, 7
        %v2932 = vsub.s32 0, %v2931
        %v2933 = vrot.slane %v2928, %v2932
        %v2935 = vadd.f32 %v2912, %v2933
        %v2936 = vadd.f32 %v2913, %v2933
        %v2937 = vadd.f32 %v2914, %v2933
        %v2938 = vadd.f32 %v2915, %v2933
        %v2939 = vadd.f32 %v2916, %v2933
        %v2940 = vadd.f32 %v2917, %v2933
        %v2941 = vadd.f32 %v2918, %v2933
        %v2942 = vadd.f32 %v2919, %v2933
        %v2943 = vadd.f32 %v2920, %v2933
        %v2944 = vadd.f32 %v2921, %v2933
        %v2945 = vadd.f32 %v2922, %v2933
        %v2946 = vadd.f32 %v2923, %v2933
        %v2947 = vadd.f32 %v2924, %v2933
        %v2948 = vadd.f32 %v2925, %v2933
        %v2949 = vadd.f32 %v2926, %v2933
        %v2950 = vadd.f32 %v2927, %v2933
        %v2951 = vmax.f32 %v2935, 0.0
        %v2952 = vmax.f32 %v2936, 0.0
        %v2953 = vmax.f32 %v2937, 0.0
        %v2954 = vmax.f32 %v2938, 0.0
        %v2955 = vmax.f32 %v2939, 0.0
        %v2956 = vmax.f32 %v2940, 0.0
        %v2957 = vmax.f32 %v2941, 0.0
        %v2958 = vmax.f32 %v2942, 0.0
        %v2959 = vmax.f32 %v2943, 0.0
        %v2960 = vmax.f32 %v2944, 0.0
        %v2961 = vmax.f32 %v2945, 0.0
        %v2962 = vmax.f32 %v2946, 0.0
        %v2963 = vmax.f32 %v2947, 0.0
        %v2964 = vmax.f32 %v2948, 0.0
        %v2965 = vmax.f32 %v2949, 0.0
        %v2966 = vmax.f32 %v2950, 0.0
        %v2967 = vld [vmem:[%s515] sm:$0x1]
        %v2968 = vpack.c.bf16 %v2967, %v2967
        %v2969 = vpack.c.bf16 %v2952, %v2951
        %v2970 = vpack.c.bf16 %v2954, %v2953
        %v2971 = vpack.c.bf16 %v2956, %v2955
        %v2972 = vpack.c.bf16 %v2958, %v2957
        %v2973 = vpack.c.bf16 %v2960, %v2959
        %v2974 = vpack.c.bf16 %v2962, %v2961
        %v2975 = vpack.c.bf16 %v2964, %v2963
        %v2976 = vpack.c.bf16 %v2966, %v2965
        %2977 = vmatprep.subr.bf16.mxu0 0
        %2978 = vmatpush1.bf16.msra.mxu0 %v2969
        %2979 = vmatprep.subr.bf16.mxu0 0
        %2980 = vmatpush1.bf16.msra.mxu0 %v2970
        %2981 = vmatprep.subr.bf16.mxu0 0
        %2982 = vmatpush1.bf16.msra.mxu0 %v2971
        %2983 = vmatprep.subr.bf16.mxu0 0
        %2984 = vmatpush1.bf16.msra.mxu0 %v2972
        %2985 = vmatprep.subr.bf16.mxu0 0
        %2986 = vmatpush1.bf16.msra.mxu0 %v2973
        %2987 = vmatprep.subr.bf16.mxu0 0
        %2988 = vmatpush1.bf16.msra.mxu0 %v2974
        %2989 = vmatprep.subr.bf16.mxu0 0
        %2990 = vmatpush1.bf16.msra.mxu0 %v2975
        %2991 = vmatprep.subr.bf16.mxu0 0
        %2992 = vmatpush1.bf16.msra.mxu0 %v2976
        %2993 = vmatprep.subr.bf16.mxu0 0
        %2994 = vmatpush1.bf16.msra.mxu0 0
        %2995 = vmatprep.subr.bf16.mxu0 0
        %2996 = vmatpush1.bf16.msra.mxu0 0
        %2997 = vmatprep.subr.bf16.mxu0 0
        %2998 = vmatpush1.bf16.msra.mxu0 0
        %2999 = vmatprep.subr.bf16.mxu0 0
        %3000 = vmatpush1.bf16.msra.mxu0 0
        %3001 = vmatprep.subr.bf16.mxu0 0
        %3002 = vmatpush1.bf16.msra.mxu0 0
        %3003 = vmatprep.subr.bf16.mxu0 0
        %3004 = vmatpush1.bf16.msra.mxu0 0
        %3005 = vmatprep.subr.bf16.mxu0 0
        %3006 = vmatpush1.bf16.msra.mxu0 0
        %3007 = vmatprep.subr.bf16.mxu0 0
        %3008 = vmatpush1.bf16.msra.mxu0 0
        %3009 = vmatprep.mubr.bf16.mxu0 0
        %3010 = vmatmul.mubr.bf16.gmra.mrb[0].mxu0 %v2968
        %v3011 = vpop.f32.mrb[0].mxu0
        %v3012 = vadd.f32 0.0, %v3011
        %v3013 = vpop.f32.mrb[0].mxu0
        %v3014 = vpop.f32.mrb[0].mxu0
        %v3015 = vpop.f32.mrb[0].mxu0
        %3016 = vdwg.mxu0
        %v3017 = vpack.c.bf16 %v3012, %v3012
        %v3018 = vld [vmem:[#allocation11] sm:$0xf]
        %v3019 = vld [vmem:[#allocation11 + $0x4] sm:$0xf]
        %v3020 = vld [vmem:[#allocation11 + $0x8] sm:$0xf]
        %v3021 = vld [vmem:[#allocation11 + $0xc] sm:$0xf]
        %v3022 = vld [vmem:[#allocation11 + $0x10] sm:$0xf]
        %v3023 = vld [vmem:[#allocation11 + $0x14] sm:$0xf]
        %v3024 = vld [vmem:[#allocation11 + $0x18] sm:$0xf]
        %v3025 = vld [vmem:[#allocation11 + $0x1c] sm:$0xf]
        %v3026 = vld [vmem:[#allocation11 + $0x20] sm:$0xf]
        %v3027 = vld [vmem:[#allocation11 + $0x24] sm:$0xf]
        %v3028 = vld [vmem:[#allocation11 + $0x28] sm:$0xf]
        %v3029 = vld [vmem:[#allocation11 + $0x2c] sm:$0xf]
        %v3030 = vld [vmem:[#allocation11 + $0x30] sm:$0xf]
        %v3031 = vld [vmem:[#allocation11 + $0x34] sm:$0xf]
        %v3032 = vld [vmem:[#allocation11 + $0x38] sm:$0xf]
        %v3033 = vld [vmem:[#allocation11 + $0x3c] sm:$0xf]
        %v3034 = vld [vmem:[%s10] sm:$0x1]
        %v3051 = vunpack.c.l.b16 %v3018
        %v3052 = vunpack.c.l.b16 %v3019
        %v3053 = vunpack.c.l.b16 %v3020
        %v3054 = vunpack.c.l.b16 %v3021
        %v3055 = vunpack.c.l.b16 %v3022
        %v3056 = vunpack.c.l.b16 %v3023
        %v3057 = vunpack.c.l.b16 %v3024
        %v3058 = vunpack.c.l.b16 %v3025
        %v3059 = vunpack.c.l.b16 %v3026
        %v3060 = vunpack.c.l.b16 %v3027
        %v3061 = vunpack.c.l.b16 %v3028
        %v3062 = vunpack.c.l.b16 %v3029
        %v3063 = vunpack.c.l.b16 %v3030
        %v3064 = vunpack.c.l.b16 %v3031
        %v3065 = vunpack.c.l.b16 %v3032
        %v3066 = vunpack.c.l.b16 %v3033
        %v3067 = vpack.c.b16 %v3052, %v3051
        %v3068 = vpack.c.b16 %v3054, %v3053
        %v3069 = vpack.c.b16 %v3056, %v3055
        %v3070 = vpack.c.b16 %v3058, %v3057
        %v3071 = vpack.c.b16 %v3060, %v3059
        %v3072 = vpack.c.b16 %v3062, %v3061
        %v3073 = vpack.c.b16 %v3064, %v3063
        %v3074 = vpack.c.b16 %v3066, %v3065
        %3083 = vmatprep.subr.bf16.mxu0 0
        %3084 = vmatpush1.bf16.msra.mxu0 %v3067
        %3085 = vmatprep.subr.bf16.mxu0 0
        %3086 = vmatpush1.bf16.msra.mxu0 %v3068
        %3087 = vmatprep.subr.bf16.mxu0 0
        %3088 = vmatpush1.bf16.msra.mxu0 %v3069
        %3089 = vmatprep.subr.bf16.mxu0 0
        %3090 = vmatpush1.bf16.msra.mxu0 %v3070
        %3091 = vmatprep.subr.bf16.mxu0 0
        %3092 = vmatpush1.bf16.msra.mxu0 %v3071
        %3093 = vmatprep.subr.bf16.mxu0 0
        %3094 = vmatpush1.bf16.msra.mxu0 %v3072
        %3095 = vmatprep.subr.bf16.mxu0 0
        %3096 = vmatpush1.bf16.msra.mxu0 %v3073
        %3097 = vmatprep.subr.bf16.mxu0 0
        %3098 = vmatpush1.bf16.msra.mxu0 %v3074
        %3099 = vmatprep.subr.bf16.mxu0 0
        %3100 = vmatpush1.bf16.msra.mxu0 0
        %3101 = vmatprep.subr.bf16.mxu0 0
        %3102 = vmatpush1.bf16.msra.mxu0 0
        %3103 = vmatprep.subr.bf16.mxu0 0
        %3104 = vmatpush1.bf16.msra.mxu0 0
        %3105 = vmatprep.subr.bf16.mxu0 0
        %3106 = vmatpush1.bf16.msra.mxu0 0
        %3107 = vmatprep.subr.bf16.mxu0 0
        %3108 = vmatpush1.bf16.msra.mxu0 0
        %3109 = vmatprep.subr.bf16.mxu0 0
        %3110 = vmatpush1.bf16.msra.mxu0 0
        %3111 = vmatprep.subr.bf16.mxu0 0
        %3112 = vmatpush1.bf16.msra.mxu0 0
        %3113 = vmatprep.subr.bf16.mxu0 0
        %3114 = vmatpush1.bf16.msra.mxu0 0
        %3115 = vmatprep.mubr.bf16.mxu0 0
        %3116 = vmatmul.mubr.bf16.gmra.mrb[0].mxu0 %v3017
        %v3117 = vpop.f32.mrb[0].mxu0
        %v3118 = vadd.f32 %v3034, %v3117
        %v3119 = vpop.f32.mrb[0].mxu0
        %v3120 = vpop.f32.mrb[0].mxu0
        %v3121 = vpop.f32.mrb[0].mxu0
        %3122 = vdwg.mxu0
        %3123 = vst [vmem:[%s512] sm:$0x1] %v3118
        %s3124 = sand.u32 %s287, 1
        %s3125 = scalar_lea.sflag [#allocation4], %s3124
        %s3126 = sand.u32 %s287, 1
        %s3127 = scalar_lea.vmem [#allocation13], %s3126
        // Predicated region
        $region89: #{tpu_custom_call.1} parent=63 // pred_check
          %p3128 = pneg %p297
        $region90: #{tpu_custom_call.1} parent=63 // pred_check_branch
          %3130 = sbr.rel (%p3128) target = $region92
        $region91: #{tpu_custom_call.1} parent=63 // pred_region
          %s3132 = ssub.s32 16, 16
          %3133 = vsyncadd %s3125, %s3132
          %s3134 = smul.addr %s33, 16
          %s3135 = scalar_lea.hbm %s11, %s3134
          %s3137 = sshll.u32 %s3127, 4
          %s3138 = int_to_ptr.vmem [resolvable:$true] %s3137
          %3140 = dma.vmem_to_hbm [thread:$0]  %s3138, 16, %s3135, %s3125
        $region92: #{tpu_custom_call.1} parent=63 // pred_fallthru
          _
      $region64: #{tpu_custom_call.1} parent=5 // pred_fallthru
        _
      %p3141 = scmp.le.s32.totalorder 2, %s28
      // Predicated region
      $region93: #{tpu_custom_call.1} parent=5 // pred_check
        %p3142 = pneg %p3141
      $region94: #{tpu_custom_call.1} parent=5 // pred_check_branch
        %3144 = sbr.rel (%p3142) target = $region96
      $region95: #{tpu_custom_call.1} parent=5 // pred_region
        %s3145 = ssub.s32 %s28, 2
        // Predicated region
        $region97: #{tpu_custom_call.1} parent=95 // pred_check
          %p3146 = pneg %p303
        $region98: #{tpu_custom_call.1} parent=95 // pred_check_branch
          %3148 = sbr.rel (%p3146) target = $region100
        $region99: #{tpu_custom_call.1} parent=95 // pred_region
          %s3149 = sand.u32 %s288, 1
          %s3150 = scalar_lea.sflag [#allocation4], %s3149
          %s3151 = sand.u32 %s288, 1
          %s3152 = scalar_lea.vmem [#allocation13], %s3151
          %3153 = dma.done %s3150, 16
        $region100: #{tpu_custom_call.1} parent=95 // pred_fallthru
          _
      $region96: #{tpu_custom_call.1} parent=5 // pred_fallthru
        _
    $region6: #{tpu_custom_call.1} parent=1 // loop_footer
      %s32 = sadd.s32 1, %s28
    $region7: #{tpu_custom_call.1} parent=1 // loop_footer_branch
      %27 = sbr.rel target = $region3
    $region8: #{tpu_custom_call.1} parent=1 // loop_exit
      _
    %3154 = vsyncpa [#allocation3], 1
    %s3155 = scalar_lea.sflag [#allocation3], 1
    %3156 = vsyncpa %s3155, 1
    %3157 = vsyncpa [#allocation6], 1
    %s3158 = scalar_lea.sflag [#allocation6], 1
    %3159 = vsyncpa %s3158, 1
    %3160 = vsyncpa [#allocation9], 1
    %3161 = vsyncpa [#allocation12], 1
    %3162 = vsyncpa [#allocation4], 1
    %s3163 = scalar_lea.sflag [#allocation4], 1
    %3164 = vsyncpa %s3163, 1

</llo_original>
